<compile_context>
chip_gen: v5e
topology: v5e:2x2
jax: 0.10.0
libtpu: 0.0.40
codegen_flags: <defaults>
</compile_context>

<pallas_src>
import functools

import jax
import jax.numpy as jnp
from jax import lax
from jax.experimental import pallas as pl
from jax.experimental.pallas import tpu as pltpu


def _basic_block_kernel(xa_ref, xb_ref, w1_ref, b1_ref, w2_ref, b2_ref, o_ref,
                        *, valid_h):
    # xa_ref : (1, TH, W+2, Cp)   bf16  body rows of padded input window
    # xb_ref : (1, 4,  W+2, Cp)   bf16  bottom 4 halo rows of the window
    # w1_ref : (9*Cp, Cp)         bf16  conv1 (BN1 scale folded in)
    # b1_ref : (1, Cp)            f32   folded BN1 bias
    # w2_ref : (9*Cp, Cp)         bf16  conv2 (BN2 scale folded in)
    # b2_ref : (1, Cp)            f32   folded BN2 bias
    # o_ref  : (1, TH, W, Cp)
    _, TH, W, Cp = o_ref.shape
    r = pl.program_id(1)

    # Full haloed window (TH+4, W+2, Cp): padded rows [r*TH, r*TH + TH + 4).
    xwin = jnp.concatenate([xa_ref[0], xb_ref[0]], axis=0)

    # ---- conv1: single im2col matmul, K = 9*Cp ----------------------------
    # mid row i corresponds to global output row r*TH - 1 + i  (1-row halo).
    M1 = TH + 2
    patch1 = jnp.concatenate(
        [xwin[ky:ky + M1, kx:kx + W, :] for ky in range(3) for kx in range(3)],
        axis=-1).reshape(M1 * W, 9 * Cp)
    acc1 = jnp.dot(patch1, w1_ref[...], preferred_element_type=jnp.float32)

    # ---- bn1 bias + relu (f32); zero the rows that act as conv2's padding --
    mid = jnp.maximum(acc1 + b1_ref[...], 0.0).reshape(M1, W, Cp)
    grow = r * TH - 1 + lax.broadcasted_iota(jnp.int32, (M1, 1, 1), 0)
    mid = jnp.where((grow >= 0) & (grow < valid_h), mid, 0.0)
    mid = mid.astype(jnp.bfloat16)

    # ---- conv2: same im2col over mid; explicit zero columns = width padding
    zcol = jnp.zeros((M1, 1, Cp), mid.dtype)
    midp = jnp.concatenate([zcol, mid, zcol], axis=1)          # (M1, W+2, Cp)
    patch2 = jnp.concatenate(
        [midp[ky:ky + TH, kx:kx + W, :] for ky in range(3) for kx in range(3)],
        axis=-1).reshape(TH * W, 9 * Cp)
    acc2 = jnp.dot(patch2, w2_ref[...], preferred_element_type=jnp.float32)

    # ---- bn2 bias + residual + relu (f32), lane-dense store ----------------
    res = xwin[2:TH + 2, 1:W + 1, :].astype(jnp.float32).reshape(TH * W, Cp)
    out = jnp.maximum(acc2 + b2_ref[...] + res, 0.0)
    o_ref[0] = out.reshape(TH, W, Cp).astype(o_ref.dtype)


def _round_up(x, m):
    return ((x + m - 1) // m) * m


@functools.lru_cache(maxsize=None)
def _vmem_limit_bytes():
    """Generation-aware scoped-VMEM limit (v7x has 64 MiB, v5e/v6e 128 MiB)."""
    cap = None
    try:
        cap = getattr(pltpu.get_tpu_info(), "vmem_capacity_bytes", None)
    except Exception:
        cap = None
    if not cap:
        return 48 * 1024 * 1024          # safe on every generation
    return int(min(cap * 3 // 4, 100 * 1024 * 1024))


def _vmem_estimate(TH, W, Cp, out_bytes):
    """Rough per-step VMEM footprint (pipelined buffers + value temporaries)."""
    bf = 2
    est = 0
    est += 2 * TH * (W + 2) * Cp * bf            # body input block (x2 buf)
    est += 2 * 4 * (W + 2) * Cp * bf             # halo input block
    est += 2 * TH * W * Cp * out_bytes           # output block
    est += 2 * 2 * 9 * Cp * Cp * bf              # two weight blocks
    est += (TH + 4) * (W + 2) * Cp * bf          # xwin value
    est += (TH + 2) * W * Cp * (9 * bf + 4 + bf)  # patch1 + acc1 + mid
    est += (TH + 2) * (W + 2) * Cp * bf          # midp
    est += TH * W * Cp * (9 * bf + 4 + 4)        # patch2 + acc2 + out f32
    return est


@functools.partial(jax.jit, static_argnames=("eps", "tile_h"))
def basic_block_forward(x_nhwc, w1, g1, b1, m1, v1, w2, g2, b2, m2, v2,
                        eps=1e-5, tile_h=32):
    """x_nhwc: (N, H, W, C) f32.  Conv weights in torch layout (Cout, Cin, 3, 3)."""
    N, H, W, C = x_nhwc.shape
    Cout, Cin, kh, kw = w1.shape
    assert (kh, kw) == (3, 3)
    assert Cin == C and Cout == C, "identity residual requires inplanes == planes"

    Cp = _round_up(C, 128)               # lane-dense channel padding

    # Row tile: multiple of 4 (for the 4-row halo BlockSpec); pad H up to a
    # multiple of TH instead of shrinking TH to a divisor; shrink TH only if
    # the rough VMEM estimate does not fit the chip's budget.
    vmem_limit = _vmem_limit_bytes()
    budget = int(vmem_limit * 0.45)
    TH = min(_round_up(max(tile_h, 4), 4), _round_up(H, 4))
    while TH > 4 and _vmem_estimate(TH, W, Cp, 4) > budget:
        TH -= 4
    R = -(-H // TH)
    Hp = R * TH

    # Fold inference BatchNorm: scale goes into the weights (Cout axis), bias
    # stays as a per-channel add.  Padded Cout/Cin lanes remain exactly zero.
    s1 = g1 / jnp.sqrt(v1 + eps)
    bb1 = b1 - m1 * s1
    s2 = g2 / jnp.sqrt(v2 + eps)
    bb2 = b2 - m2 * s2

    def pack_w(w, s):
        wf = w * s[:, None, None, None]                        # fold BN scale
        wt = jnp.transpose(wf, (2, 3, 1, 0))                   # (3, 3, Cin, Cout)
        wt = jnp.pad(wt, ((0, 0), (0, 0), (0, Cp - C), (0, Cp - C)))
        return wt.reshape(9 * Cp, Cp).astype(jnp.bfloat16)     # K = (ky*3+kx)*Cp+ci

    def pad_bias(b):
        return jnp.pad(b, (0, Cp - C)).reshape(1, Cp).astype(jnp.float32)

    w1k, w2k = pack_w(w1, s1), pack_w(w2, s2)
    b1p, b2p = pad_bias(bb1), pad_bias(bb2)

    # Single prep pass: 2-row top / (2 + Hp-H)-row bottom zero pad, 1-col halo,
    # channel pad to Cp lanes, bf16 cast.  No overlapping-tile duplication.
    xp = jnp.pad(x_nhwc,
                 ((0, 0), (2, 2 + Hp - H), (1, 1), (0, Cp - C))
                 ).astype(jnp.bfloat16)                        # (N, Hp+4, W+2, Cp)

    kernel = functools.partial(_basic_block_kernel, valid_h=H)
    halo_blk = TH // 4      # 4-row halo block index stride

    out = pl.pallas_call(
        kernel,
        out_shape=jax.ShapeDtypeStruct((N, Hp, W, Cp), x_nhwc.dtype),
        grid_spec=pltpu.PrefetchScalarGridSpec(
            num_scalar_prefetch=0,
            grid=(N, R),
            in_specs=[
                # body rows of the haloed window: padded rows [r*TH, r*TH+TH)
                pl.BlockSpec((1, TH, W + 2, Cp), lambda n, r: (n, r, 0, 0)),
                # bottom 4 halo rows: padded rows [r*TH+TH, r*TH+TH+4)
                pl.BlockSpec((1, 4, W + 2, Cp),
                             lambda n, r: (n, (r + 1) * halo_blk, 0, 0)),
                pl.BlockSpec((9 * Cp, Cp), lambda n, r: (0, 0)),
                pl.BlockSpec((1, Cp), lambda n, r: (0, 0)),
                pl.BlockSpec((9 * Cp, Cp), lambda n, r: (0, 0)),
                pl.BlockSpec((1, Cp), lambda n, r: (0, 0)),
            ],
            out_specs=pl.BlockSpec((1, TH, W, Cp), lambda n, r: (n, r, 0, 0)),
        ),
        compiler_params=pltpu.CompilerParams(
            dimension_semantics=("parallel", "parallel"),
            vmem_limit_bytes=vmem_limit),
    )(xp, xp, w1k, b1p, w2k, b2p)

    # (N, Hp, W, Cp) -> (N, H, W, C).  When chaining blocks, keep the padded
    # layout and fuse this un-pad into the consumer instead.
    return out[:, :H, :, :C]


def reference_basic_block(x_nhwc, w1, g1, b1, m1, v1, w2, g2, b2, m2, v2,
                          eps=1e-5):
    """Pure-JAX f32 reference (XLA conv), NHWC."""
    def conv(x, w):
        return jax.lax.conv_general_dilated(
            x, jnp.transpose(w, (2, 3, 1, 0)),
            window_strides=(1, 1), padding=((1, 1), (1, 1)),
            dimension_numbers=("NHWC", "HWIO", "NHWC"))

    def bn(x, g, b, m, v):
        return (x - m) / jnp.sqrt(v + eps) * g + b

    out = jax.nn.relu(bn(conv(x_nhwc, w1), g1, b1, m1, v1))
    out = bn(conv(out, w2), g2, b2, m2, v2)
    return jax.nn.relu(out + x_nhwc)


if __name__ == "__main__":
    # Small shapes: batch=2, inplanes=planes=4, spatial=16x16 (NCHW in torch).
    N, C, H, W = 2, 4, 16, 16
    key = jax.random.PRNGKey(0)
    ks = jax.random.split(key, 12)

    x_nchw = jax.random.normal(ks[0], (N, C, H, W), jnp.float32)
    x_nhwc = jnp.transpose(x_nchw, (0, 2, 3, 1))

    w1 = jax.random.normal(ks[1], (C, C, 3, 3), jnp.float32) * 0.1
    g1 = jax.random.uniform(ks[2], (C,), jnp.float32, 0.5, 1.5)
    b1 = jax.random.normal(ks[3], (C,), jnp.float32) * 0.1
    m1 = jax.random.normal(ks[4], (C,), jnp.float32) * 0.1
    v1 = jax.random.uniform(ks[5], (C,), jnp.float32, 0.5, 1.5)

    w2 = jax.random.normal(ks[6], (C, C, 3, 3), jnp.float32) * 0.1
    g2 = jax.random.uniform(ks[7], (C,), jnp.float32, 0.5, 1.5)
    b2 = jax.random.normal(ks[8], (C,), jnp.float32) * 0.1
    m2 = jax.random.normal(ks[9], (C,), jnp.float32) * 0.1
    v2 = jax.random.uniform(ks[10], (C,), jnp.float32, 0.5, 1.5)

    out = basic_block_forward(x_nhwc, w1, g1, b1, m1, v1, w2, g2, b2, m2, v2)
    out = jax.block_until_ready(out)

    ref = reference_basic_block(x_nhwc, w1, g1, b1, m1, v1, w2, g2, b2, m2, v2)
    ref = jax.block_until_ready(ref)

    assert out.shape == (N, H, W, C), out.shape
    # bf16 MXU inputs / bf16 residual -> tolerance loosened vs pure-f32.
    max_err = float(jnp.max(jnp.abs(out - ref)))
    assert jnp.allclose(out, ref, atol=5e-2, rtol=5e-2), max_err

    print("KERNEL_OK")
</pallas_src>

<mosaic_0001>
module attributes {stable_mosaic.version = 11 : i64} {
  func.func @_basic_block_kernel(%arg0: i32, %arg1: i32, %arg2: memref<1x16x18x128xbf16, #tpu.memory_space<vmem>>, %arg3: memref<1x4x18x128xbf16, #tpu.memory_space<vmem>>, %arg4: memref<1152x128xbf16, #tpu.memory_space<vmem>>, %arg5: memref<1x128xf32, #tpu.memory_space<vmem>>, %arg6: memref<1152x128xbf16, #tpu.memory_space<vmem>>, %arg7: memref<1x128xf32, #tpu.memory_space<vmem>>, %arg8: memref<1x16x16x128xf32, #tpu.memory_space<vmem>>) attributes {dimension_semantics = [#tpu.dimension_semantics<parallel>, #tpu.dimension_semantics<parallel>], iteration_bounds = array<i64: 2, 1>, scalar_prefetch = 0 : i64, scratch_operands = 0 : i64, tpu.core_type = #tpu.core_type<tc>, window_params = [{transform_indices = @transform_0, window_bounds = array<i64: 1, 16, 18, 128>}, {transform_indices = @transform_1, window_bounds = array<i64: 1, 4, 18, 128>}, {pipeline_mode = #tpu.pipeline_mode<synchronous>, transform_indices = @transform_2, window_bounds = array<i64: 1152, 128>}, {pipeline_mode = #tpu.pipeline_mode<synchronous>, transform_indices = @transform_3, window_bounds = array<i64: 1, 128>}, {pipeline_mode = #tpu.pipeline_mode<synchronous>, transform_indices = @transform_4, window_bounds = array<i64: 1152, 128>}, {pipeline_mode = #tpu.pipeline_mode<synchronous>, transform_indices = @transform_5, window_bounds = array<i64: 1, 128>}, {transform_indices = @transform_6, window_bounds = array<i64: 1, 16, 16, 128>}]} {
    %c0 = arith.constant 0 : index
    %c0_0 = arith.constant 0 : index
    %c0_1 = arith.constant 0 : index
    %c0_2 = arith.constant 0 : index
    %0 = vector.load %arg2[%c0, %c0_0, %c0_1, %c0_2] : memref<1x16x18x128xbf16, #tpu.memory_space<vmem>>, vector<1x16x18x128xbf16>
    %1 = vector.shape_cast %0 : vector<1x16x18x128xbf16> to vector<16x18x128xbf16>
    %c0_3 = arith.constant 0 : index
    %c0_4 = arith.constant 0 : index
    %c0_5 = arith.constant 0 : index
    %c0_6 = arith.constant 0 : index
    %2 = vector.load %arg3[%c0_3, %c0_4, %c0_5, %c0_6] : memref<1x4x18x128xbf16, #tpu.memory_space<vmem>>, vector<1x4x18x128xbf16>
    %3 = vector.shape_cast %2 : vector<1x4x18x128xbf16> to vector<4x18x128xbf16>
    %4 = tpu.concatenate %1, %3 in 0 : vector<16x18x128xbf16>, vector<4x18x128xbf16> -> vector<20x18x128xbf16>
    %5 = vector.extract_strided_slice %4 {offsets = [0, 0, 0], sizes = [18, 16, 128], strides = [1, 1, 1]} : vector<20x18x128xbf16> to vector<18x16x128xbf16>
    %6 = vector.extract_strided_slice %4 {offsets = [0, 1, 0], sizes = [18, 16, 128], strides = [1, 1, 1]} : vector<20x18x128xbf16> to vector<18x16x128xbf16>
    %7 = vector.extract_strided_slice %4 {offsets = [0, 2, 0], sizes = [18, 16, 128], strides = [1, 1, 1]} : vector<20x18x128xbf16> to vector<18x16x128xbf16>
    %8 = vector.extract_strided_slice %4 {offsets = [1, 0, 0], sizes = [18, 16, 128], strides = [1, 1, 1]} : vector<20x18x128xbf16> to vector<18x16x128xbf16>
    %9 = vector.extract_strided_slice %4 {offsets = [1, 1, 0], sizes = [18, 16, 128], strides = [1, 1, 1]} : vector<20x18x128xbf16> to vector<18x16x128xbf16>
    %10 = vector.extract_strided_slice %4 {offsets = [1, 2, 0], sizes = [18, 16, 128], strides = [1, 1, 1]} : vector<20x18x128xbf16> to vector<18x16x128xbf16>
    %11 = vector.extract_strided_slice %4 {offsets = [2, 0, 0], sizes = [18, 16, 128], strides = [1, 1, 1]} : vector<20x18x128xbf16> to vector<18x16x128xbf16>
    %12 = vector.extract_strided_slice %4 {offsets = [2, 1, 0], sizes = [18, 16, 128], strides = [1, 1, 1]} : vector<20x18x128xbf16> to vector<18x16x128xbf16>
    %13 = vector.extract_strided_slice %4 {offsets = [2, 2, 0], sizes = [18, 16, 128], strides = [1, 1, 1]} : vector<20x18x128xbf16> to vector<18x16x128xbf16>
    %14 = tpu.concatenate %5, %6, %7, %8, %9, %10, %11, %12, %13 in 2 : vector<18x16x128xbf16>, vector<18x16x128xbf16>, vector<18x16x128xbf16>, vector<18x16x128xbf16>, vector<18x16x128xbf16>, vector<18x16x128xbf16>, vector<18x16x128xbf16>, vector<18x16x128xbf16>, vector<18x16x128xbf16> -> vector<18x16x1152xbf16>
    %15 = vector.shape_cast %14 : vector<18x16x1152xbf16> to vector<288x1152xbf16>
    %c0_7 = arith.constant 0 : index
    %c0_8 = arith.constant 0 : index
    %16 = vector.load %arg4[%c0_7, %c0_8] : memref<1152x128xbf16, #tpu.memory_space<vmem>>, vector<1152x128xbf16>
    %cst = arith.constant dense<0.000000e+00> : vector<288x128xf32>
    %17 = tpu.matmul %15, %16, %cst {dimension_numbers = #tpu.dot_dimension_numbers<[1], [0], [0], [1], [0, 0, 1, 1], [], []>} : vector<288x1152xbf16>, vector<1152x128xbf16>, vector<288x128xf32> -> vector<288x128xf32>
    %c0_9 = arith.constant 0 : index
    %c0_10 = arith.constant 0 : index
    %18 = vector.load %arg5[%c0_9, %c0_10] : memref<1x128xf32, #tpu.memory_space<vmem>>, vector<1x128xf32>
    %19 = vector.broadcast %18 : vector<1x128xf32> to vector<288x128xf32>
    %20 = arith.addf %17, %19 : vector<288x128xf32>
    %cst_11 = arith.constant 0.000000e+00 : f32
    %21 = vector.broadcast %cst_11 : f32 to vector<288x128xf32>
    %22 = arith.maximumf %20, %21 : vector<288x128xf32>
    %23 = vector.shape_cast %22 : vector<288x128xf32> to vector<18x16x128xf32>
    %c16_i32 = arith.constant 16 : i32
    %24 = arith.muli %arg1, %c16_i32 : i32
    %c1_i32 = arith.constant 1 : i32
    %25 = arith.subi %24, %c1_i32 : i32
    %26 = tpu.iota {dimensions = array<i32: 0>} : vector<18x1x1xi32>
    %27 = vector.broadcast %25 : i32 to vector<18x1x1xi32>
    %28 = arith.addi %27, %26 : vector<18x1x1xi32>
    %c0_i32 = arith.constant 0 : i32
    %29 = vector.broadcast %c0_i32 : i32 to vector<18x1x1xi32>
    %30 = arith.cmpi sge, %28, %29 : vector<18x1x1xi32>
    %c16_i32_12 = arith.constant 16 : i32
    %31 = vector.broadcast %c16_i32_12 : i32 to vector<18x1x1xi32>
    %32 = arith.cmpi slt, %28, %31 : vector<18x1x1xi32>
    %33 = arith.andi %30, %32 : vector<18x1x1xi1>
    %cst_13 = arith.constant 0.000000e+00 : f32
    %34 = vector.shape_cast %33 : vector<18x1x1xi1> to vector<18x1x1xi1>
    %35 = vector.broadcast %34 : vector<18x1x1xi1> to vector<18x16x128xi1>
    %36 = vector.broadcast %cst_13 : f32 to vector<18x16x128xf32>
    %37 = arith.select %35, %23, %36 : vector<18x16x128xi1>, vector<18x16x128xf32>
    %38 = arith.truncf %37 : vector<18x16x128xf32> to vector<18x16x128xbf16>
    %cst_14 = arith.constant 0.000000e+00 : bf16
    %39 = vector.broadcast %cst_14 : bf16 to vector<18x1x128xbf16>
    %40 = tpu.concatenate %39, %38, %39 in 1 : vector<18x1x128xbf16>, vector<18x16x128xbf16>, vector<18x1x128xbf16> -> vector<18x18x128xbf16>
    %41 = vector.extract_strided_slice %40 {offsets = [0, 0, 0], sizes = [16, 16, 128], strides = [1, 1, 1]} : vector<18x18x128xbf16> to vector<16x16x128xbf16>
    %42 = vector.extract_strided_slice %40 {offsets = [0, 1, 0], sizes = [16, 16, 128], strides = [1, 1, 1]} : vector<18x18x128xbf16> to vector<16x16x128xbf16>
    %43 = vector.extract_strided_slice %40 {offsets = [0, 2, 0], sizes = [16, 16, 128], strides = [1, 1, 1]} : vector<18x18x128xbf16> to vector<16x16x128xbf16>
    %44 = vector.extract_strided_slice %40 {offsets = [1, 0, 0], sizes = [16, 16, 128], strides = [1, 1, 1]} : vector<18x18x128xbf16> to vector<16x16x128xbf16>
    %45 = vector.extract_strided_slice %40 {offsets = [1, 1, 0], sizes = [16, 16, 128], strides = [1, 1, 1]} : vector<18x18x128xbf16> to vector<16x16x128xbf16>
    %46 = vector.extract_strided_slice %40 {offsets = [1, 2, 0], sizes = [16, 16, 128], strides = [1, 1, 1]} : vector<18x18x128xbf16> to vector<16x16x128xbf16>
    %47 = vector.extract_strided_slice %40 {offsets = [2, 0, 0], sizes = [16, 16, 128], strides = [1, 1, 1]} : vector<18x18x128xbf16> to vector<16x16x128xbf16>
    %48 = vector.extract_strided_slice %40 {offsets = [2, 1, 0], sizes = [16, 16, 128], strides = [1, 1, 1]} : vector<18x18x128xbf16> to vector<16x16x128xbf16>
    %49 = vector.extract_strided_slice %40 {offsets = [2, 2, 0], sizes = [16, 16, 128], strides = [1, 1, 1]} : vector<18x18x128xbf16> to vector<16x16x128xbf16>
    %50 = tpu.concatenate %41, %42, %43, %44, %45, %46, %47, %48, %49 in 2 : vector<16x16x128xbf16>, vector<16x16x128xbf16>, vector<16x16x128xbf16>, vector<16x16x128xbf16>, vector<16x16x128xbf16>, vector<16x16x128xbf16>, vector<16x16x128xbf16>, vector<16x16x128xbf16>, vector<16x16x128xbf16> -> vector<16x16x1152xbf16>
    %51 = vector.shape_cast %50 : vector<16x16x1152xbf16> to vector<256x1152xbf16>
    %c0_15 = arith.constant 0 : index
    %c0_16 = arith.constant 0 : index
    %52 = vector.load %arg6[%c0_15, %c0_16] : memref<1152x128xbf16, #tpu.memory_space<vmem>>, vector<1152x128xbf16>
    %cst_17 = arith.constant dense<0.000000e+00> : vector<256x128xf32>
    %53 = tpu.matmul %51, %52, %cst_17 {dimension_numbers = #tpu.dot_dimension_numbers<[1], [0], [0], [1], [0, 0, 1, 1], [], []>} : vector<256x1152xbf16>, vector<1152x128xbf16>, vector<256x128xf32> -> vector<256x128xf32>
    %54 = vector.extract_strided_slice %4 {offsets = [2, 1, 0], sizes = [16, 16, 128], strides = [1, 1, 1]} : vector<20x18x128xbf16> to vector<16x16x128xbf16>
    %55 = arith.extf %54 : vector<16x16x128xbf16> to vector<16x16x128xf32>
    %56 = vector.shape_cast %55 : vector<16x16x128xf32> to vector<256x128xf32>
    %c0_18 = arith.constant 0 : index
    %c0_19 = arith.constant 0 : index
    %57 = vector.load %arg7[%c0_18, %c0_19] : memref<1x128xf32, #tpu.memory_space<vmem>>, vector<1x128xf32>
    %58 = vector.broadcast %57 : vector<1x128xf32> to vector<256x128xf32>
    %59 = arith.addf %53, %58 : vector<256x128xf32>
    %60 = arith.addf %59, %56 : vector<256x128xf32>
    %cst_20 = arith.constant 0.000000e+00 : f32
    %61 = vector.broadcast %cst_20 : f32 to vector<256x128xf32>
    %62 = arith.maximumf %60, %61 : vector<256x128xf32>
    %63 = vector.shape_cast %62 : vector<256x128xf32> to vector<16x16x128xf32>
    %c0_21 = arith.constant 0 : index
    %c0_22 = arith.constant 0 : index
    %c0_23 = arith.constant 0 : index
    %c0_24 = arith.constant 0 : index
    %64 = vector.load %arg8[%c0_21, %c0_22, %c0_23, %c0_24] : memref<1x16x16x128xf32, #tpu.memory_space<vmem>>, vector<1x16x16x128xf32>
    %65 = vector.shape_cast %64 : vector<1x16x16x128xf32> to vector<16x16x128xf32>
    %66 = vector.shape_cast %63 : vector<16x16x128xf32> to vector<1x16x16x128xf32>
    tpu.vector_store %arg8[%c0_21, %c0_22, %c0_23, %c0_24], %66 {strides = array<i32>} : memref<1x16x16x128xf32, #tpu.memory_space<vmem>>, vector<1x16x16x128xf32>,
    return
  }
  func.func @transform_0(%arg0: i32, %arg1: i32) -> (i32, i32, i32, i32) {
    %c0_i32 = arith.constant 0 : i32
    %c0_i32_0 = arith.constant 0 : i32
    %c0_i32_1 = arith.constant 0 : i32
    return %arg0, %arg1, %c0_i32, %c0_i32_0 : i32, i32, i32, i32
  }
  func.func @transform_1(%arg0: i32, %arg1: i32) -> (i32, i32, i32, i32) {
    %c1_i32 = arith.constant 1 : i32
    %0 = arith.addi %arg1, %c1_i32 : i32
    %c4_i32 = arith.constant 4 : i32
    %1 = arith.muli %0, %c4_i32 : i32
    %c0_i32 = arith.constant 0 : i32
    %c0_i32_0 = arith.constant 0 : i32
    %c0_i32_1 = arith.constant 0 : i32
    return %arg0, %1, %c0_i32, %c0_i32_0 : i32, i32, i32, i32
  }
  func.func @transform_2(%arg0: i32, %arg1: i32) -> (i32, i32) {
    %c0_i32 = arith.constant 0 : i32
    %c0_i32_0 = arith.constant 0 : i32
    %c0_i32_1 = arith.constant 0 : i32
    return %c0_i32, %c0_i32_0 : i32, i32
  }
  func.func @transform_3(%arg0: i32, %arg1: i32) -> (i32, i32) {
    %c0_i32 = arith.constant 0 : i32
    %c0_i32_0 = arith.constant 0 : i32
    %c0_i32_1 = arith.constant 0 : i32
    return %c0_i32, %c0_i32_0 : i32, i32
  }
  func.func @transform_4(%arg0: i32, %arg1: i32) -> (i32, i32) {
    %c0_i32 = arith.constant 0 : i32
    %c0_i32_0 = arith.constant 0 : i32
    %c0_i32_1 = arith.constant 0 : i32
    return %c0_i32, %c0_i32_0 : i32, i32
  }
  func.func @transform_5(%arg0: i32, %arg1: i32) -> (i32, i32) {
    %c0_i32 = arith.constant 0 : i32
    %c0_i32_0 = arith.constant 0 : i32
    %c0_i32_1 = arith.constant 0 : i32
    return %c0_i32, %c0_i32_0 : i32, i32
  }
  func.func @transform_6(%arg0: i32, %arg1: i32) -> (i32, i32, i32, i32) {
    %c0_i32 = arith.constant 0 : i32
    %c0_i32_0 = arith.constant 0 : i32
    %c0_i32_1 = arith.constant 0 : i32
    return %arg0, %arg1, %c0_i32, %c0_i32_0 : i32, i32, i32, i32
  }
}

</mosaic_0001>

<llo_original>
// kernel: basic_block_forward.1
$region0: #{basic_block_forward.1}
  #allocation0 [shape = 'u32[]', space=smem, size = 0x4, offset = 0x4, fixed_abs, tag = 'smem constant byte address 0x4 - core index']
  #allocation1 [shape = 'u32[72,128]{1,0:T(1,128)}', space=vmem, size = 0x9000, scoped, tag = 'internal scratch']
  %s0 = inlined_call_operand.vmem [shape: bf16[2,20,18,128], index: 0, kind: input, shape index: {}, may-alias: {0,1}]
  %s1 = inlined_call_operand.vmem [shape: bf16[2,20,18,128], index: 1, kind: input, shape index: {}, may-alias: {0,1}]
  %s2 = inlined_call_operand.vmem [shape: bf16[1152,128], index: 2, kind: input, shape index: {}]
  %s3 = inlined_call_operand.vmem [shape: f32[1,128], index: 3, kind: input, shape index: {}]
  %s4 = inlined_call_operand.vmem [shape: bf16[1152,128], index: 4, kind: input, shape index: {}]
  %s5 = inlined_call_operand.vmem [shape: f32[1,128], index: 5, kind: input, shape index: {}]
  %s6 = inlined_call_operand.vmem [shape: f32[2,16,16,128], index: 6, kind: output, shape index: {}]
  %s7 = sld [smem:[#allocation0]]
  $region57: #{basic_block_forward.1} parent=0
    _
  %s9 = ssub.s32 1, %s7
  %s10 = scalar_select 0, %s9, %s7
  loop: start=0, step=1, limit=4
  $region2: #{basic_block_forward.1} parent=0 // loop_pre_header
    _
  $region3: #{basic_block_forward.1} parent=0 // loop_header
    %s12 = sphi 0, %s16
    %p13 = scmp.ge.s32.totalorder %s12, 4
    %s19 = sphi 0, %s31
    %s20 = sphi 0, %s27
    %s21 = sphi 0, %s19
    %s22 = sphi 0, %s20
    %s23 = sphi 0, %s21
    %s24 = sphi 0, %s22
    %s36 = sphi 0, %s38
    %s39 = sphi 0, %s36
    %s40 = sphi 0, %s39
    %s56 = sphi 0, %s40
    %s68 = sphi 0, %s70
    %s71 = sphi 0, %s68
    %s72 = sphi 0, %s71
    %s88 = sphi 0, %s72
    %s92 = sphi 0, %s92
    %s94 = sphi 0, %s92
    %s95 = sphi 0, %s94
    %s109 = sphi 0, %s95
    %s113 = sphi 0, %s113
    %s115 = sphi 0, %s113
    %s116 = sphi 0, %s115
    %s130 = sphi 0, %s116
    %s134 = sphi 0, %s134
    %s136 = sphi 0, %s134
    %s137 = sphi 0, %s136
    %s151 = sphi 0, %s137
    %s155 = sphi 0, %s155
    %s157 = sphi 0, %s155
    %s158 = sphi 0, %s157
    %s172 = sphi 0, %s158
    %s180 = sphi 0, %s182
    %s183 = sphi 0, %s180
    %s184 = sphi 0, %s183
    %s200 = sphi 0, %s184
  $region4: #{basic_block_forward.1} parent=0 // loop_header_branch
    %15 = sbr.rel (%p13) target = $region8
  $region5: #{basic_block_forward.1} parent=0 // loop_body
    %s17 = ssub.s32 %s12, 1
    %s18 = ssub.s32 %s12, 2
    %s25 = sadd.s32 1, %s20
    %p26 = scmp.ge.s32.totalorder %s25, 1
    %s27 = scalar_select %p26, 0, %s25
    %s28 = sadd.s32 1, %s19
    %s29 = scalar_select %p26, %s28, %s19
    %p30 = scmp.ge.s32.totalorder %s29, 2
    %s31 = scalar_select %p30, 0, %s29
    %s32 = ssub.s32 %s19, %s31
    %s33 = ssub.s32 %s20, %s27
    %s34 = sor.u32 %s32, %s33
    %p35 = scmp.eq.s32.totalorder %s34, 0
    %s37 = sadd.s32 %s36, 1
    %s38 = scalar_select %p35, %s36, %s37
    %p41 = pneg %p35
    %p42 = scmp.eq.s32.totalorder %s12, 1
    %p43 = por %p41, %p42
    %p44 = scmp.ne.s32.totalorder %s36, %s39
    %p45 = scmp.eq.s32.totalorder %s12, 0
    %p46 = por %p44, %p45
    %p47 = scmp.ne.s32.totalorder %s36, %s39
    %p48 = scmp.eq.s32.totalorder %s17, 1
    %p49 = por %p47, %p48
    %p50 = scmp.ne.s32.totalorder %s39, %s40
    %p51 = scmp.eq.s32.totalorder %s17, 0
    %p52 = por %p50, %p51
    %p53 = scmp.ne.s32.totalorder %s39, %s40
    %p54 = scmp.eq.s32.totalorder %s18, 1
    %p55 = por %p53, %p54
    %p57 = scmp.ne.s32.totalorder %s40, %s56
    %p58 = scmp.eq.s32.totalorder %s18, 0
    %p59 = por %p57, %p58
    %s60 = sadd.s32 %s20, 1
    %s61 = smul.u32 %s60, 4
    %s62 = sadd.s32 %s27, 1
    %s63 = smul.u32 %s62, 4
    %s64 = ssub.s32 %s19, %s31
    %s65 = ssub.s32 %s61, %s63
    %s66 = sor.u32 %s64, %s65
    %p67 = scmp.eq.s32.totalorder %s66, 0
    %s69 = sadd.s32 %s68, 1
    %s70 = scalar_select %p67, %s68, %s69
    %p73 = pneg %p67
    %p74 = scmp.eq.s32.totalorder %s12, 1
    %p75 = por %p73, %p74
    %p76 = scmp.ne.s32.totalorder %s68, %s71
    %p77 = scmp.eq.s32.totalorder %s12, 0
    %p78 = por %p76, %p77
    %p79 = scmp.ne.s32.totalorder %s68, %s71
    %p80 = scmp.eq.s32.totalorder %s17, 1
    %p81 = por %p79, %p80
    %p82 = scmp.ne.s32.totalorder %s71, %s72
    %p83 = scmp.eq.s32.totalorder %s17, 0
    %p84 = por %p82, %p83
    %p85 = scmp.ne.s32.totalorder %s71, %s72
    %p86 = scmp.eq.s32.totalorder %s18, 1
    %p87 = por %p85, %p86
    %p89 = scmp.ne.s32.totalorder %s72, %s88
    %p90 = scmp.eq.s32.totalorder %s18, 0
    %p91 = por %p89, %p90
    %s93 = sadd.s32 %s92, 1
    %p96 = scmp.eq.s32.totalorder %s12, 1
    %p97 = scmp.ne.s32.totalorder %s92, %s94
    %p98 = scmp.eq.s32.totalorder %s12, 0
    %p99 = por %p97, %p98
    %p100 = scmp.ne.s32.totalorder %s92, %s94
    %p101 = scmp.eq.s32.totalorder %s17, 1
    %p102 = por %p100, %p101
    %p103 = scmp.ne.s32.totalorder %s94, %s95
    %p104 = scmp.eq.s32.totalorder %s17, 0
    %p105 = por %p103, %p104
    %p106 = scmp.ne.s32.totalorder %s94, %s95
    %p107 = scmp.eq.s32.totalorder %s18, 1
    %p108 = por %p106, %p107
    %p110 = scmp.ne.s32.totalorder %s95, %s109
    %p111 = scmp.eq.s32.totalorder %s18, 0
    %p112 = por %p110, %p111
    %s114 = sadd.s32 %s113, 1
    %p117 = scmp.eq.s32.totalorder %s12, 1
    %p118 = scmp.ne.s32.totalorder %s113, %s115
    %p119 = scmp.eq.s32.totalorder %s12, 0
    %p120 = por %p118, %p119
    %p121 = scmp.ne.s32.totalorder %s113, %s115
    %p122 = scmp.eq.s32.totalorder %s17, 1
    %p123 = por %p121, %p122
    %p124 = scmp.ne.s32.totalorder %s115, %s116
    %p125 = scmp.eq.s32.totalorder %s17, 0
    %p126 = por %p124, %p125
    %p127 = scmp.ne.s32.totalorder %s115, %s116
    %p128 = scmp.eq.s32.totalorder %s18, 1
    %p129 = por %p127, %p128
    %p131 = scmp.ne.s32.totalorder %s116, %s130
    %p132 = scmp.eq.s32.totalorder %s18, 0
    %p133 = por %p131, %p132
    %s135 = sadd.s32 %s134, 1
    %p138 = scmp.eq.s32.totalorder %s12, 1
    %p139 = scmp.ne.s32.totalorder %s134, %s136
    %p140 = scmp.eq.s32.totalorder %s12, 0
    %p141 = por %p139, %p140
    %p142 = scmp.ne.s32.totalorder %s134, %s136
    %p143 = scmp.eq.s32.totalorder %s17, 1
    %p144 = por %p142, %p143
    %p145 = scmp.ne.s32.totalorder %s136, %s137
    %p146 = scmp.eq.s32.totalorder %s17, 0
    %p147 = por %p145, %p146
    %p148 = scmp.ne.s32.totalorder %s136, %s137
    %p149 = scmp.eq.s32.totalorder %s18, 1
    %p150 = por %p148, %p149
    %p152 = scmp.ne.s32.totalorder %s137, %s151
    %p153 = scmp.eq.s32.totalorder %s18, 0
    %p154 = por %p152, %p153
    %s156 = sadd.s32 %s155, 1
    %p159 = scmp.eq.s32.totalorder %s12, 1
    %p160 = scmp.ne.s32.totalorder %s155, %s157
    %p161 = scmp.eq.s32.totalorder %s12, 0
    %p162 = por %p160, %p161
    %p163 = scmp.ne.s32.totalorder %s155, %s157
    %p164 = scmp.eq.s32.totalorder %s17, 1
    %p165 = por %p163, %p164
    %p166 = scmp.ne.s32.totalorder %s157, %s158
    %p167 = scmp.eq.s32.totalorder %s17, 0
    %p168 = por %p166, %p167
    %p169 = scmp.ne.s32.totalorder %s157, %s158
    %p170 = scmp.eq.s32.totalorder %s18, 1
    %p171 = por %p169, %p170
    %p173 = scmp.ne.s32.totalorder %s158, %s172
    %p174 = scmp.eq.s32.totalorder %s18, 0
    %p175 = por %p173, %p174
    %s176 = ssub.s32 %s19, %s31
    %s177 = ssub.s32 %s20, %s27
    %s178 = sor.u32 %s176, %s177
    %p179 = scmp.eq.s32.totalorder %s178, 0
    %s181 = sadd.s32 %s180, 1
    %s182 = scalar_select %p179, %s180, %s181
    %p185 = pneg %p179
    %p186 = scmp.eq.s32.totalorder %s12, 1
    %p187 = por %p185, %p186
    %p188 = scmp.ne.s32.totalorder %s180, %s183
    %p189 = scmp.eq.s32.totalorder %s12, 0
    %p190 = por %p188, %p189
    %p191 = scmp.ne.s32.totalorder %s180, %s183
    %p192 = scmp.eq.s32.totalorder %s17, 1
    %p193 = por %p191, %p192
    %p194 = scmp.ne.s32.totalorder %s183, %s184
    %p195 = scmp.eq.s32.totalorder %s17, 0
    %p196 = por %p194, %p195
    %p197 = scmp.ne.s32.totalorder %s183, %s184
    %p198 = scmp.eq.s32.totalorder %s18, 1
    %p199 = por %p197, %p198
    %p201 = scmp.ne.s32.totalorder %s184, %s200
    %p202 = scmp.eq.s32.totalorder %s18, 0
    %p203 = por %p201, %p202
    %p204 = scmp.le.s32.totalorder 1, %s12
    %p205 = scmp.lt.s32.totalorder %s12, 3
    %p206 = pnand %p204, %p205
    %p207 = pneg %p206
    // Predicated region
    $region9: #{basic_block_forward.1} parent=5 // pred_check
      _
    $region10: #{basic_block_forward.1} parent=5 // pred_check_branch
      %209 = sbr.rel (%p206) target = $region12
    $region11: #{basic_block_forward.1} parent=5 // pred_region
      %s210 = ssub.s32 %s12, 1
      // Predicated region
      $region13: #{basic_block_forward.1} parent=11 // pred_check
        %p211 = pneg %p105
      $region14: #{basic_block_forward.1} parent=11 // pred_check_branch
        %213 = sbr.rel (%p211) target = $region16
      $region15: #{basic_block_forward.1} parent=11 // pred_region
        _
      $region16: #{basic_block_forward.1} parent=11 // pred_fallthru
        _
      // Predicated region
      $region17: #{basic_block_forward.1} parent=11 // pred_check
        %p214 = pneg %p126
      $region18: #{basic_block_forward.1} parent=11 // pred_check_branch
        %216 = sbr.rel (%p214) target = $region20
      $region19: #{basic_block_forward.1} parent=11 // pred_region
        _
      $region20: #{basic_block_forward.1} parent=11 // pred_fallthru
        _
      // Predicated region
      $region21: #{basic_block_forward.1} parent=11 // pred_check
        %p217 = pneg %p147
      $region22: #{basic_block_forward.1} parent=11 // pred_check_branch
        %219 = sbr.rel (%p217) target = $region24
      $region23: #{basic_block_forward.1} parent=11 // pred_region
        _
      $region24: #{basic_block_forward.1} parent=11 // pred_fallthru
        _
      // Predicated region
      $region25: #{basic_block_forward.1} parent=11 // pred_check
        %p220 = pneg %p168
      $region26: #{basic_block_forward.1} parent=11 // pred_check_branch
        %222 = sbr.rel (%p220) target = $region28
      $region27: #{basic_block_forward.1} parent=11 // pred_region
        _
      $region28: #{basic_block_forward.1} parent=11 // pred_fallthru
        _
    $region12: #{basic_block_forward.1} parent=5 // pred_fallthru
      _
    %p223 = scmp.lt.s32.totalorder %s12, 2
    // Predicated region
    $region29: #{basic_block_forward.1} parent=5 // pred_check
      %p224 = pneg %p223
    $region30: #{basic_block_forward.1} parent=5 // pred_check_branch
      %226 = sbr.rel (%p224) target = $region32
    $region31: #{basic_block_forward.1} parent=5 // pred_region
      // Predicated region
      $region33: #{basic_block_forward.1} parent=31 // pred_check
        %p227 = pneg %p46
      $region34: #{basic_block_forward.1} parent=31 // pred_check_branch
        %229 = sbr.rel (%p227) target = $region36
      $region35: #{basic_block_forward.1} parent=31 // pred_region
        %s230 = smul.u32 16, %s20
        %s231 = ssub.s32 20, %s230
        %p232 = scmp.lt.s32.totalorder %s231, 16
        %s233 = scalar_select %p232, %s231, 16
        %s234 = smul.u32 4, %s233
        %s235 = smul.u32 %s234, 3
        %p236 = scmp.lt.s32.totalorder %s19, 1
        %s237 = scalar_select %p236, %s19, 1
        %p238 = scmp.lt.s32.totalorder %s230, 19
        %s239 = scalar_select %p238, %s230, 19
        %s240 = smul.addr %s239, 3
        %s241 = smul.addr %s237, 60
        %s242 = sadd.s32 %s240, %s241
        %s243 = smul.addr %s242, 4
        %s244 = scalar_lea.vmem %s0, %s243
        %s245 = smul.u32 16, %s20
        %s246 = ssub.s32 20, %s245
        %p247 = scmp.lt.s32.totalorder %s246, 16
        %s248 = scalar_select %p247, %s246, 16
        %s249 = smul.u32 4, %s248
        %s250 = smul.u32 %s249, 3
      $region36: #{basic_block_forward.1} parent=31 // pred_fallthru
        _
      // Predicated region
      $region37: #{basic_block_forward.1} parent=31 // pred_check
        %p251 = pneg %p78
      $region38: #{basic_block_forward.1} parent=31 // pred_check_branch
        %253 = sbr.rel (%p251) target = $region40
      $region39: #{basic_block_forward.1} parent=31 // pred_region
        %s254 = sadd.s32 %s20, 1
        %s255 = smul.u32 %s254, 4
        %s256 = smul.u32 4, %s255
        %p257 = scmp.lt.s32.totalorder %s19, 1
        %s258 = scalar_select %p257, %s19, 1
        %p259 = scmp.lt.s32.totalorder %s256, 19
        %s260 = scalar_select %p259, %s256, 19
        %s261 = smul.addr %s260, 3
        %s262 = smul.addr %s258, 60
        %s263 = sadd.s32 %s261, %s262
        %s264 = smul.addr %s263, 4
        %s265 = scalar_lea.vmem %s1, %s264
        %s266 = sadd.s32 %s20, 1
        %s267 = smul.u32 %s266, 4
        %s268 = smul.u32 4, %s267
      $region40: #{basic_block_forward.1} parent=31 // pred_fallthru
        _
    $region32: #{basic_block_forward.1} parent=5 // pred_fallthru
      _
    %p269 = scmp.le.s32.totalorder 1, %s12
    %p270 = scmp.lt.s32.totalorder %s12, 3
    %p271 = pnand %p269, %p270
    %p272 = pneg %p271
    // Predicated region
    $region41: #{basic_block_forward.1} parent=5 // pred_check
      _
    $region42: #{basic_block_forward.1} parent=5 // pred_check_branch
      %274 = sbr.rel (%p271) target = $region44
    $region43: #{basic_block_forward.1} parent=5 // pred_region
      %s275 = ssub.s32 %s12, 1
      %s276 = smul.u32 16, %s22
      %s277 = ssub.s32 20, %s276
      %p278 = scmp.lt.s32.totalorder %s277, 16
      %s279 = scalar_select %p278, %s277, 16
      %s280 = smul.u32 4, %s279
      %s281 = smul.u32 %s280, 3
      %p282 = scmp.lt.s32.totalorder %s21, 1
      %s283 = scalar_select %p282, %s21, 1
      %p284 = scmp.lt.s32.totalorder %s276, 19
      %s285 = scalar_select %p284, %s276, 19
      %s286 = smul.addr %s285, 3
      %s287 = smul.addr %s283, 60
      %s288 = sadd.s32 %s286, %s287
      %s289 = smul.addr %s288, 4
      %s290 = scalar_lea.vmem %s0, %s289
      %p291 = pneg %p52
      %p292 = pneg %p49
      %s293 = sadd.s32 %s22, 1
      %s294 = smul.u32 %s293, 4
      %s295 = smul.u32 4, %s294
      %p296 = scmp.lt.s32.totalorder %s21, 1
      %s297 = scalar_select %p296, %s21, 1
      %p298 = scmp.lt.s32.totalorder %s295, 19
      %s299 = scalar_select %p298, %s295, 19
      %s300 = smul.addr %s299, 3
      %s301 = smul.addr %s297, 60
      %s302 = sadd.s32 %s300, %s301
      %s303 = smul.addr %s302, 4
      %s304 = scalar_lea.vmem %s1, %s303
      %p305 = pneg %p84
      %p306 = pneg %p81
      %p307 = pneg %p105
      %p308 = pneg %p102
      %p309 = pneg %p126
      %p310 = pneg %p123
      %p311 = pneg %p147
      %p312 = pneg %p144
      %p313 = pneg %p168
      %p314 = pneg %p165
      %p315 = pneg %p196
      %p316 = pneg %p193
      %s317 = smul.u32 16, %s22
      %p318 = scmp.lt.s32.totalorder %s21, 1
      %s319 = scalar_select %p318, %s21, 1
      %p320 = scmp.lt.s32.totalorder %s317, 15
      %s321 = scalar_select %p320, %s317, 15
      %s322 = smul.addr %s321, 2
      %s323 = smul.addr %s319, 32
      %s324 = sadd.s32 %s322, %s323
      %s325 = smul.addr %s324, 8
      %s326 = scalar_lea.vmem %s6, %s325
      %s327 = smul.u32 16, %s22
      %s328 = ssub.s32 20, %s327
      %p329 = scmp.lt.s32.totalorder %s328, 16
      %s330 = scalar_select %p329, %s328, 16
      %s331 = smul.u32 4, %s330
      %s332 = smul.u32 %s331, 3
      %p333 = scmp.lt.s32.totalorder %s21, 1
      %s334 = scalar_select %p333, %s21, 1
      %p335 = scmp.lt.s32.totalorder %s327, 19
      %s336 = scalar_select %p335, %s327, 19
      %s337 = smul.addr %s336, 3
      %s338 = smul.addr %s334, 60
      %s339 = sadd.s32 %s337, %s338
      %s340 = smul.addr %s339, 4
      %s341 = scalar_lea.vmem %s0, %s340
      %s342 = smul.u32 16, %s22
      %s343 = ssub.s32 20, %s342
      %p344 = scmp.lt.s32.totalorder %s343, 16
      %s345 = scalar_select %p344, %s343, 16
      %s346 = smul.u32 4, %s345
      %s347 = smul.u32 %s346, 3
      %s348 = sadd.s32 %s22, 1
      %s349 = smul.u32 %s348, 4
      %s350 = smul.u32 4, %s349
      %p351 = scmp.lt.s32.totalorder %s21, 1
      %s352 = scalar_select %p351, %s21, 1
      %p353 = scmp.lt.s32.totalorder %s350, 19
      %s354 = scalar_select %p353, %s350, 19
      %s355 = smul.addr %s354, 3
      %s356 = smul.addr %s352, 60
      %s357 = sadd.s32 %s355, %s356
      %s358 = smul.addr %s357, 4
      %s359 = scalar_lea.vmem %s1, %s358
      %s360 = sadd.s32 %s22, 1
      %s361 = smul.u32 %s360, 4
      %s362 = smul.u32 4, %s361
      %s363 = smul.u32 16, %s22
      %p364 = scmp.lt.s32.totalorder %s21, 1
      %s365 = scalar_select %p364, %s21, 1
      %p366 = scmp.lt.s32.totalorder %s363, 15
      %s367 = scalar_select %p366, %s363, 15
      %s368 = smul.addr %s367, 2
      %s369 = smul.addr %s365, 32
      %s370 = sadd.s32 %s368, %s369
      %s371 = smul.addr %s370, 8
      %s372 = scalar_lea.vmem %s6, %s371
      %s373 = smul.u32 16, %s22
      %v375 = vld [vmem:[%s341] sm:$0xf]
      %v376 = vld [vmem:[%s341 + $0x4] sm:$0xf]
      %v377 = vld [vmem:[%s341 + $0x8] sm:$0x1]
      %v378 = vld [vmem:[%s341 + $0xc] sm:$0xf]
      %v379 = vld [vmem:[%s341 + $0x10] sm:$0xf]
      %v380 = vld [vmem:[%s341 + $0x14] sm:$0x1]
      %v381 = vld [vmem:[%s341 + $0x18] sm:$0xf]
      %v382 = vld [vmem:[%s341 + $0x1c] sm:$0xf]
      %v383 = vld [vmem:[%s341 + $0x20] sm:$0x1]
      %v384 = vld [vmem:[%s341 + $0x24] sm:$0xf]
      %v385 = vld [vmem:[%s341 + $0x28] sm:$0xf]
      %v386 = vld [vmem:[%s341 + $0x2c] sm:$0x1]
      %v387 = vld [vmem:[%s341 + $0x30] sm:$0xf]
      %v388 = vld [vmem:[%s341 + $0x34] sm:$0xf]
      %v389 = vld [vmem:[%s341 + $0x38] sm:$0x1]
      %v390 = vld [vmem:[%s341 + $0x3c] sm:$0xf]
      %v391 = vld [vmem:[%s341 + $0x40] sm:$0xf]
      %v392 = vld [vmem:[%s341 + $0x44] sm:$0x1]
      %v393 = vld [vmem:[%s341 + $0x48] sm:$0xf]
      %v394 = vld [vmem:[%s341 + $0x4c] sm:$0xf]
      %v395 = vld [vmem:[%s341 + $0x50] sm:$0x1]
      %v396 = vld [vmem:[%s341 + $0x54] sm:$0xf]
      %v397 = vld [vmem:[%s341 + $0x58] sm:$0xf]
      %v398 = vld [vmem:[%s341 + $0x5c] sm:$0x1]
      %v399 = vld [vmem:[%s341 + $0x60] sm:$0xf]
      %v400 = vld [vmem:[%s341 + $0x64] sm:$0xf]
      %v401 = vld [vmem:[%s341 + $0x68] sm:$0x1]
      %v402 = vld [vmem:[%s341 + $0x6c] sm:$0xf]
      %v403 = vld [vmem:[%s341 + $0x70] sm:$0xf]
      %v404 = vld [vmem:[%s341 + $0x74] sm:$0x1]
      %v405 = vld [vmem:[%s341 + $0x78] sm:$0xf]
      %v406 = vld [vmem:[%s341 + $0x7c] sm:$0xf]
      %v407 = vld [vmem:[%s341 + $0x80] sm:$0x1]
      %v408 = vld [vmem:[%s341 + $0x84] sm:$0xf]
      %v409 = vld [vmem:[%s341 + $0x88] sm:$0xf]
      %v410 = vld [vmem:[%s341 + $0x8c] sm:$0x1]
      %v411 = vld [vmem:[%s341 + $0x90] sm:$0xf]
      %v412 = vld [vmem:[%s341 + $0x94] sm:$0xf]
      %v413 = vld [vmem:[%s341 + $0x98] sm:$0x1]
      %v414 = vld [vmem:[%s341 + $0x9c] sm:$0xf]
      %v415 = vld [vmem:[%s341 + $0xa0] sm:$0xf]
      %v416 = vld [vmem:[%s341 + $0xa4] sm:$0x1]
      %v417 = vld [vmem:[%s341 + $0xa8] sm:$0xf]
      %v418 = vld [vmem:[%s341 + $0xac] sm:$0xf]
      %v419 = vld [vmem:[%s341 + $0xb0] sm:$0x1]
      %v420 = vld [vmem:[%s341 + $0xb4] sm:$0xf]
      %v421 = vld [vmem:[%s341 + $0xb8] sm:$0xf]
      %v422 = vld [vmem:[%s341 + $0xbc] sm:$0x1]
      %v423 = vld [vmem:[%s359] sm:$0xf]
      %v424 = vld [vmem:[%s359 + $0x4] sm:$0xf]
      %v425 = vld [vmem:[%s359 + $0x8] sm:$0x1]
      %v426 = vld [vmem:[%s359 + $0xc] sm:$0xf]
      %v427 = vld [vmem:[%s359 + $0x10] sm:$0xf]
      %v428 = vld [vmem:[%s359 + $0x14] sm:$0x1]
      %v429 = vld [vmem:[%s359 + $0x18] sm:$0xf]
      %v430 = vld [vmem:[%s359 + $0x1c] sm:$0xf]
      %v431 = vld [vmem:[%s359 + $0x20] sm:$0x1]
      %v432 = vld [vmem:[%s359 + $0x24] sm:$0xf]
      %v433 = vld [vmem:[%s359 + $0x28] sm:$0xf]
      %v434 = vld [vmem:[%s359 + $0x2c] sm:$0x1]
      %v471 = vunpack.c.l.b16 %v375
      %v472 = vunpack.c.l.b16 %v376
      %v473 = vunpack.c.l.b16 %v378
      %v474 = vunpack.c.l.b16 %v379
      %v475 = vunpack.c.l.b16 %v381
      %v476 = vunpack.c.l.b16 %v382
      %v477 = vunpack.c.l.b16 %v384
      %v478 = vunpack.c.l.b16 %v385
      %v479 = vunpack.c.l.b16 %v387
      %v480 = vunpack.c.l.b16 %v388
      %v481 = vunpack.c.l.b16 %v390
      %v482 = vunpack.c.l.b16 %v391
      %v483 = vunpack.c.l.b16 %v393
      %v484 = vunpack.c.l.b16 %v394
      %v485 = vunpack.c.l.b16 %v396
      %v486 = vunpack.c.l.b16 %v397
      %v487 = vunpack.c.l.b16 %v399
      %v488 = vunpack.c.l.b16 %v400
      %v489 = vunpack.c.l.b16 %v402
      %v490 = vunpack.c.l.b16 %v403
      %v491 = vunpack.c.l.b16 %v405
      %v492 = vunpack.c.l.b16 %v406
      %v493 = vunpack.c.l.b16 %v408
      %v494 = vunpack.c.l.b16 %v409
      %v495 = vunpack.c.l.b16 %v411
      %v496 = vunpack.c.l.b16 %v412
      %v497 = vunpack.c.l.b16 %v414
      %v498 = vunpack.c.l.b16 %v415
      %v499 = vunpack.c.l.b16 %v417
      %v500 = vunpack.c.l.b16 %v418
      %v501 = vunpack.c.l.b16 %v420
      %v502 = vunpack.c.l.b16 %v421
      %v503 = vunpack.c.l.b16 %v423
      %v504 = vunpack.c.l.b16 %v424
      %v505 = vunpack.c.l.b16 %v426
      %v506 = vunpack.c.l.b16 %v427
      %v507 = vpack.c.b16 %v472, %v471
      %v508 = vpack.c.b16 %v474, %v473
      %v509 = vpack.c.b16 %v476, %v475
      %v510 = vpack.c.b16 %v478, %v477
      %v511 = vpack.c.b16 %v480, %v479
      %v512 = vpack.c.b16 %v482, %v481
      %v513 = vpack.c.b16 %v484, %v483
      %v514 = vpack.c.b16 %v486, %v485
      %v515 = vpack.c.b16 %v488, %v487
      %v516 = vpack.c.b16 %v490, %v489
      %v517 = vpack.c.b16 %v492, %v491
      %v518 = vpack.c.b16 %v494, %v493
      %v519 = vpack.c.b16 %v496, %v495
      %v520 = vpack.c.b16 %v498, %v497
      %v521 = vpack.c.b16 %v500, %v499
      %v522 = vpack.c.b16 %v502, %v501
      %v523 = vpack.c.b16 %v504, %v503
      %v524 = vpack.c.b16 %v506, %v505
      %v561 = vunpack.c.l.b16 %v377
      %v562 = vunpack.c.l.b16 %v380
      %v563 = vunpack.c.l.b16 %v383
      %v564 = vunpack.c.l.b16 %v386
      %v565 = vunpack.c.l.b16 %v389
      %v566 = vunpack.c.l.b16 %v392
      %v567 = vunpack.c.l.b16 %v395
      %v568 = vunpack.c.l.b16 %v398
      %v569 = vunpack.c.l.b16 %v401
      %v570 = vunpack.c.l.b16 %v404
      %v571 = vunpack.c.l.b16 %v407
      %v572 = vunpack.c.l.b16 %v410
      %v573 = vunpack.c.l.b16 %v413
      %v574 = vunpack.c.l.b16 %v416
      %v575 = vunpack.c.l.b16 %v419
      %v576 = vunpack.c.l.b16 %v422
      %v577 = vunpack.c.l.b16 %v425
      %v578 = vunpack.c.l.b16 %v428
      %v579 = vpack.c.b16 %v561, %v561
      %v580 = vpack.c.b16 %v562, %v562
      %v581 = vpack.c.b16 %v563, %v563
      %v582 = vpack.c.b16 %v564, %v564
      %v583 = vpack.c.b16 %v565, %v565
      %v584 = vpack.c.b16 %v566, %v566
      %v585 = vpack.c.b16 %v567, %v567
      %v586 = vpack.c.b16 %v568, %v568
      %v587 = vpack.c.b16 %v569, %v569
      %v588 = vpack.c.b16 %v570, %v570
      %v589 = vpack.c.b16 %v571, %v571
      %v590 = vpack.c.b16 %v572, %v572
      %v591 = vpack.c.b16 %v573, %v573
      %v592 = vpack.c.b16 %v574, %v574
      %v593 = vpack.c.b16 %v575, %v575
      %v594 = vpack.c.b16 %v576, %v576
      %v595 = vpack.c.b16 %v577, %v577
      %v596 = vpack.c.b16 %v578, %v578
      %vm597 = vsmask.f32 7424
      %v599 = vshrl.u32 %v507, 16
      %v601 = vshll.u32 %v507, 16
      %v603 = vrot.slane %v601, 1
      %v604 = vor.u32 %v599, %v603
      %v606 = vshll.u32 %v579, 16
      %v608 = vrot.slane %v606, 1
      %v609 = vsel %vm597, %v604, %v608
      %v611 = vshrl.u32 %v508, 16
      %v613 = vshll.u32 %v508, 16
      %v615 = vrot.slane %v613, 1
      %v616 = vor.u32 %v611, %v615
      %v618 = vshll.u32 %v580, 16
      %v620 = vrot.slane %v618, 1
      %v621 = vsel %vm597, %v616, %v620
      %v623 = vshrl.u32 %v509, 16
      %v625 = vshll.u32 %v509, 16
      %v627 = vrot.slane %v625, 1
      %v628 = vor.u32 %v623, %v627
      %v630 = vshll.u32 %v581, 16
      %v632 = vrot.slane %v630, 1
      %v633 = vsel %vm597, %v628, %v632
      %v635 = vshrl.u32 %v510, 16
      %v637 = vshll.u32 %v510, 16
      %v639 = vrot.slane %v637, 1
      %v640 = vor.u32 %v635, %v639
      %v642 = vshll.u32 %v582, 16
      %v644 = vrot.slane %v642, 1
      %v645 = vsel %vm597, %v640, %v644
      %v647 = vshrl.u32 %v511, 16
      %v649 = vshll.u32 %v511, 16
      %v651 = vrot.slane %v649, 1
      %v652 = vor.u32 %v647, %v651
      %v654 = vshll.u32 %v583, 16
      %v656 = vrot.slane %v654, 1
      %v657 = vsel %vm597, %v652, %v656
      %v659 = vshrl.u32 %v512, 16
      %v661 = vshll.u32 %v512, 16
      %v663 = vrot.slane %v661, 1
      %v664 = vor.u32 %v659, %v663
      %v666 = vshll.u32 %v584, 16
      %v668 = vrot.slane %v666, 1
      %v669 = vsel %vm597, %v664, %v668
      %v671 = vshrl.u32 %v513, 16
      %v673 = vshll.u32 %v513, 16
      %v675 = vrot.slane %v673, 1
      %v676 = vor.u32 %v671, %v675
      %v678 = vshll.u32 %v585, 16
      %v680 = vrot.slane %v678, 1
      %v681 = vsel %vm597, %v676, %v680
      %v683 = vshrl.u32 %v514, 16
      %v685 = vshll.u32 %v514, 16
      %v687 = vrot.slane %v685, 1
      %v688 = vor.u32 %v683, %v687
      %v690 = vshll.u32 %v586, 16
      %v692 = vrot.slane %v690, 1
      %v693 = vsel %vm597, %v688, %v692
      %v695 = vshrl.u32 %v515, 16
      %v697 = vshll.u32 %v515, 16
      %v699 = vrot.slane %v697, 1
      %v700 = vor.u32 %v695, %v699
      %v702 = vshll.u32 %v587, 16
      %v704 = vrot.slane %v702, 1
      %v705 = vsel %vm597, %v700, %v704
      %v707 = vshrl.u32 %v516, 16
      %v709 = vshll.u32 %v516, 16
      %v711 = vrot.slane %v709, 1
      %v712 = vor.u32 %v707, %v711
      %v714 = vshll.u32 %v588, 16
      %v716 = vrot.slane %v714, 1
      %v717 = vsel %vm597, %v712, %v716
      %v719 = vshrl.u32 %v517, 16
      %v721 = vshll.u32 %v517, 16
      %v723 = vrot.slane %v721, 1
      %v724 = vor.u32 %v719, %v723
      %v726 = vshll.u32 %v589, 16
      %v728 = vrot.slane %v726, 1
      %v729 = vsel %vm597, %v724, %v728
      %v731 = vshrl.u32 %v518, 16
      %v733 = vshll.u32 %v518, 16
      %v735 = vrot.slane %v733, 1
      %v736 = vor.u32 %v731, %v735
      %v738 = vshll.u32 %v590, 16
      %v740 = vrot.slane %v738, 1
      %v741 = vsel %vm597, %v736, %v740
      %v743 = vshrl.u32 %v519, 16
      %v745 = vshll.u32 %v519, 16
      %v747 = vrot.slane %v745, 1
      %v748 = vor.u32 %v743, %v747
      %v750 = vshll.u32 %v591, 16
      %v752 = vrot.slane %v750, 1
      %v753 = vsel %vm597, %v748, %v752
      %v755 = vshrl.u32 %v520, 16
      %v757 = vshll.u32 %v520, 16
      %v759 = vrot.slane %v757, 1
      %v760 = vor.u32 %v755, %v759
      %v762 = vshll.u32 %v592, 16
      %v764 = vrot.slane %v762, 1
      %v765 = vsel %vm597, %v760, %v764
      %v767 = vshrl.u32 %v521, 16
      %v769 = vshll.u32 %v521, 16
      %v771 = vrot.slane %v769, 1
      %v772 = vor.u32 %v767, %v771
      %v774 = vshll.u32 %v593, 16
      %v776 = vrot.slane %v774, 1
      %v777 = vsel %vm597, %v772, %v776
      %v779 = vshrl.u32 %v522, 16
      %v781 = vshll.u32 %v522, 16
      %v783 = vrot.slane %v781, 1
      %v784 = vor.u32 %v779, %v783
      %v786 = vshll.u32 %v594, 16
      %v788 = vrot.slane %v786, 1
      %v789 = vsel %vm597, %v784, %v788
      %v791 = vshrl.u32 %v523, 16
      %v793 = vshll.u32 %v523, 16
      %v795 = vrot.slane %v793, 1
      %v796 = vor.u32 %v791, %v795
      %v798 = vshll.u32 %v595, 16
      %v800 = vrot.slane %v798, 1
      %v801 = vsel %vm597, %v796, %v800
      %v803 = vshrl.u32 %v524, 16
      %v805 = vshll.u32 %v524, 16
      %v807 = vrot.slane %v805, 1
      %v808 = vor.u32 %v803, %v807
      %v810 = vshll.u32 %v596, 16
      %v812 = vrot.slane %v810, 1
      %v813 = vsel %vm597, %v808, %v812
      %vm832 = vcmask 1046528
      %v833 = vrot.slane %v507, 1
      %v834 = vrot.slane %v579, 1
      %v835 = vsel %vm832, %v833, %v834
      %v836 = vrot.slane %v508, 1
      %v837 = vrot.slane %v580, 1
      %v838 = vsel %vm832, %v836, %v837
      %v839 = vrot.slane %v509, 1
      %v840 = vrot.slane %v581, 1
      %v841 = vsel %vm832, %v839, %v840
      %v842 = vrot.slane %v510, 1
      %v843 = vrot.slane %v582, 1
      %v844 = vsel %vm832, %v842, %v843
      %v845 = vrot.slane %v511, 1
      %v846 = vrot.slane %v583, 1
      %v847 = vsel %vm832, %v845, %v846
      %v848 = vrot.slane %v512, 1
      %v849 = vrot.slane %v584, 1
      %v850 = vsel %vm832, %v848, %v849
      %v851 = vrot.slane %v513, 1
      %v852 = vrot.slane %v585, 1
      %v853 = vsel %vm832, %v851, %v852
      %v854 = vrot.slane %v514, 1
      %v855 = vrot.slane %v586, 1
      %v856 = vsel %vm832, %v854, %v855
      %v857 = vrot.slane %v515, 1
      %v858 = vrot.slane %v587, 1
      %v859 = vsel %vm832, %v857, %v858
      %v860 = vrot.slane %v516, 1
      %v861 = vrot.slane %v588, 1
      %v862 = vsel %vm832, %v860, %v861
      %v863 = vrot.slane %v517, 1
      %v864 = vrot.slane %v589, 1
      %v865 = vsel %vm832, %v863, %v864
      %v866 = vrot.slane %v518, 1
      %v867 = vrot.slane %v590, 1
      %v868 = vsel %vm832, %v866, %v867
      %v869 = vrot.slane %v519, 1
      %v870 = vrot.slane %v591, 1
      %v871 = vsel %vm832, %v869, %v870
      %v872 = vrot.slane %v520, 1
      %v873 = vrot.slane %v592, 1
      %v874 = vsel %vm832, %v872, %v873
      %v875 = vrot.slane %v521, 1
      %v876 = vrot.slane %v593, 1
      %v877 = vsel %vm832, %v875, %v876
      %v878 = vrot.slane %v522, 1
      %v879 = vrot.slane %v594, 1
      %v880 = vsel %vm832, %v878, %v879
      %v881 = vrot.slane %v523, 1
      %v882 = vrot.slane %v595, 1
      %v883 = vsel %vm832, %v881, %v882
      %v884 = vrot.slane %v524, 1
      %v885 = vrot.slane %v596, 1
      %v886 = vsel %vm832, %v884, %v885
      %v907 = vunpack.c.l.b16 %v429
      %v908 = vunpack.c.l.b16 %v430
      %v909 = vpack.c.b16 %v908, %v907
      %v912 = vunpack.c.l.b16 %v431
      %v913 = vpack.c.b16 %v912, %v912
      %v915 = vshrl.u32 %v909, 16
      %v917 = vshll.u32 %v909, 16
      %v919 = vrot.slane %v917, 1
      %v920 = vor.u32 %v915, %v919
      %v922 = vshll.u32 %v913, 16
      %v924 = vrot.slane %v922, 1
      %v925 = vsel %vm597, %v920, %v924
      %v927 = vrot.slane %v909, 1
      %v928 = vrot.slane %v913, 1
      %v929 = vsel %vm832, %v927, %v928
      %v933 = vunpack.c.l.b16 %v432
      %v934 = vunpack.c.l.b16 %v433
      %v935 = vpack.c.b16 %v934, %v933
      %v938 = vunpack.c.l.b16 %v434
      %v939 = vpack.c.b16 %v938, %v938
      %v941 = vshrl.u32 %v935, 16
      %v943 = vshll.u32 %v935, 16
      %v945 = vrot.slane %v943, 1
      %v946 = vor.u32 %v941, %v945
      %v948 = vshll.u32 %v939, 16
      %v950 = vrot.slane %v948, 1
      %v951 = vsel %vm597, %v946, %v950
      %v953 = vrot.slane %v935, 1
      %v954 = vrot.slane %v939, 1
      %v955 = vsel %vm832, %v953, %v954
      %v957 = vld [vmem:[%s2] sm:$0xf]
      %v958 = vld [vmem:[%s2 + $0x4] sm:$0xf]
      %v959 = vld [vmem:[%s2 + $0x8] sm:$0xf]
      %v960 = vld [vmem:[%s2 + $0xc] sm:$0xf]
      %v961 = vld [vmem:[%s2 + $0x10] sm:$0xf]
      %v962 = vld [vmem:[%s2 + $0x14] sm:$0xf]
      %v963 = vld [vmem:[%s2 + $0x18] sm:$0xf]
      %v964 = vld [vmem:[%s2 + $0x1c] sm:$0xf]
      %v965 = vld [vmem:[%s2 + $0x20] sm:$0xf]
      %v966 = vld [vmem:[%s2 + $0x24] sm:$0xf]
      %v967 = vld [vmem:[%s2 + $0x28] sm:$0xf]
      %v968 = vld [vmem:[%s2 + $0x2c] sm:$0xf]
      %v969 = vld [vmem:[%s2 + $0x30] sm:$0xf]
      %v970 = vld [vmem:[%s2 + $0x34] sm:$0xf]
      %v971 = vld [vmem:[%s2 + $0x38] sm:$0xf]
      %v972 = vld [vmem:[%s2 + $0x3c] sm:$0xf]
      %v973 = vld [vmem:[%s2 + $0x40] sm:$0xf]
      %v974 = vld [vmem:[%s2 + $0x44] sm:$0xf]
      %v975 = vld [vmem:[%s2 + $0x48] sm:$0xf]
      %v976 = vld [vmem:[%s2 + $0x4c] sm:$0xf]
      %v977 = vld [vmem:[%s2 + $0x50] sm:$0xf]
      %v978 = vld [vmem:[%s2 + $0x54] sm:$0xf]
      %v979 = vld [vmem:[%s2 + $0x58] sm:$0xf]
      %v980 = vld [vmem:[%s2 + $0x5c] sm:$0xf]
      %v981 = vld [vmem:[%s2 + $0x60] sm:$0xf]
      %v982 = vld [vmem:[%s2 + $0x64] sm:$0xf]
      %v983 = vld [vmem:[%s2 + $0x68] sm:$0xf]
      %v984 = vld [vmem:[%s2 + $0x6c] sm:$0xf]
      %v985 = vld [vmem:[%s2 + $0x70] sm:$0xf]
      %v986 = vld [vmem:[%s2 + $0x74] sm:$0xf]
      %v987 = vld [vmem:[%s2 + $0x78] sm:$0xf]
      %v988 = vld [vmem:[%s2 + $0x7c] sm:$0xf]
      %v989 = vld [vmem:[%s2 + $0x80] sm:$0xf]
      %v990 = vld [vmem:[%s2 + $0x84] sm:$0xf]
      %v991 = vld [vmem:[%s2 + $0x88] sm:$0xf]
      %v992 = vld [vmem:[%s2 + $0x8c] sm:$0xf]
      %v993 = vld [vmem:[%s2 + $0x90] sm:$0xf]
      %v994 = vld [vmem:[%s2 + $0x94] sm:$0xf]
      %v995 = vld [vmem:[%s2 + $0x98] sm:$0xf]
      %v996 = vld [vmem:[%s2 + $0x9c] sm:$0xf]
      %v997 = vld [vmem:[%s2 + $0xa0] sm:$0xf]
      %v998 = vld [vmem:[%s2 + $0xa4] sm:$0xf]
      %v999 = vld [vmem:[%s2 + $0xa8] sm:$0xf]
      %v1000 = vld [vmem:[%s2 + $0xac] sm:$0xf]
      %v1001 = vld [vmem:[%s2 + $0xb0] sm:$0xf]
      %v1002 = vld [vmem:[%s2 + $0xb4] sm:$0xf]
      %v1003 = vld [vmem:[%s2 + $0xb8] sm:$0xf]
      %v1004 = vld [vmem:[%s2 + $0xbc] sm:$0xf]
      %v1005 = vld [vmem:[%s2 + $0xc0] sm:$0xf]
      %v1006 = vld [vmem:[%s2 + $0xc4] sm:$0xf]
      %v1007 = vld [vmem:[%s2 + $0xc8] sm:$0xf]
      %v1008 = vld [vmem:[%s2 + $0xcc] sm:$0xf]
      %v1009 = vld [vmem:[%s2 + $0xd0] sm:$0xf]
      %v1010 = vld [vmem:[%s2 + $0xd4] sm:$0xf]
      %v1011 = vld [vmem:[%s2 + $0xd8] sm:$0xf]
      %v1012 = vld [vmem:[%s2 + $0xdc] sm:$0xf]
      %v1013 = vld [vmem:[%s2 + $0xe0] sm:$0xf]
      %v1014 = vld [vmem:[%s2 + $0xe4] sm:$0xf]
      %v1015 = vld [vmem:[%s2 + $0xe8] sm:$0xf]
      %v1016 = vld [vmem:[%s2 + $0xec] sm:$0xf]
      %v1017 = vld [vmem:[%s2 + $0xf0] sm:$0xf]
      %v1018 = vld [vmem:[%s2 + $0xf4] sm:$0xf]
      %v1019 = vld [vmem:[%s2 + $0xf8] sm:$0xf]
      %v1020 = vld [vmem:[%s2 + $0xfc] sm:$0xf]
      %v1021 = vld [vmem:[%s2 + $0x100] sm:$0xf]
      %v1022 = vld [vmem:[%s2 + $0x104] sm:$0xf]
      %v1023 = vld [vmem:[%s2 + $0x108] sm:$0xf]
      %v1024 = vld [vmem:[%s2 + $0x10c] sm:$0xf]
      %v1025 = vld [vmem:[%s2 + $0x110] sm:$0xf]
      %v1026 = vld [vmem:[%s2 + $0x114] sm:$0xf]
      %v1027 = vld [vmem:[%s2 + $0x118] sm:$0xf]
      %v1028 = vld [vmem:[%s2 + $0x11c] sm:$0xf]
      %v1029 = vld [vmem:[%s2 + $0x120] sm:$0xf]
      %v1030 = vld [vmem:[%s2 + $0x124] sm:$0xf]
      %v1031 = vld [vmem:[%s2 + $0x128] sm:$0xf]
      %v1032 = vld [vmem:[%s2 + $0x12c] sm:$0xf]
      %v1033 = vld [vmem:[%s2 + $0x130] sm:$0xf]
      %v1034 = vld [vmem:[%s2 + $0x134] sm:$0xf]
      %v1035 = vld [vmem:[%s2 + $0x138] sm:$0xf]
      %v1036 = vld [vmem:[%s2 + $0x13c] sm:$0xf]
      %v1037 = vld [vmem:[%s2 + $0x140] sm:$0xf]
      %v1038 = vld [vmem:[%s2 + $0x144] sm:$0xf]
      %v1039 = vld [vmem:[%s2 + $0x148] sm:$0xf]
      %v1040 = vld [vmem:[%s2 + $0x14c] sm:$0xf]
      %v1041 = vld [vmem:[%s2 + $0x150] sm:$0xf]
      %v1042 = vld [vmem:[%s2 + $0x154] sm:$0xf]
      %v1043 = vld [vmem:[%s2 + $0x158] sm:$0xf]
      %v1044 = vld [vmem:[%s2 + $0x15c] sm:$0xf]
      %v1045 = vld [vmem:[%s2 + $0x160] sm:$0xf]
      %v1046 = vld [vmem:[%s2 + $0x164] sm:$0xf]
      %v1047 = vld [vmem:[%s2 + $0x168] sm:$0xf]
      %v1048 = vld [vmem:[%s2 + $0x16c] sm:$0xf]
      %v1049 = vld [vmem:[%s2 + $0x170] sm:$0xf]
      %v1050 = vld [vmem:[%s2 + $0x174] sm:$0xf]
      %v1051 = vld [vmem:[%s2 + $0x178] sm:$0xf]
      %v1052 = vld [vmem:[%s2 + $0x17c] sm:$0xf]
      %v1053 = vld [vmem:[%s2 + $0x180] sm:$0xf]
      %v1054 = vld [vmem:[%s2 + $0x184] sm:$0xf]
      %v1055 = vld [vmem:[%s2 + $0x188] sm:$0xf]
      %v1056 = vld [vmem:[%s2 + $0x18c] sm:$0xf]
      %v1057 = vld [vmem:[%s2 + $0x190] sm:$0xf]
      %v1058 = vld [vmem:[%s2 + $0x194] sm:$0xf]
      %v1059 = vld [vmem:[%s2 + $0x198] sm:$0xf]
      %v1060 = vld [vmem:[%s2 + $0x19c] sm:$0xf]
      %v1061 = vld [vmem:[%s2 + $0x1a0] sm:$0xf]
      %v1062 = vld [vmem:[%s2 + $0x1a4] sm:$0xf]
      %v1063 = vld [vmem:[%s2 + $0x1a8] sm:$0xf]
      %v1064 = vld [vmem:[%s2 + $0x1ac] sm:$0xf]
      %v1065 = vld [vmem:[%s2 + $0x1b0] sm:$0xf]
      %v1066 = vld [vmem:[%s2 + $0x1b4] sm:$0xf]
      %v1067 = vld [vmem:[%s2 + $0x1b8] sm:$0xf]
      %v1068 = vld [vmem:[%s2 + $0x1bc] sm:$0xf]
      %v1069 = vld [vmem:[%s2 + $0x1c0] sm:$0xf]
      %v1070 = vld [vmem:[%s2 + $0x1c4] sm:$0xf]
      %v1071 = vld [vmem:[%s2 + $0x1c8] sm:$0xf]
      %v1072 = vld [vmem:[%s2 + $0x1cc] sm:$0xf]
      %v1073 = vld [vmem:[%s2 + $0x1d0] sm:$0xf]
      %v1074 = vld [vmem:[%s2 + $0x1d4] sm:$0xf]
      %v1075 = vld [vmem:[%s2 + $0x1d8] sm:$0xf]
      %v1076 = vld [vmem:[%s2 + $0x1dc] sm:$0xf]
      %v1077 = vld [vmem:[%s2 + $0x1e0] sm:$0xf]
      %v1078 = vld [vmem:[%s2 + $0x1e4] sm:$0xf]
      %v1079 = vld [vmem:[%s2 + $0x1e8] sm:$0xf]
      %v1080 = vld [vmem:[%s2 + $0x1ec] sm:$0xf]
      %v1081 = vld [vmem:[%s2 + $0x1f0] sm:$0xf]
      %v1082 = vld [vmem:[%s2 + $0x1f4] sm:$0xf]
      %v1083 = vld [vmem:[%s2 + $0x1f8] sm:$0xf]
      %v1084 = vld [vmem:[%s2 + $0x1fc] sm:$0xf]
      %v1085 = vld [vmem:[%s2 + $0x200] sm:$0xf]
      %v1086 = vld [vmem:[%s2 + $0x204] sm:$0xf]
      %v1087 = vld [vmem:[%s2 + $0x208] sm:$0xf]
      %v1088 = vld [vmem:[%s2 + $0x20c] sm:$0xf]
      %v1089 = vld [vmem:[%s2 + $0x210] sm:$0xf]
      %v1090 = vld [vmem:[%s2 + $0x214] sm:$0xf]
      %v1091 = vld [vmem:[%s2 + $0x218] sm:$0xf]
      %v1092 = vld [vmem:[%s2 + $0x21c] sm:$0xf]
      %v1093 = vld [vmem:[%s2 + $0x220] sm:$0xf]
      %v1094 = vld [vmem:[%s2 + $0x224] sm:$0xf]
      %v1095 = vld [vmem:[%s2 + $0x228] sm:$0xf]
      %v1096 = vld [vmem:[%s2 + $0x22c] sm:$0xf]
      %v1097 = vld [vmem:[%s2 + $0x230] sm:$0xf]
      %v1098 = vld [vmem:[%s2 + $0x234] sm:$0xf]
      %v1099 = vld [vmem:[%s2 + $0x238] sm:$0xf]
      %v1100 = vld [vmem:[%s2 + $0x23c] sm:$0xf]
      %v1101 = vld [vmem:[%s3] sm:$0x1]
      %v1103 = vperm.slane %v1101, 0
      %v1249 = vunpack.c.l.b16 %v957
      %v1250 = vunpack.c.l.b16 %v958
      %v1251 = vunpack.c.l.b16 %v959
      %v1252 = vunpack.c.l.b16 %v960
      %v1253 = vunpack.c.l.b16 %v961
      %v1254 = vunpack.c.l.b16 %v962
      %v1255 = vunpack.c.l.b16 %v963
      %v1256 = vunpack.c.l.b16 %v964
      %v1257 = vunpack.c.l.b16 %v965
      %v1258 = vunpack.c.l.b16 %v966
      %v1259 = vunpack.c.l.b16 %v967
      %v1260 = vunpack.c.l.b16 %v968
      %v1261 = vunpack.c.l.b16 %v969
      %v1262 = vunpack.c.l.b16 %v970
      %v1263 = vunpack.c.l.b16 %v971
      %v1264 = vunpack.c.l.b16 %v972
      %v1265 = vunpack.c.l.b16 %v973
      %v1266 = vunpack.c.l.b16 %v974
      %v1267 = vunpack.c.l.b16 %v975
      %v1268 = vunpack.c.l.b16 %v976
      %v1269 = vunpack.c.l.b16 %v977
      %v1270 = vunpack.c.l.b16 %v978
      %v1271 = vunpack.c.l.b16 %v979
      %v1272 = vunpack.c.l.b16 %v980
      %v1273 = vunpack.c.l.b16 %v981
      %v1274 = vunpack.c.l.b16 %v982
      %v1275 = vunpack.c.l.b16 %v983
      %v1276 = vunpack.c.l.b16 %v984
      %v1277 = vunpack.c.l.b16 %v985
      %v1278 = vunpack.c.l.b16 %v986
      %v1279 = vunpack.c.l.b16 %v987
      %v1280 = vunpack.c.l.b16 %v988
      %v1281 = vunpack.c.l.b16 %v989
      %v1282 = vunpack.c.l.b16 %v990
      %v1283 = vunpack.c.l.b16 %v991
      %v1284 = vunpack.c.l.b16 %v992
      %v1285 = vunpack.c.l.b16 %v993
      %v1286 = vunpack.c.l.b16 %v994
      %v1287 = vunpack.c.l.b16 %v995
      %v1288 = vunpack.c.l.b16 %v996
      %v1289 = vunpack.c.l.b16 %v997
      %v1290 = vunpack.c.l.b16 %v998
      %v1291 = vunpack.c.l.b16 %v999
      %v1292 = vunpack.c.l.b16 %v1000
      %v1293 = vunpack.c.l.b16 %v1001
      %v1294 = vunpack.c.l.b16 %v1002
      %v1295 = vunpack.c.l.b16 %v1003
      %v1296 = vunpack.c.l.b16 %v1004
      %v1297 = vunpack.c.l.b16 %v1005
      %v1298 = vunpack.c.l.b16 %v1006
      %v1299 = vunpack.c.l.b16 %v1007
      %v1300 = vunpack.c.l.b16 %v1008
      %v1301 = vunpack.c.l.b16 %v1009
      %v1302 = vunpack.c.l.b16 %v1010
      %v1303 = vunpack.c.l.b16 %v1011
      %v1304 = vunpack.c.l.b16 %v1012
      %v1305 = vunpack.c.l.b16 %v1013
      %v1306 = vunpack.c.l.b16 %v1014
      %v1307 = vunpack.c.l.b16 %v1015
      %v1308 = vunpack.c.l.b16 %v1016
      %v1309 = vunpack.c.l.b16 %v1017
      %v1310 = vunpack.c.l.b16 %v1018
      %v1311 = vunpack.c.l.b16 %v1019
      %v1312 = vunpack.c.l.b16 %v1020
      %v1313 = vunpack.c.l.b16 %v1021
      %v1314 = vunpack.c.l.b16 %v1022
      %v1315 = vunpack.c.l.b16 %v1023
      %v1316 = vunpack.c.l.b16 %v1024
      %v1317 = vunpack.c.l.b16 %v1025
      %v1318 = vunpack.c.l.b16 %v1026
      %v1319 = vunpack.c.l.b16 %v1027
      %v1320 = vunpack.c.l.b16 %v1028
      %v1321 = vunpack.c.l.b16 %v1029
      %v1322 = vunpack.c.l.b16 %v1030
      %v1323 = vunpack.c.l.b16 %v1031
      %v1324 = vunpack.c.l.b16 %v1032
      %v1325 = vunpack.c.l.b16 %v1033
      %v1326 = vunpack.c.l.b16 %v1034
      %v1327 = vunpack.c.l.b16 %v1035
      %v1328 = vunpack.c.l.b16 %v1036
      %v1329 = vunpack.c.l.b16 %v1037
      %v1330 = vunpack.c.l.b16 %v1038
      %v1331 = vunpack.c.l.b16 %v1039
      %v1332 = vunpack.c.l.b16 %v1040
      %v1333 = vunpack.c.l.b16 %v1041
      %v1334 = vunpack.c.l.b16 %v1042
      %v1335 = vunpack.c.l.b16 %v1043
      %v1336 = vunpack.c.l.b16 %v1044
      %v1337 = vunpack.c.l.b16 %v1045
      %v1338 = vunpack.c.l.b16 %v1046
      %v1339 = vunpack.c.l.b16 %v1047
      %v1340 = vunpack.c.l.b16 %v1048
      %v1341 = vunpack.c.l.b16 %v1049
      %v1342 = vunpack.c.l.b16 %v1050
      %v1343 = vunpack.c.l.b16 %v1051
      %v1344 = vunpack.c.l.b16 %v1052
      %v1345 = vunpack.c.l.b16 %v1053
      %v1346 = vunpack.c.l.b16 %v1054
      %v1347 = vunpack.c.l.b16 %v1055
      %v1348 = vunpack.c.l.b16 %v1056
      %v1349 = vunpack.c.l.b16 %v1057
      %v1350 = vunpack.c.l.b16 %v1058
      %v1351 = vunpack.c.l.b16 %v1059
      %v1352 = vunpack.c.l.b16 %v1060
      %v1353 = vunpack.c.l.b16 %v1061
      %v1354 = vunpack.c.l.b16 %v1062
      %v1355 = vunpack.c.l.b16 %v1063
      %v1356 = vunpack.c.l.b16 %v1064
      %v1357 = vunpack.c.l.b16 %v1065
      %v1358 = vunpack.c.l.b16 %v1066
      %v1359 = vunpack.c.l.b16 %v1067
      %v1360 = vunpack.c.l.b16 %v1068
      %v1361 = vunpack.c.l.b16 %v1069
      %v1362 = vunpack.c.l.b16 %v1070
      %v1363 = vunpack.c.l.b16 %v1071
      %v1364 = vunpack.c.l.b16 %v1072
      %v1365 = vunpack.c.l.b16 %v1073
      %v1366 = vunpack.c.l.b16 %v1074
      %v1367 = vunpack.c.l.b16 %v1075
      %v1368 = vunpack.c.l.b16 %v1076
      %v1369 = vunpack.c.l.b16 %v1077
      %v1370 = vunpack.c.l.b16 %v1078
      %v1371 = vunpack.c.l.b16 %v1079
      %v1372 = vunpack.c.l.b16 %v1080
      %v1373 = vunpack.c.l.b16 %v1081
      %v1374 = vunpack.c.l.b16 %v1082
      %v1375 = vunpack.c.l.b16 %v1083
      %v1376 = vunpack.c.l.b16 %v1084
      %v1377 = vunpack.c.l.b16 %v1085
      %v1378 = vunpack.c.l.b16 %v1086
      %v1379 = vunpack.c.l.b16 %v1087
      %v1380 = vunpack.c.l.b16 %v1088
      %v1381 = vunpack.c.l.b16 %v1089
      %v1382 = vunpack.c.l.b16 %v1090
      %v1383 = vunpack.c.l.b16 %v1091
      %v1384 = vunpack.c.l.b16 %v1092
      %v1385 = vunpack.c.l.b16 %v1093
      %v1386 = vunpack.c.l.b16 %v1094
      %v1387 = vunpack.c.l.b16 %v1095
      %v1388 = vunpack.c.l.b16 %v1096
      %v1389 = vunpack.c.l.b16 %v1097
      %v1390 = vunpack.c.l.b16 %v1098
      %v1391 = vunpack.c.l.b16 %v1099
      %v1392 = vunpack.c.l.b16 %v1100
      %v1393 = vpack.c.b16 %v1250, %v1249
      %v1394 = vpack.c.b16 %v1252, %v1251
      %v1395 = vpack.c.b16 %v1254, %v1253
      %v1396 = vpack.c.b16 %v1256, %v1255
      %v1397 = vpack.c.b16 %v1258, %v1257
      %v1398 = vpack.c.b16 %v1260, %v1259
      %v1399 = vpack.c.b16 %v1262, %v1261
      %v1400 = vpack.c.b16 %v1264, %v1263
      %v1401 = vpack.c.b16 %v1266, %v1265
      %v1402 = vpack.c.b16 %v1268, %v1267
      %v1403 = vpack.c.b16 %v1270, %v1269
      %v1404 = vpack.c.b16 %v1272, %v1271
      %v1405 = vpack.c.b16 %v1274, %v1273
      %v1406 = vpack.c.b16 %v1276, %v1275
      %v1407 = vpack.c.b16 %v1278, %v1277
      %v1408 = vpack.c.b16 %v1280, %v1279
      %v1409 = vpack.c.b16 %v1282, %v1281
      %v1410 = vpack.c.b16 %v1284, %v1283
      %v1411 = vpack.c.b16 %v1286, %v1285
      %v1412 = vpack.c.b16 %v1288, %v1287
      %v1413 = vpack.c.b16 %v1290, %v1289
      %v1414 = vpack.c.b16 %v1292, %v1291
      %v1415 = vpack.c.b16 %v1294, %v1293
      %v1416 = vpack.c.b16 %v1296, %v1295
      %v1417 = vpack.c.b16 %v1298, %v1297
      %v1418 = vpack.c.b16 %v1300, %v1299
      %v1419 = vpack.c.b16 %v1302, %v1301
      %v1420 = vpack.c.b16 %v1304, %v1303
      %v1421 = vpack.c.b16 %v1306, %v1305
      %v1422 = vpack.c.b16 %v1308, %v1307
      %v1423 = vpack.c.b16 %v1310, %v1309
      %v1424 = vpack.c.b16 %v1312, %v1311
      %v1425 = vpack.c.b16 %v1314, %v1313
      %v1426 = vpack.c.b16 %v1316, %v1315
      %v1427 = vpack.c.b16 %v1318, %v1317
      %v1428 = vpack.c.b16 %v1320, %v1319
      %v1429 = vpack.c.b16 %v1322, %v1321
      %v1430 = vpack.c.b16 %v1324, %v1323
      %v1431 = vpack.c.b16 %v1326, %v1325
      %v1432 = vpack.c.b16 %v1328, %v1327
      %v1433 = vpack.c.b16 %v1330, %v1329
      %v1434 = vpack.c.b16 %v1332, %v1331
      %v1435 = vpack.c.b16 %v1334, %v1333
      %v1436 = vpack.c.b16 %v1336, %v1335
      %v1437 = vpack.c.b16 %v1338, %v1337
      %v1438 = vpack.c.b16 %v1340, %v1339
      %v1439 = vpack.c.b16 %v1342, %v1341
      %v1440 = vpack.c.b16 %v1344, %v1343
      %v1441 = vpack.c.b16 %v1346, %v1345
      %v1442 = vpack.c.b16 %v1348, %v1347
      %v1443 = vpack.c.b16 %v1350, %v1349
      %v1444 = vpack.c.b16 %v1352, %v1351
      %v1445 = vpack.c.b16 %v1354, %v1353
      %v1446 = vpack.c.b16 %v1356, %v1355
      %v1447 = vpack.c.b16 %v1358, %v1357
      %v1448 = vpack.c.b16 %v1360, %v1359
      %v1449 = vpack.c.b16 %v1362, %v1361
      %v1450 = vpack.c.b16 %v1364, %v1363
      %v1451 = vpack.c.b16 %v1366, %v1365
      %v1452 = vpack.c.b16 %v1368, %v1367
      %v1453 = vpack.c.b16 %v1370, %v1369
      %v1454 = vpack.c.b16 %v1372, %v1371
      %v1455 = vpack.c.b16 %v1374, %v1373
      %v1456 = vpack.c.b16 %v1376, %v1375
      %v1457 = vpack.c.b16 %v1378, %v1377
      %v1458 = vpack.c.b16 %v1380, %v1379
      %v1459 = vpack.c.b16 %v1382, %v1381
      %v1460 = vpack.c.b16 %v1384, %v1383
      %v1461 = vpack.c.b16 %v1386, %v1385
      %v1462 = vpack.c.b16 %v1388, %v1387
      %v1463 = vpack.c.b16 %v1390, %v1389
      %v1464 = vpack.c.b16 %v1392, %v1391
      %1537 = vmatpush.bf16.msra.mxu0 %v1400
      %1538 = vmatpush.bf16.msra.mxu0 %v1399
      %1539 = vmatpush.bf16.msra.mxu0 %v1398
      %1540 = vmatpush.bf16.msra.mxu0 %v1397
      %1541 = vmatpush.bf16.msra.mxu0 %v1396
      %1542 = vmatpush.bf16.msra.mxu0 %v1395
      %1543 = vmatpush.bf16.msra.mxu0 %v1394
      %1544 = vmatpush.bf16.msra.mxu0 %v1393
      %1545 = vmatmul.bf16.gmra.mxu0 %v507
      %v1546 = vpop.f32.mrf.mxu0
      %v1547 = vadd.f32 %v1103, %v1546
      %v1548 = vpop.f32.mrf.mxu0
      %v1549 = vadd.f32 %v1103, %v1548
      %1550 = vmatmul.bf16.gmra.mxu0 %v508
      %v1551 = vpop.f32.mrf.mxu0
      %v1552 = vadd.f32 %v1103, %v1551
      %v1553 = vpop.f32.mrf.mxu0
      %v1554 = vadd.f32 %v1103, %v1553
      %1555 = vmatmul.bf16.gmra.mxu0 %v509
      %v1556 = vpop.f32.mrf.mxu0
      %v1557 = vadd.f32 %v1103, %v1556
      %v1558 = vpop.f32.mrf.mxu0
      %v1559 = vadd.f32 %v1103, %v1558
      %1560 = vmatmul.bf16.gmra.mxu0 %v510
      %v1561 = vpop.f32.mrf.mxu0
      %v1562 = vadd.f32 %v1103, %v1561
      %v1563 = vpop.f32.mrf.mxu0
      %v1564 = vadd.f32 %v1103, %v1563
      %1565 = vmatmul.bf16.gmra.mxu0 %v511
      %v1566 = vpop.f32.mrf.mxu0
      %v1567 = vadd.f32 %v1103, %v1566
      %v1568 = vpop.f32.mrf.mxu0
      %v1569 = vadd.f32 %v1103, %v1568
      %1570 = vmatmul.bf16.gmra.mxu0 %v512
      %v1571 = vpop.f32.mrf.mxu0
      %v1572 = vadd.f32 %v1103, %v1571
      %v1573 = vpop.f32.mrf.mxu0
      %v1574 = vadd.f32 %v1103, %v1573
      %1575 = vmatmul.bf16.gmra.mxu0 %v513
      %v1576 = vpop.f32.mrf.mxu0
      %v1577 = vadd.f32 %v1103, %v1576
      %v1578 = vpop.f32.mrf.mxu0
      %v1579 = vadd.f32 %v1103, %v1578
      %1580 = vmatmul.bf16.gmra.mxu0 %v514
      %v1581 = vpop.f32.mrf.mxu0
      %v1582 = vadd.f32 %v1103, %v1581
      %v1583 = vpop.f32.mrf.mxu0
      %v1584 = vadd.f32 %v1103, %v1583
      %1585 = vmatmul.bf16.gmra.mxu0 %v515
      %v1586 = vpop.f32.mrf.mxu0
      %v1587 = vadd.f32 %v1103, %v1586
      %v1588 = vpop.f32.mrf.mxu0
      %v1589 = vadd.f32 %v1103, %v1588
      %1590 = vmatmul.bf16.gmra.mxu0 %v516
      %v1591 = vpop.f32.mrf.mxu0
      %v1592 = vadd.f32 %v1103, %v1591
      %v1593 = vpop.f32.mrf.mxu0
      %v1594 = vadd.f32 %v1103, %v1593
      %1595 = vmatmul.bf16.gmra.mxu0 %v517
      %v1596 = vpop.f32.mrf.mxu0
      %v1597 = vadd.f32 %v1103, %v1596
      %v1598 = vpop.f32.mrf.mxu0
      %v1599 = vadd.f32 %v1103, %v1598
      %1600 = vmatmul.bf16.gmra.mxu0 %v518
      %v1601 = vpop.f32.mrf.mxu0
      %v1602 = vadd.f32 %v1103, %v1601
      %v1603 = vpop.f32.mrf.mxu0
      %v1604 = vadd.f32 %v1103, %v1603
      %1605 = vmatmul.bf16.gmra.mxu0 %v519
      %v1606 = vpop.f32.mrf.mxu0
      %v1607 = vadd.f32 %v1103, %v1606
      %v1608 = vpop.f32.mrf.mxu0
      %v1609 = vadd.f32 %v1103, %v1608
      %1610 = vmatmul.bf16.gmra.mxu0 %v520
      %v1611 = vpop.f32.mrf.mxu0
      %v1612 = vadd.f32 %v1103, %v1611
      %v1613 = vpop.f32.mrf.mxu0
      %v1614 = vadd.f32 %v1103, %v1613
      %1615 = vmatmul.bf16.gmra.mxu0 %v521
      %v1616 = vpop.f32.mrf.mxu0
      %v1617 = vadd.f32 %v1103, %v1616
      %v1618 = vpop.f32.mrf.mxu0
      %v1619 = vadd.f32 %v1103, %v1618
      %1620 = vmatmul.bf16.gmra.mxu0 %v522
      %v1621 = vpop.f32.mrf.mxu0
      %v1622 = vadd.f32 %v1103, %v1621
      %v1623 = vpop.f32.mrf.mxu0
      %v1624 = vadd.f32 %v1103, %v1623
      %1625 = vmatmul.bf16.gmra.mxu0 %v523
      %v1626 = vpop.f32.mrf.mxu0
      %v1627 = vadd.f32 %v1103, %v1626
      %v1628 = vpop.f32.mrf.mxu0
      %v1629 = vadd.f32 %v1103, %v1628
      %1630 = vmatmul.bf16.gmra.mxu0 %v524
      %v1631 = vpop.f32.mrf.mxu0
      %v1632 = vadd.f32 %v1103, %v1631
      %v1633 = vpop.f32.mrf.mxu0
      %v1634 = vadd.f32 %v1103, %v1633
      %1635 = vdwg.mxu0
      %1636 = vmatpush.bf16.msra.mxu0 %v1408
      %1637 = vmatpush.bf16.msra.mxu0 %v1407
      %1638 = vmatpush.bf16.msra.mxu0 %v1406
      %1639 = vmatpush.bf16.msra.mxu0 %v1405
      %1640 = vmatpush.bf16.msra.mxu0 %v1404
      %1641 = vmatpush.bf16.msra.mxu0 %v1403
      %1642 = vmatpush.bf16.msra.mxu0 %v1402
      %1643 = vmatpush.bf16.msra.mxu0 %v1401
      %1644 = vmatmul.bf16.gmra.mxu0 %v609
      %v1645 = vpop.f32.mrf.mxu0
      %v1646 = vadd.f32 %v1547, %v1645
      %v1647 = vpop.f32.mrf.mxu0
      %v1648 = vadd.f32 %v1549, %v1647
      %1649 = vmatmul.bf16.gmra.mxu0 %v621
      %v1650 = vpop.f32.mrf.mxu0
      %v1651 = vadd.f32 %v1552, %v1650
      %v1652 = vpop.f32.mrf.mxu0
      %v1653 = vadd.f32 %v1554, %v1652
      %1654 = vmatmul.bf16.gmra.mxu0 %v633
      %v1655 = vpop.f32.mrf.mxu0
      %v1656 = vadd.f32 %v1557, %v1655
      %v1657 = vpop.f32.mrf.mxu0
      %v1658 = vadd.f32 %v1559, %v1657
      %1659 = vmatmul.bf16.gmra.mxu0 %v645
      %v1660 = vpop.f32.mrf.mxu0
      %v1661 = vadd.f32 %v1562, %v1660
      %v1662 = vpop.f32.mrf.mxu0
      %v1663 = vadd.f32 %v1564, %v1662
      %1664 = vmatmul.bf16.gmra.mxu0 %v657
      %v1665 = vpop.f32.mrf.mxu0
      %v1666 = vadd.f32 %v1567, %v1665
      %v1667 = vpop.f32.mrf.mxu0
      %v1668 = vadd.f32 %v1569, %v1667
      %1669 = vmatmul.bf16.gmra.mxu0 %v669
      %v1670 = vpop.f32.mrf.mxu0
      %v1671 = vadd.f32 %v1572, %v1670
      %v1672 = vpop.f32.mrf.mxu0
      %v1673 = vadd.f32 %v1574, %v1672
      %1674 = vmatmul.bf16.gmra.mxu0 %v681
      %v1675 = vpop.f32.mrf.mxu0
      %v1676 = vadd.f32 %v1577, %v1675
      %v1677 = vpop.f32.mrf.mxu0
      %v1678 = vadd.f32 %v1579, %v1677
      %1679 = vmatmul.bf16.gmra.mxu0 %v693
      %v1680 = vpop.f32.mrf.mxu0
      %v1681 = vadd.f32 %v1582, %v1680
      %v1682 = vpop.f32.mrf.mxu0
      %v1683 = vadd.f32 %v1584, %v1682
      %1684 = vmatmul.bf16.gmra.mxu0 %v705
      %v1685 = vpop.f32.mrf.mxu0
      %v1686 = vadd.f32 %v1587, %v1685
      %v1687 = vpop.f32.mrf.mxu0
      %v1688 = vadd.f32 %v1589, %v1687
      %1689 = vmatmul.bf16.gmra.mxu0 %v717
      %v1690 = vpop.f32.mrf.mxu0
      %v1691 = vadd.f32 %v1592, %v1690
      %v1692 = vpop.f32.mrf.mxu0
      %v1693 = vadd.f32 %v1594, %v1692
      %1694 = vmatmul.bf16.gmra.mxu0 %v729
      %v1695 = vpop.f32.mrf.mxu0
      %v1696 = vadd.f32 %v1597, %v1695
      %v1697 = vpop.f32.mrf.mxu0
      %v1698 = vadd.f32 %v1599, %v1697
      %1699 = vmatmul.bf16.gmra.mxu0 %v741
      %v1700 = vpop.f32.mrf.mxu0
      %v1701 = vadd.f32 %v1602, %v1700
      %v1702 = vpop.f32.mrf.mxu0
      %v1703 = vadd.f32 %v1604, %v1702
      %1704 = vmatmul.bf16.gmra.mxu0 %v753
      %v1705 = vpop.f32.mrf.mxu0
      %v1706 = vadd.f32 %v1607, %v1705
      %v1707 = vpop.f32.mrf.mxu0
      %v1708 = vadd.f32 %v1609, %v1707
      %1709 = vmatmul.bf16.gmra.mxu0 %v765
      %v1710 = vpop.f32.mrf.mxu0
      %v1711 = vadd.f32 %v1612, %v1710
      %v1712 = vpop.f32.mrf.mxu0
      %v1713 = vadd.f32 %v1614, %v1712
      %1714 = vmatmul.bf16.gmra.mxu0 %v777
      %v1715 = vpop.f32.mrf.mxu0
      %v1716 = vadd.f32 %v1617, %v1715
      %v1717 = vpop.f32.mrf.mxu0
      %v1718 = vadd.f32 %v1619, %v1717
      %1719 = vmatmul.bf16.gmra.mxu0 %v789
      %v1720 = vpop.f32.mrf.mxu0
      %v1721 = vadd.f32 %v1622, %v1720
      %v1722 = vpop.f32.mrf.mxu0
      %v1723 = vadd.f32 %v1624, %v1722
      %1724 = vmatmul.bf16.gmra.mxu0 %v801
      %v1725 = vpop.f32.mrf.mxu0
      %v1726 = vadd.f32 %v1627, %v1725
      %v1727 = vpop.f32.mrf.mxu0
      %v1728 = vadd.f32 %v1629, %v1727
      %1729 = vmatmul.bf16.gmra.mxu0 %v813
      %v1730 = vpop.f32.mrf.mxu0
      %v1731 = vadd.f32 %v1632, %v1730
      %v1732 = vpop.f32.mrf.mxu0
      %v1733 = vadd.f32 %v1634, %v1732
      %1734 = vdwg.mxu0
      %1735 = vmatpush.bf16.msra.mxu0 %v1416
      %1736 = vmatpush.bf16.msra.mxu0 %v1415
      %1737 = vmatpush.bf16.msra.mxu0 %v1414
      %1738 = vmatpush.bf16.msra.mxu0 %v1413
      %1739 = vmatpush.bf16.msra.mxu0 %v1412
      %1740 = vmatpush.bf16.msra.mxu0 %v1411
      %1741 = vmatpush.bf16.msra.mxu0 %v1410
      %1742 = vmatpush.bf16.msra.mxu0 %v1409
      %1743 = vmatmul.bf16.gmra.mxu0 %v835
      %v1744 = vpop.f32.mrf.mxu0
      %v1745 = vadd.f32 %v1646, %v1744
      %v1746 = vpop.f32.mrf.mxu0
      %v1747 = vadd.f32 %v1648, %v1746
      %1748 = vmatmul.bf16.gmra.mxu0 %v838
      %v1749 = vpop.f32.mrf.mxu0
      %v1750 = vadd.f32 %v1651, %v1749
      %v1751 = vpop.f32.mrf.mxu0
      %v1752 = vadd.f32 %v1653, %v1751
      %1753 = vmatmul.bf16.gmra.mxu0 %v841
      %v1754 = vpop.f32.mrf.mxu0
      %v1755 = vadd.f32 %v1656, %v1754
      %v1756 = vpop.f32.mrf.mxu0
      %v1757 = vadd.f32 %v1658, %v1756
      %1758 = vmatmul.bf16.gmra.mxu0 %v844
      %v1759 = vpop.f32.mrf.mxu0
      %v1760 = vadd.f32 %v1661, %v1759
      %v1761 = vpop.f32.mrf.mxu0
      %v1762 = vadd.f32 %v1663, %v1761
      %1763 = vmatmul.bf16.gmra.mxu0 %v847
      %v1764 = vpop.f32.mrf.mxu0
      %v1765 = vadd.f32 %v1666, %v1764
      %v1766 = vpop.f32.mrf.mxu0
      %v1767 = vadd.f32 %v1668, %v1766
      %1768 = vmatmul.bf16.gmra.mxu0 %v850
      %v1769 = vpop.f32.mrf.mxu0
      %v1770 = vadd.f32 %v1671, %v1769
      %v1771 = vpop.f32.mrf.mxu0
      %v1772 = vadd.f32 %v1673, %v1771
      %1773 = vmatmul.bf16.gmra.mxu0 %v853
      %v1774 = vpop.f32.mrf.mxu0
      %v1775 = vadd.f32 %v1676, %v1774
      %v1776 = vpop.f32.mrf.mxu0
      %v1777 = vadd.f32 %v1678, %v1776
      %1778 = vmatmul.bf16.gmra.mxu0 %v856
      %v1779 = vpop.f32.mrf.mxu0
      %v1780 = vadd.f32 %v1681, %v1779
      %v1781 = vpop.f32.mrf.mxu0
      %v1782 = vadd.f32 %v1683, %v1781
      %1783 = vmatmul.bf16.gmra.mxu0 %v859
      %v1784 = vpop.f32.mrf.mxu0
      %v1785 = vadd.f32 %v1686, %v1784
      %v1786 = vpop.f32.mrf.mxu0
      %v1787 = vadd.f32 %v1688, %v1786
      %1788 = vmatmul.bf16.gmra.mxu0 %v862
      %v1789 = vpop.f32.mrf.mxu0
      %v1790 = vadd.f32 %v1691, %v1789
      %v1791 = vpop.f32.mrf.mxu0
      %v1792 = vadd.f32 %v1693, %v1791
      %1793 = vmatmul.bf16.gmra.mxu0 %v865
      %v1794 = vpop.f32.mrf.mxu0
      %v1795 = vadd.f32 %v1696, %v1794
      %v1796 = vpop.f32.mrf.mxu0
      %v1797 = vadd.f32 %v1698, %v1796
      %1798 = vmatmul.bf16.gmra.mxu0 %v868
      %v1799 = vpop.f32.mrf.mxu0
      %v1800 = vadd.f32 %v1701, %v1799
      %v1801 = vpop.f32.mrf.mxu0
      %v1802 = vadd.f32 %v1703, %v1801
      %1803 = vmatmul.bf16.gmra.mxu0 %v871
      %v1804 = vpop.f32.mrf.mxu0
      %v1805 = vadd.f32 %v1706, %v1804
      %v1806 = vpop.f32.mrf.mxu0
      %v1807 = vadd.f32 %v1708, %v1806
      %1808 = vmatmul.bf16.gmra.mxu0 %v874
      %v1809 = vpop.f32.mrf.mxu0
      %v1810 = vadd.f32 %v1711, %v1809
      %v1811 = vpop.f32.mrf.mxu0
      %v1812 = vadd.f32 %v1713, %v1811
      %1813 = vmatmul.bf16.gmra.mxu0 %v877
      %v1814 = vpop.f32.mrf.mxu0
      %v1815 = vadd.f32 %v1716, %v1814
      %v1816 = vpop.f32.mrf.mxu0
      %v1817 = vadd.f32 %v1718, %v1816
      %1818 = vmatmul.bf16.gmra.mxu0 %v880
      %v1819 = vpop.f32.mrf.mxu0
      %v1820 = vadd.f32 %v1721, %v1819
      %v1821 = vpop.f32.mrf.mxu0
      %v1822 = vadd.f32 %v1723, %v1821
      %1823 = vmatmul.bf16.gmra.mxu0 %v883
      %v1824 = vpop.f32.mrf.mxu0
      %v1825 = vadd.f32 %v1726, %v1824
      %v1826 = vpop.f32.mrf.mxu0
      %v1827 = vadd.f32 %v1728, %v1826
      %1828 = vmatmul.bf16.gmra.mxu0 %v886
      %v1829 = vpop.f32.mrf.mxu0
      %v1830 = vadd.f32 %v1731, %v1829
      %v1831 = vpop.f32.mrf.mxu0
      %v1832 = vadd.f32 %v1733, %v1831
      %1833 = vdwg.mxu0
      %1834 = vmatpush.bf16.msra.mxu0 %v1424
      %1835 = vmatpush.bf16.msra.mxu0 %v1423
      %1836 = vmatpush.bf16.msra.mxu0 %v1422
      %1837 = vmatpush.bf16.msra.mxu0 %v1421
      %1838 = vmatpush.bf16.msra.mxu0 %v1420
      %1839 = vmatpush.bf16.msra.mxu0 %v1419
      %1840 = vmatpush.bf16.msra.mxu0 %v1418
      %1841 = vmatpush.bf16.msra.mxu0 %v1417
      %1842 = vmatmul.bf16.gmra.mxu0 %v508
      %v1843 = vpop.f32.mrf.mxu0
      %v1844 = vadd.f32 %v1745, %v1843
      %v1845 = vpop.f32.mrf.mxu0
      %v1846 = vadd.f32 %v1747, %v1845
      %1847 = vmatmul.bf16.gmra.mxu0 %v509
      %v1848 = vpop.f32.mrf.mxu0
      %v1849 = vadd.f32 %v1750, %v1848
      %v1850 = vpop.f32.mrf.mxu0
      %v1851 = vadd.f32 %v1752, %v1850
      %1852 = vmatmul.bf16.gmra.mxu0 %v510
      %v1853 = vpop.f32.mrf.mxu0
      %v1854 = vadd.f32 %v1755, %v1853
      %v1855 = vpop.f32.mrf.mxu0
      %v1856 = vadd.f32 %v1757, %v1855
      %1857 = vmatmul.bf16.gmra.mxu0 %v511
      %v1858 = vpop.f32.mrf.mxu0
      %v1859 = vadd.f32 %v1760, %v1858
      %v1860 = vpop.f32.mrf.mxu0
      %v1861 = vadd.f32 %v1762, %v1860
      %1862 = vmatmul.bf16.gmra.mxu0 %v512
      %v1863 = vpop.f32.mrf.mxu0
      %v1864 = vadd.f32 %v1765, %v1863
      %v1865 = vpop.f32.mrf.mxu0
      %v1866 = vadd.f32 %v1767, %v1865
      %1867 = vmatmul.bf16.gmra.mxu0 %v513
      %v1868 = vpop.f32.mrf.mxu0
      %v1869 = vadd.f32 %v1770, %v1868
      %v1870 = vpop.f32.mrf.mxu0
      %v1871 = vadd.f32 %v1772, %v1870
      %1872 = vmatmul.bf16.gmra.mxu0 %v514
      %v1873 = vpop.f32.mrf.mxu0
      %v1874 = vadd.f32 %v1775, %v1873
      %v1875 = vpop.f32.mrf.mxu0
      %v1876 = vadd.f32 %v1777, %v1875
      %1877 = vmatmul.bf16.gmra.mxu0 %v515
      %v1878 = vpop.f32.mrf.mxu0
      %v1879 = vadd.f32 %v1780, %v1878
      %v1880 = vpop.f32.mrf.mxu0
      %v1881 = vadd.f32 %v1782, %v1880
      %1882 = vmatmul.bf16.gmra.mxu0 %v516
      %v1883 = vpop.f32.mrf.mxu0
      %v1884 = vadd.f32 %v1785, %v1883
      %v1885 = vpop.f32.mrf.mxu0
      %v1886 = vadd.f32 %v1787, %v1885
      %1887 = vmatmul.bf16.gmra.mxu0 %v517
      %v1888 = vpop.f32.mrf.mxu0
      %v1889 = vadd.f32 %v1790, %v1888
      %v1890 = vpop.f32.mrf.mxu0
      %v1891 = vadd.f32 %v1792, %v1890
      %1892 = vmatmul.bf16.gmra.mxu0 %v518
      %v1893 = vpop.f32.mrf.mxu0
      %v1894 = vadd.f32 %v1795, %v1893
      %v1895 = vpop.f32.mrf.mxu0
      %v1896 = vadd.f32 %v1797, %v1895
      %1897 = vmatmul.bf16.gmra.mxu0 %v519
      %v1898 = vpop.f32.mrf.mxu0
      %v1899 = vadd.f32 %v1800, %v1898
      %v1900 = vpop.f32.mrf.mxu0
      %v1901 = vadd.f32 %v1802, %v1900
      %1902 = vmatmul.bf16.gmra.mxu0 %v520
      %v1903 = vpop.f32.mrf.mxu0
      %v1904 = vadd.f32 %v1805, %v1903
      %v1905 = vpop.f32.mrf.mxu0
      %v1906 = vadd.f32 %v1807, %v1905
      %1907 = vmatmul.bf16.gmra.mxu0 %v521
      %v1908 = vpop.f32.mrf.mxu0
      %v1909 = vadd.f32 %v1810, %v1908
      %v1910 = vpop.f32.mrf.mxu0
      %v1911 = vadd.f32 %v1812, %v1910
      %1912 = vmatmul.bf16.gmra.mxu0 %v522
      %v1913 = vpop.f32.mrf.mxu0
      %v1914 = vadd.f32 %v1815, %v1913
      %v1915 = vpop.f32.mrf.mxu0
      %v1916 = vadd.f32 %v1817, %v1915
      %1917 = vmatmul.bf16.gmra.mxu0 %v523
      %v1918 = vpop.f32.mrf.mxu0
      %v1919 = vadd.f32 %v1820, %v1918
      %v1920 = vpop.f32.mrf.mxu0
      %v1921 = vadd.f32 %v1822, %v1920
      %1922 = vmatmul.bf16.gmra.mxu0 %v524
      %v1923 = vpop.f32.mrf.mxu0
      %v1924 = vadd.f32 %v1825, %v1923
      %v1925 = vpop.f32.mrf.mxu0
      %v1926 = vadd.f32 %v1827, %v1925
      %1927 = vmatmul.bf16.gmra.mxu0 %v909
      %v1928 = vpop.f32.mrf.mxu0
      %v1929 = vadd.f32 %v1830, %v1928
      %v1930 = vpop.f32.mrf.mxu0
      %v1931 = vadd.f32 %v1832, %v1930
      %1932 = vdwg.mxu0
      %1933 = vmatpush.bf16.msra.mxu0 %v1432
      %1934 = vmatpush.bf16.msra.mxu0 %v1431
      %1935 = vmatpush.bf16.msra.mxu0 %v1430
      %1936 = vmatpush.bf16.msra.mxu0 %v1429
      %1937 = vmatpush.bf16.msra.mxu0 %v1428
      %1938 = vmatpush.bf16.msra.mxu0 %v1427
      %1939 = vmatpush.bf16.msra.mxu0 %v1426
      %1940 = vmatpush.bf16.msra.mxu0 %v1425
      %1941 = vmatmul.bf16.gmra.mxu0 %v621
      %v1942 = vpop.f32.mrf.mxu0
      %v1943 = vadd.f32 %v1844, %v1942
      %v1944 = vpop.f32.mrf.mxu0
      %v1945 = vadd.f32 %v1846, %v1944
      %1946 = vmatmul.bf16.gmra.mxu0 %v633
      %v1947 = vpop.f32.mrf.mxu0
      %v1948 = vadd.f32 %v1849, %v1947
      %v1949 = vpop.f32.mrf.mxu0
      %v1950 = vadd.f32 %v1851, %v1949
      %1951 = vmatmul.bf16.gmra.mxu0 %v645
      %v1952 = vpop.f32.mrf.mxu0
      %v1953 = vadd.f32 %v1854, %v1952
      %v1954 = vpop.f32.mrf.mxu0
      %v1955 = vadd.f32 %v1856, %v1954
      %1956 = vmatmul.bf16.gmra.mxu0 %v657
      %v1957 = vpop.f32.mrf.mxu0
      %v1958 = vadd.f32 %v1859, %v1957
      %v1959 = vpop.f32.mrf.mxu0
      %v1960 = vadd.f32 %v1861, %v1959
      %1961 = vmatmul.bf16.gmra.mxu0 %v669
      %v1962 = vpop.f32.mrf.mxu0
      %v1963 = vadd.f32 %v1864, %v1962
      %v1964 = vpop.f32.mrf.mxu0
      %v1965 = vadd.f32 %v1866, %v1964
      %1966 = vmatmul.bf16.gmra.mxu0 %v681
      %v1967 = vpop.f32.mrf.mxu0
      %v1968 = vadd.f32 %v1869, %v1967
      %v1969 = vpop.f32.mrf.mxu0
      %v1970 = vadd.f32 %v1871, %v1969
      %1971 = vmatmul.bf16.gmra.mxu0 %v693
      %v1972 = vpop.f32.mrf.mxu0
      %v1973 = vadd.f32 %v1874, %v1972
      %v1974 = vpop.f32.mrf.mxu0
      %v1975 = vadd.f32 %v1876, %v1974
      %1976 = vmatmul.bf16.gmra.mxu0 %v705
      %v1977 = vpop.f32.mrf.mxu0
      %v1978 = vadd.f32 %v1879, %v1977
      %v1979 = vpop.f32.mrf.mxu0
      %v1980 = vadd.f32 %v1881, %v1979
      %1981 = vmatmul.bf16.gmra.mxu0 %v717
      %v1982 = vpop.f32.mrf.mxu0
      %v1983 = vadd.f32 %v1884, %v1982
      %v1984 = vpop.f32.mrf.mxu0
      %v1985 = vadd.f32 %v1886, %v1984
      %1986 = vmatmul.bf16.gmra.mxu0 %v729
      %v1987 = vpop.f32.mrf.mxu0
      %v1988 = vadd.f32 %v1889, %v1987
      %v1989 = vpop.f32.mrf.mxu0
      %v1990 = vadd.f32 %v1891, %v1989
      %1991 = vmatmul.bf16.gmra.mxu0 %v741
      %v1992 = vpop.f32.mrf.mxu0
      %v1993 = vadd.f32 %v1894, %v1992
      %v1994 = vpop.f32.mrf.mxu0
      %v1995 = vadd.f32 %v1896, %v1994
      %1996 = vmatmul.bf16.gmra.mxu0 %v753
      %v1997 = vpop.f32.mrf.mxu0
      %v1998 = vadd.f32 %v1899, %v1997
      %v1999 = vpop.f32.mrf.mxu0
      %v2000 = vadd.f32 %v1901, %v1999
      %2001 = vmatmul.bf16.gmra.mxu0 %v765
      %v2002 = vpop.f32.mrf.mxu0
      %v2003 = vadd.f32 %v1904, %v2002
      %v2004 = vpop.f32.mrf.mxu0
      %v2005 = vadd.f32 %v1906, %v2004
      %2006 = vmatmul.bf16.gmra.mxu0 %v777
      %v2007 = vpop.f32.mrf.mxu0
      %v2008 = vadd.f32 %v1909, %v2007
      %v2009 = vpop.f32.mrf.mxu0
      %v2010 = vadd.f32 %v1911, %v2009
      %2011 = vmatmul.bf16.gmra.mxu0 %v789
      %v2012 = vpop.f32.mrf.mxu0
      %v2013 = vadd.f32 %v1914, %v2012
      %v2014 = vpop.f32.mrf.mxu0
      %v2015 = vadd.f32 %v1916, %v2014
      %2016 = vmatmul.bf16.gmra.mxu0 %v801
      %v2017 = vpop.f32.mrf.mxu0
      %v2018 = vadd.f32 %v1919, %v2017
      %v2019 = vpop.f32.mrf.mxu0
      %v2020 = vadd.f32 %v1921, %v2019
      %2021 = vmatmul.bf16.gmra.mxu0 %v813
      %v2022 = vpop.f32.mrf.mxu0
      %v2023 = vadd.f32 %v1924, %v2022
      %v2024 = vpop.f32.mrf.mxu0
      %v2025 = vadd.f32 %v1926, %v2024
      %2026 = vmatmul.bf16.gmra.mxu0 %v925
      %v2027 = vpop.f32.mrf.mxu0
      %v2028 = vadd.f32 %v1929, %v2027
      %v2029 = vpop.f32.mrf.mxu0
      %v2030 = vadd.f32 %v1931, %v2029
      %2031 = vdwg.mxu0
      %2032 = vmatpush.bf16.msra.mxu0 %v1440
      %2033 = vmatpush.bf16.msra.mxu0 %v1439
      %2034 = vmatpush.bf16.msra.mxu0 %v1438
      %2035 = vmatpush.bf16.msra.mxu0 %v1437
      %2036 = vmatpush.bf16.msra.mxu0 %v1436
      %2037 = vmatpush.bf16.msra.mxu0 %v1435
      %2038 = vmatpush.bf16.msra.mxu0 %v1434
      %2039 = vmatpush.bf16.msra.mxu0 %v1433
      %2040 = vmatmul.bf16.gmra.mxu0 %v838
      %v2041 = vpop.f32.mrf.mxu0
      %v2042 = vadd.f32 %v1943, %v2041
      %v2043 = vpop.f32.mrf.mxu0
      %v2044 = vadd.f32 %v1945, %v2043
      %2045 = vmatmul.bf16.gmra.mxu0 %v841
      %v2046 = vpop.f32.mrf.mxu0
      %v2047 = vadd.f32 %v1948, %v2046
      %v2048 = vpop.f32.mrf.mxu0
      %v2049 = vadd.f32 %v1950, %v2048
      %2050 = vmatmul.bf16.gmra.mxu0 %v844
      %v2051 = vpop.f32.mrf.mxu0
      %v2052 = vadd.f32 %v1953, %v2051
      %v2053 = vpop.f32.mrf.mxu0
      %v2054 = vadd.f32 %v1955, %v2053
      %2055 = vmatmul.bf16.gmra.mxu0 %v847
      %v2056 = vpop.f32.mrf.mxu0
      %v2057 = vadd.f32 %v1958, %v2056
      %v2058 = vpop.f32.mrf.mxu0
      %v2059 = vadd.f32 %v1960, %v2058
      %2060 = vmatmul.bf16.gmra.mxu0 %v850
      %v2061 = vpop.f32.mrf.mxu0
      %v2062 = vadd.f32 %v1963, %v2061
      %v2063 = vpop.f32.mrf.mxu0
      %v2064 = vadd.f32 %v1965, %v2063
      %2065 = vmatmul.bf16.gmra.mxu0 %v853
      %v2066 = vpop.f32.mrf.mxu0
      %v2067 = vadd.f32 %v1968, %v2066
      %v2068 = vpop.f32.mrf.mxu0
      %v2069 = vadd.f32 %v1970, %v2068
      %2070 = vmatmul.bf16.gmra.mxu0 %v856
      %v2071 = vpop.f32.mrf.mxu0
      %v2072 = vadd.f32 %v1973, %v2071
      %v2073 = vpop.f32.mrf.mxu0
      %v2074 = vadd.f32 %v1975, %v2073
      %2075 = vmatmul.bf16.gmra.mxu0 %v859
      %v2076 = vpop.f32.mrf.mxu0
      %v2077 = vadd.f32 %v1978, %v2076
      %v2078 = vpop.f32.mrf.mxu0
      %v2079 = vadd.f32 %v1980, %v2078
      %2080 = vmatmul.bf16.gmra.mxu0 %v862
      %v2081 = vpop.f32.mrf.mxu0
      %v2082 = vadd.f32 %v1983, %v2081
      %v2083 = vpop.f32.mrf.mxu0
      %v2084 = vadd.f32 %v1985, %v2083
      %2085 = vmatmul.bf16.gmra.mxu0 %v865
      %v2086 = vpop.f32.mrf.mxu0
      %v2087 = vadd.f32 %v1988, %v2086
      %v2088 = vpop.f32.mrf.mxu0
      %v2089 = vadd.f32 %v1990, %v2088
      %2090 = vmatmul.bf16.gmra.mxu0 %v868
      %v2091 = vpop.f32.mrf.mxu0
      %v2092 = vadd.f32 %v1993, %v2091
      %v2093 = vpop.f32.mrf.mxu0
      %v2094 = vadd.f32 %v1995, %v2093
      %2095 = vmatmul.bf16.gmra.mxu0 %v871
      %v2096 = vpop.f32.mrf.mxu0
      %v2097 = vadd.f32 %v1998, %v2096
      %v2098 = vpop.f32.mrf.mxu0
      %v2099 = vadd.f32 %v2000, %v2098
      %2100 = vmatmul.bf16.gmra.mxu0 %v874
      %v2101 = vpop.f32.mrf.mxu0
      %v2102 = vadd.f32 %v2003, %v2101
      %v2103 = vpop.f32.mrf.mxu0
      %v2104 = vadd.f32 %v2005, %v2103
      %2105 = vmatmul.bf16.gmra.mxu0 %v877
      %v2106 = vpop.f32.mrf.mxu0
      %v2107 = vadd.f32 %v2008, %v2106
      %v2108 = vpop.f32.mrf.mxu0
      %v2109 = vadd.f32 %v2010, %v2108
      %2110 = vmatmul.bf16.gmra.mxu0 %v880
      %v2111 = vpop.f32.mrf.mxu0
      %v2112 = vadd.f32 %v2013, %v2111
      %v2113 = vpop.f32.mrf.mxu0
      %v2114 = vadd.f32 %v2015, %v2113
      %2115 = vmatmul.bf16.gmra.mxu0 %v883
      %v2116 = vpop.f32.mrf.mxu0
      %v2117 = vadd.f32 %v2018, %v2116
      %v2118 = vpop.f32.mrf.mxu0
      %v2119 = vadd.f32 %v2020, %v2118
      %2120 = vmatmul.bf16.gmra.mxu0 %v886
      %v2121 = vpop.f32.mrf.mxu0
      %v2122 = vadd.f32 %v2023, %v2121
      %v2123 = vpop.f32.mrf.mxu0
      %v2124 = vadd.f32 %v2025, %v2123
      %2125 = vmatmul.bf16.gmra.mxu0 %v929
      %v2126 = vpop.f32.mrf.mxu0
      %v2127 = vadd.f32 %v2028, %v2126
      %v2128 = vpop.f32.mrf.mxu0
      %v2129 = vadd.f32 %v2030, %v2128
      %2130 = vdwg.mxu0
      %2131 = vmatpush.bf16.msra.mxu0 %v1448
      %2132 = vmatpush.bf16.msra.mxu0 %v1447
      %2133 = vmatpush.bf16.msra.mxu0 %v1446
      %2134 = vmatpush.bf16.msra.mxu0 %v1445
      %2135 = vmatpush.bf16.msra.mxu0 %v1444
      %2136 = vmatpush.bf16.msra.mxu0 %v1443
      %2137 = vmatpush.bf16.msra.mxu0 %v1442
      %2138 = vmatpush.bf16.msra.mxu0 %v1441
      %2139 = vmatmul.bf16.gmra.mxu0 %v509
      %v2140 = vpop.f32.mrf.mxu0
      %v2141 = vadd.f32 %v2042, %v2140
      %v2142 = vpop.f32.mrf.mxu0
      %v2143 = vadd.f32 %v2044, %v2142
      %2144 = vmatmul.bf16.gmra.mxu0 %v510
      %v2145 = vpop.f32.mrf.mxu0
      %v2146 = vadd.f32 %v2047, %v2145
      %v2147 = vpop.f32.mrf.mxu0
      %v2148 = vadd.f32 %v2049, %v2147
      %2149 = vmatmul.bf16.gmra.mxu0 %v511
      %v2150 = vpop.f32.mrf.mxu0
      %v2151 = vadd.f32 %v2052, %v2150
      %v2152 = vpop.f32.mrf.mxu0
      %v2153 = vadd.f32 %v2054, %v2152
      %2154 = vmatmul.bf16.gmra.mxu0 %v512
      %v2155 = vpop.f32.mrf.mxu0
      %v2156 = vadd.f32 %v2057, %v2155
      %v2157 = vpop.f32.mrf.mxu0
      %v2158 = vadd.f32 %v2059, %v2157
      %2159 = vmatmul.bf16.gmra.mxu0 %v513
      %v2160 = vpop.f32.mrf.mxu0
      %v2161 = vadd.f32 %v2062, %v2160
      %v2162 = vpop.f32.mrf.mxu0
      %v2163 = vadd.f32 %v2064, %v2162
      %2164 = vmatmul.bf16.gmra.mxu0 %v514
      %v2165 = vpop.f32.mrf.mxu0
      %v2166 = vadd.f32 %v2067, %v2165
      %v2167 = vpop.f32.mrf.mxu0
      %v2168 = vadd.f32 %v2069, %v2167
      %2169 = vmatmul.bf16.gmra.mxu0 %v515
      %v2170 = vpop.f32.mrf.mxu0
      %v2171 = vadd.f32 %v2072, %v2170
      %v2172 = vpop.f32.mrf.mxu0
      %v2173 = vadd.f32 %v2074, %v2172
      %2174 = vmatmul.bf16.gmra.mxu0 %v516
      %v2175 = vpop.f32.mrf.mxu0
      %v2176 = vadd.f32 %v2077, %v2175
      %v2177 = vpop.f32.mrf.mxu0
      %v2178 = vadd.f32 %v2079, %v2177
      %2179 = vmatmul.bf16.gmra.mxu0 %v517
      %v2180 = vpop.f32.mrf.mxu0
      %v2181 = vadd.f32 %v2082, %v2180
      %v2182 = vpop.f32.mrf.mxu0
      %v2183 = vadd.f32 %v2084, %v2182
      %2184 = vmatmul.bf16.gmra.mxu0 %v518
      %v2185 = vpop.f32.mrf.mxu0
      %v2186 = vadd.f32 %v2087, %v2185
      %v2187 = vpop.f32.mrf.mxu0
      %v2188 = vadd.f32 %v2089, %v2187
      %2189 = vmatmul.bf16.gmra.mxu0 %v519
      %v2190 = vpop.f32.mrf.mxu0
      %v2191 = vadd.f32 %v2092, %v2190
      %v2192 = vpop.f32.mrf.mxu0
      %v2193 = vadd.f32 %v2094, %v2192
      %2194 = vmatmul.bf16.gmra.mxu0 %v520
      %v2195 = vpop.f32.mrf.mxu0
      %v2196 = vadd.f32 %v2097, %v2195
      %v2197 = vpop.f32.mrf.mxu0
      %v2198 = vadd.f32 %v2099, %v2197
      %2199 = vmatmul.bf16.gmra.mxu0 %v521
      %v2200 = vpop.f32.mrf.mxu0
      %v2201 = vadd.f32 %v2102, %v2200
      %v2202 = vpop.f32.mrf.mxu0
      %v2203 = vadd.f32 %v2104, %v2202
      %2204 = vmatmul.bf16.gmra.mxu0 %v522
      %v2205 = vpop.f32.mrf.mxu0
      %v2206 = vadd.f32 %v2107, %v2205
      %v2207 = vpop.f32.mrf.mxu0
      %v2208 = vadd.f32 %v2109, %v2207
      %2209 = vmatmul.bf16.gmra.mxu0 %v523
      %v2210 = vpop.f32.mrf.mxu0
      %v2211 = vadd.f32 %v2112, %v2210
      %v2212 = vpop.f32.mrf.mxu0
      %v2213 = vadd.f32 %v2114, %v2212
      %2214 = vmatmul.bf16.gmra.mxu0 %v524
      %v2215 = vpop.f32.mrf.mxu0
      %v2216 = vadd.f32 %v2117, %v2215
      %v2217 = vpop.f32.mrf.mxu0
      %v2218 = vadd.f32 %v2119, %v2217
      %2219 = vmatmul.bf16.gmra.mxu0 %v909
      %v2220 = vpop.f32.mrf.mxu0
      %v2221 = vadd.f32 %v2122, %v2220
      %v2222 = vpop.f32.mrf.mxu0
      %v2223 = vadd.f32 %v2124, %v2222
      %2224 = vmatmul.bf16.gmra.mxu0 %v935
      %v2225 = vpop.f32.mrf.mxu0
      %v2226 = vadd.f32 %v2127, %v2225
      %v2227 = vpop.f32.mrf.mxu0
      %v2228 = vadd.f32 %v2129, %v2227
      %2229 = vdwg.mxu0
      %2230 = vmatpush.bf16.msra.mxu0 %v1456
      %2231 = vmatpush.bf16.msra.mxu0 %v1455
      %2232 = vmatpush.bf16.msra.mxu0 %v1454
      %2233 = vmatpush.bf16.msra.mxu0 %v1453
      %2234 = vmatpush.bf16.msra.mxu0 %v1452
      %2235 = vmatpush.bf16.msra.mxu0 %v1451
      %2236 = vmatpush.bf16.msra.mxu0 %v1450
      %2237 = vmatpush.bf16.msra.mxu0 %v1449
      %2238 = vmatmul.bf16.gmra.mxu0 %v633
      %v2239 = vpop.f32.mrf.mxu0
      %v2240 = vadd.f32 %v2141, %v2239
      %v2241 = vpop.f32.mrf.mxu0
      %v2242 = vadd.f32 %v2143, %v2241
      %2243 = vmatmul.bf16.gmra.mxu0 %v645
      %v2244 = vpop.f32.mrf.mxu0
      %v2245 = vadd.f32 %v2146, %v2244
      %v2246 = vpop.f32.mrf.mxu0
      %v2247 = vadd.f32 %v2148, %v2246
      %2248 = vmatmul.bf16.gmra.mxu0 %v657
      %v2249 = vpop.f32.mrf.mxu0
      %v2250 = vadd.f32 %v2151, %v2249
      %v2251 = vpop.f32.mrf.mxu0
      %v2252 = vadd.f32 %v2153, %v2251
      %2253 = vmatmul.bf16.gmra.mxu0 %v669
      %v2254 = vpop.f32.mrf.mxu0
      %v2255 = vadd.f32 %v2156, %v2254
      %v2256 = vpop.f32.mrf.mxu0
      %v2257 = vadd.f32 %v2158, %v2256
      %2258 = vmatmul.bf16.gmra.mxu0 %v681
      %v2259 = vpop.f32.mrf.mxu0
      %v2260 = vadd.f32 %v2161, %v2259
      %v2261 = vpop.f32.mrf.mxu0
      %v2262 = vadd.f32 %v2163, %v2261
      %2263 = vmatmul.bf16.gmra.mxu0 %v693
      %v2264 = vpop.f32.mrf.mxu0
      %v2265 = vadd.f32 %v2166, %v2264
      %v2266 = vpop.f32.mrf.mxu0
      %v2267 = vadd.f32 %v2168, %v2266
      %2268 = vmatmul.bf16.gmra.mxu0 %v705
      %v2269 = vpop.f32.mrf.mxu0
      %v2270 = vadd.f32 %v2171, %v2269
      %v2271 = vpop.f32.mrf.mxu0
      %v2272 = vadd.f32 %v2173, %v2271
      %2273 = vmatmul.bf16.gmra.mxu0 %v717
      %v2274 = vpop.f32.mrf.mxu0
      %v2275 = vadd.f32 %v2176, %v2274
      %v2276 = vpop.f32.mrf.mxu0
      %v2277 = vadd.f32 %v2178, %v2276
      %2278 = vmatmul.bf16.gmra.mxu0 %v729
      %v2279 = vpop.f32.mrf.mxu0
      %v2280 = vadd.f32 %v2181, %v2279
      %v2281 = vpop.f32.mrf.mxu0
      %v2282 = vadd.f32 %v2183, %v2281
      %2283 = vmatmul.bf16.gmra.mxu0 %v741
      %v2284 = vpop.f32.mrf.mxu0
      %v2285 = vadd.f32 %v2186, %v2284
      %v2286 = vpop.f32.mrf.mxu0
      %v2287 = vadd.f32 %v2188, %v2286
      %2288 = vmatmul.bf16.gmra.mxu0 %v753
      %v2289 = vpop.f32.mrf.mxu0
      %v2290 = vadd.f32 %v2191, %v2289
      %v2291 = vpop.f32.mrf.mxu0
      %v2292 = vadd.f32 %v2193, %v2291
      %2293 = vmatmul.bf16.gmra.mxu0 %v765
      %v2294 = vpop.f32.mrf.mxu0
      %v2295 = vadd.f32 %v2196, %v2294
      %v2296 = vpop.f32.mrf.mxu0
      %v2297 = vadd.f32 %v2198, %v2296
      %2298 = vmatmul.bf16.gmra.mxu0 %v777
      %v2299 = vpop.f32.mrf.mxu0
      %v2300 = vadd.f32 %v2201, %v2299
      %v2301 = vpop.f32.mrf.mxu0
      %v2302 = vadd.f32 %v2203, %v2301
      %2303 = vmatmul.bf16.gmra.mxu0 %v789
      %v2304 = vpop.f32.mrf.mxu0
      %v2305 = vadd.f32 %v2206, %v2304
      %v2306 = vpop.f32.mrf.mxu0
      %v2307 = vadd.f32 %v2208, %v2306
      %2308 = vmatmul.bf16.gmra.mxu0 %v801
      %v2309 = vpop.f32.mrf.mxu0
      %v2310 = vadd.f32 %v2211, %v2309
      %v2311 = vpop.f32.mrf.mxu0
      %v2312 = vadd.f32 %v2213, %v2311
      %2313 = vmatmul.bf16.gmra.mxu0 %v813
      %v2314 = vpop.f32.mrf.mxu0
      %v2315 = vadd.f32 %v2216, %v2314
      %v2316 = vpop.f32.mrf.mxu0
      %v2317 = vadd.f32 %v2218, %v2316
      %2318 = vmatmul.bf16.gmra.mxu0 %v925
      %v2319 = vpop.f32.mrf.mxu0
      %v2320 = vadd.f32 %v2221, %v2319
      %v2321 = vpop.f32.mrf.mxu0
      %v2322 = vadd.f32 %v2223, %v2321
      %2323 = vmatmul.bf16.gmra.mxu0 %v951
      %v2324 = vpop.f32.mrf.mxu0
      %v2325 = vadd.f32 %v2226, %v2324
      %v2326 = vpop.f32.mrf.mxu0
      %v2327 = vadd.f32 %v2228, %v2326
      %2328 = vdwg.mxu0
      %2329 = vmatpush.bf16.msra.mxu0 %v1464
      %2330 = vmatpush.bf16.msra.mxu0 %v1463
      %2331 = vmatpush.bf16.msra.mxu0 %v1462
      %2332 = vmatpush.bf16.msra.mxu0 %v1461
      %2333 = vmatpush.bf16.msra.mxu0 %v1460
      %2334 = vmatpush.bf16.msra.mxu0 %v1459
      %2335 = vmatpush.bf16.msra.mxu0 %v1458
      %2336 = vmatpush.bf16.msra.mxu0 %v1457
      %2337 = vmatmul.bf16.gmra.mxu0 %v841
      %v2338 = vpop.f32.mrf.mxu0
      %v2339 = vadd.f32 %v2240, %v2338
      %v2340 = vpop.f32.mrf.mxu0
      %v2341 = vadd.f32 %v2242, %v2340
      %2342 = vmatmul.bf16.gmra.mxu0 %v844
      %v2343 = vpop.f32.mrf.mxu0
      %v2344 = vadd.f32 %v2245, %v2343
      %v2345 = vpop.f32.mrf.mxu0
      %v2346 = vadd.f32 %v2247, %v2345
      %2347 = vmatmul.bf16.gmra.mxu0 %v847
      %v2348 = vpop.f32.mrf.mxu0
      %v2349 = vadd.f32 %v2250, %v2348
      %v2350 = vpop.f32.mrf.mxu0
      %v2351 = vadd.f32 %v2252, %v2350
      %2352 = vmatmul.bf16.gmra.mxu0 %v850
      %v2353 = vpop.f32.mrf.mxu0
      %v2354 = vadd.f32 %v2255, %v2353
      %v2355 = vpop.f32.mrf.mxu0
      %v2356 = vadd.f32 %v2257, %v2355
      %2357 = vmatmul.bf16.gmra.mxu0 %v853
      %v2358 = vpop.f32.mrf.mxu0
      %v2359 = vadd.f32 %v2260, %v2358
      %v2360 = vpop.f32.mrf.mxu0
      %v2361 = vadd.f32 %v2262, %v2360
      %2362 = vmatmul.bf16.gmra.mxu0 %v856
      %v2363 = vpop.f32.mrf.mxu0
      %v2364 = vadd.f32 %v2265, %v2363
      %v2365 = vpop.f32.mrf.mxu0
      %v2366 = vadd.f32 %v2267, %v2365
      %2367 = vmatmul.bf16.gmra.mxu0 %v859
      %v2368 = vpop.f32.mrf.mxu0
      %v2369 = vadd.f32 %v2270, %v2368
      %v2370 = vpop.f32.mrf.mxu0
      %v2371 = vadd.f32 %v2272, %v2370
      %2372 = vmatmul.bf16.gmra.mxu0 %v862
      %v2373 = vpop.f32.mrf.mxu0
      %v2374 = vadd.f32 %v2275, %v2373
      %v2375 = vpop.f32.mrf.mxu0
      %v2376 = vadd.f32 %v2277, %v2375
      %2377 = vmatmul.bf16.gmra.mxu0 %v865
      %v2378 = vpop.f32.mrf.mxu0
      %v2379 = vadd.f32 %v2280, %v2378
      %v2380 = vpop.f32.mrf.mxu0
      %v2381 = vadd.f32 %v2282, %v2380
      %2382 = vmatmul.bf16.gmra.mxu0 %v868
      %v2383 = vpop.f32.mrf.mxu0
      %v2384 = vadd.f32 %v2285, %v2383
      %v2385 = vpop.f32.mrf.mxu0
      %v2386 = vadd.f32 %v2287, %v2385
      %2387 = vmatmul.bf16.gmra.mxu0 %v871
      %v2388 = vpop.f32.mrf.mxu0
      %v2389 = vadd.f32 %v2290, %v2388
      %v2390 = vpop.f32.mrf.mxu0
      %v2391 = vadd.f32 %v2292, %v2390
      %2392 = vmatmul.bf16.gmra.mxu0 %v874
      %v2393 = vpop.f32.mrf.mxu0
      %v2394 = vadd.f32 %v2295, %v2393
      %v2395 = vpop.f32.mrf.mxu0
      %v2396 = vadd.f32 %v2297, %v2395
      %2397 = vmatmul.bf16.gmra.mxu0 %v877
      %v2398 = vpop.f32.mrf.mxu0
      %v2399 = vadd.f32 %v2300, %v2398
      %v2400 = vpop.f32.mrf.mxu0
      %v2401 = vadd.f32 %v2302, %v2400
      %2402 = vmatmul.bf16.gmra.mxu0 %v880
      %v2403 = vpop.f32.mrf.mxu0
      %v2404 = vadd.f32 %v2305, %v2403
      %v2405 = vpop.f32.mrf.mxu0
      %v2406 = vadd.f32 %v2307, %v2405
      %2407 = vmatmul.bf16.gmra.mxu0 %v883
      %v2408 = vpop.f32.mrf.mxu0
      %v2409 = vadd.f32 %v2310, %v2408
      %v2410 = vpop.f32.mrf.mxu0
      %v2411 = vadd.f32 %v2312, %v2410
      %2412 = vmatmul.bf16.gmra.mxu0 %v886
      %v2413 = vpop.f32.mrf.mxu0
      %v2414 = vadd.f32 %v2315, %v2413
      %v2415 = vpop.f32.mrf.mxu0
      %v2416 = vadd.f32 %v2317, %v2415
      %2417 = vmatmul.bf16.gmra.mxu0 %v929
      %v2418 = vpop.f32.mrf.mxu0
      %v2419 = vadd.f32 %v2320, %v2418
      %v2420 = vpop.f32.mrf.mxu0
      %v2421 = vadd.f32 %v2322, %v2420
      %2422 = vmatmul.bf16.gmra.mxu0 %v955
      %v2423 = vpop.f32.mrf.mxu0
      %v2424 = vadd.f32 %v2325, %v2423
      %v2425 = vpop.f32.mrf.mxu0
      %v2426 = vadd.f32 %v2327, %v2425
      %2427 = vdwg.mxu0
      %v2428 = vmax.f32 %v2339, 0.0
      %v2429 = vmax.f32 %v2341, 0.0
      %v2430 = vmax.f32 %v2344, 0.0
      %v2431 = vmax.f32 %v2346, 0.0
      %v2432 = vmax.f32 %v2349, 0.0
      %v2433 = vmax.f32 %v2351, 0.0
      %v2434 = vmax.f32 %v2354, 0.0
      %v2435 = vmax.f32 %v2356, 0.0
      %v2436 = vmax.f32 %v2359, 0.0
      %v2437 = vmax.f32 %v2361, 0.0
      %v2438 = vmax.f32 %v2364, 0.0
      %v2439 = vmax.f32 %v2366, 0.0
      %v2440 = vmax.f32 %v2369, 0.0
      %v2441 = vmax.f32 %v2371, 0.0
      %v2442 = vmax.f32 %v2374, 0.0
      %v2443 = vmax.f32 %v2376, 0.0
      %v2444 = vmax.f32 %v2379, 0.0
      %v2445 = vmax.f32 %v2381, 0.0
      %v2446 = vmax.f32 %v2384, 0.0
      %v2447 = vmax.f32 %v2386, 0.0
      %v2448 = vmax.f32 %v2389, 0.0
      %v2449 = vmax.f32 %v2391, 0.0
      %v2450 = vmax.f32 %v2394, 0.0
      %v2451 = vmax.f32 %v2396, 0.0
      %v2452 = vmax.f32 %v2399, 0.0
      %v2453 = vmax.f32 %v2401, 0.0
      %v2454 = vmax.f32 %v2404, 0.0
      %v2455 = vmax.f32 %v2406, 0.0
      %v2456 = vmax.f32 %v2409, 0.0
      %v2457 = vmax.f32 %v2411, 0.0
      %v2458 = vmax.f32 %v2414, 0.0
      %v2459 = vmax.f32 %v2416, 0.0
      %v2460 = vmax.f32 %v2419, 0.0
      %v2461 = vmax.f32 %v2421, 0.0
      %v2462 = vmax.f32 %v2424, 0.0
      %v2463 = vmax.f32 %v2426, 0.0
      %s2464 = smul.u32 %s22, 16
      %s2465 = ssub.s32 %s2464, 1
      %v2466 = vstv %s2465
      %v2467 = vadd.s32 %v2466, 1
      %v2468 = vadd.s32 %v2466, 2
      %v2469 = vadd.s32 %v2466, 3
      %v2470 = vadd.s32 %v2466, 4
      %v2471 = vadd.s32 %v2466, 5
      %v2472 = vadd.s32 %v2466, 6
      %v2473 = vadd.s32 %v2466, 7
      %v2474 = vadd.s32 %v2466, 8
      %v2475 = vadd.s32 %v2466, 9
      %v2476 = vadd.s32 %v2466, 10
      %v2477 = vadd.s32 %v2466, 11
      %v2478 = vadd.s32 %v2466, 12
      %v2479 = vadd.s32 %v2466, 13
      %v2480 = vadd.s32 %v2466, 14
      %v2481 = vadd.s32 %v2466, 15
      %v2482 = vadd.s32 %v2466, 16
      %v2483 = vadd.s32 %v2466, 17
      %vm2484 = vcmp.ge.s32.totalorder %v2466, 0
      %vm2485 = vcmp.ge.s32.totalorder %v2467, 0
      %vm2486 = vcmp.ge.s32.totalorder %v2468, 0
      %vm2487 = vcmp.ge.s32.totalorder %v2469, 0
      %vm2488 = vcmp.ge.s32.totalorder %v2470, 0
      %vm2489 = vcmp.ge.s32.totalorder %v2471, 0
      %vm2490 = vcmp.ge.s32.totalorder %v2472, 0
      %vm2491 = vcmp.ge.s32.totalorder %v2473, 0
      %vm2492 = vcmp.ge.s32.totalorder %v2474, 0
      %vm2493 = vcmp.ge.s32.totalorder %v2475, 0
      %vm2494 = vcmp.ge.s32.totalorder %v2476, 0
      %vm2495 = vcmp.ge.s32.totalorder %v2477, 0
      %vm2496 = vcmp.ge.s32.totalorder %v2478, 0
      %vm2497 = vcmp.ge.s32.totalorder %v2479, 0
      %vm2498 = vcmp.ge.s32.totalorder %v2480, 0
      %vm2499 = vcmp.ge.s32.totalorder %v2481, 0
      %vm2500 = vcmp.ge.s32.totalorder %v2482, 0
      %vm2501 = vcmp.ge.s32.totalorder %v2483, 0
      %vm2502 = vcmp.lt.s32.totalorder %v2466, 16
      %vm2503 = vcmp.lt.s32.totalorder %v2467, 16
      %vm2504 = vcmp.lt.s32.totalorder %v2468, 16
      %vm2505 = vcmp.lt.s32.totalorder %v2469, 16
      %vm2506 = vcmp.lt.s32.totalorder %v2470, 16
      %vm2507 = vcmp.lt.s32.totalorder %v2471, 16
      %vm2508 = vcmp.lt.s32.totalorder %v2472, 16
      %vm2509 = vcmp.lt.s32.totalorder %v2473, 16
      %vm2510 = vcmp.lt.s32.totalorder %v2474, 16
      %vm2511 = vcmp.lt.s32.totalorder %v2475, 16
      %vm2512 = vcmp.lt.s32.totalorder %v2476, 16
      %vm2513 = vcmp.lt.s32.totalorder %v2477, 16
      %vm2514 = vcmp.lt.s32.totalorder %v2478, 16
      %vm2515 = vcmp.lt.s32.totalorder %v2479, 16
      %vm2516 = vcmp.lt.s32.totalorder %v2480, 16
      %vm2517 = vcmp.lt.s32.totalorder %v2481, 16
      %vm2518 = vcmp.lt.s32.totalorder %v2482, 16
      %vm2519 = vcmp.lt.s32.totalorder %v2483, 16
      %vm2520 = vmand %vm2484, %vm2502
      %vm2521 = vmand %vm2485, %vm2503
      %vm2522 = vmand %vm2486, %vm2504
      %vm2523 = vmand %vm2487, %vm2505
      %vm2524 = vmand %vm2488, %vm2506
      %vm2525 = vmand %vm2489, %vm2507
      %vm2526 = vmand %vm2490, %vm2508
      %vm2527 = vmand %vm2491, %vm2509
      %vm2528 = vmand %vm2492, %vm2510
      %vm2529 = vmand %vm2493, %vm2511
      %vm2530 = vmand %vm2494, %vm2512
      %vm2531 = vmand %vm2495, %vm2513
      %vm2532 = vmand %vm2496, %vm2514
      %vm2533 = vmand %vm2497, %vm2515
      %vm2534 = vmand %vm2498, %vm2516
      %vm2535 = vmand %vm2499, %vm2517
      %vm2536 = vmand %vm2500, %vm2518
      %vm2537 = vmand %vm2501, %vm2519
      %v2538 = vsel %vm2520, 1, 0
      %v2539 = vsel %vm2521, 1, 0
      %v2540 = vsel %vm2522, 1, 0
      %v2541 = vsel %vm2523, 1, 0
      %v2542 = vsel %vm2524, 1, 0
      %v2543 = vsel %vm2525, 1, 0
      %v2544 = vsel %vm2526, 1, 0
      %v2545 = vsel %vm2527, 1, 0
      %v2546 = vsel %vm2528, 1, 0
      %v2547 = vsel %vm2529, 1, 0
      %v2548 = vsel %vm2530, 1, 0
      %v2549 = vsel %vm2531, 1, 0
      %v2550 = vsel %vm2532, 1, 0
      %v2551 = vsel %vm2533, 1, 0
      %v2552 = vsel %vm2534, 1, 0
      %v2553 = vsel %vm2535, 1, 0
      %v2554 = vsel %vm2536, 1, 0
      %v2555 = vsel %vm2537, 1, 0
      %vm2556 = vcmp.eq.s32.totalorder %v2538, 1
      %vm2557 = vcmp.eq.s32.totalorder %v2539, 1
      %vm2558 = vcmp.eq.s32.totalorder %v2540, 1
      %vm2559 = vcmp.eq.s32.totalorder %v2541, 1
      %vm2560 = vcmp.eq.s32.totalorder %v2542, 1
      %vm2561 = vcmp.eq.s32.totalorder %v2543, 1
      %vm2562 = vcmp.eq.s32.totalorder %v2544, 1
      %vm2563 = vcmp.eq.s32.totalorder %v2545, 1
      %vm2564 = vcmp.eq.s32.totalorder %v2546, 1
      %vm2565 = vcmp.eq.s32.totalorder %v2547, 1
      %vm2566 = vcmp.eq.s32.totalorder %v2548, 1
      %vm2567 = vcmp.eq.s32.totalorder %v2549, 1
      %vm2568 = vcmp.eq.s32.totalorder %v2550, 1
      %vm2569 = vcmp.eq.s32.totalorder %v2551, 1
      %vm2570 = vcmp.eq.s32.totalorder %v2552, 1
      %vm2571 = vcmp.eq.s32.totalorder %v2553, 1
      %vm2572 = vcmp.eq.s32.totalorder %v2554, 1
      %vm2573 = vcmp.eq.s32.totalorder %v2555, 1
      %v2574 = vsel %vm2556, %v2428, 0.0
      %v2575 = vsel %vm2556, %v2429, 0.0
      %v2576 = vsel %vm2557, %v2430, 0.0
      %v2577 = vsel %vm2557, %v2431, 0.0
      %v2578 = vsel %vm2558, %v2432, 0.0
      %v2579 = vsel %vm2558, %v2433, 0.0
      %v2580 = vsel %vm2559, %v2434, 0.0
      %v2581 = vsel %vm2559, %v2435, 0.0
      %v2582 = vsel %vm2560, %v2436, 0.0
      %v2583 = vsel %vm2560, %v2437, 0.0
      %v2584 = vsel %vm2561, %v2438, 0.0
      %v2585 = vsel %vm2561, %v2439, 0.0
      %v2586 = vsel %vm2562, %v2440, 0.0
      %v2587 = vsel %vm2562, %v2441, 0.0
      %v2588 = vsel %vm2563, %v2442, 0.0
      %v2589 = vsel %vm2563, %v2443, 0.0
      %v2590 = vsel %vm2564, %v2444, 0.0
      %v2591 = vsel %vm2564, %v2445, 0.0
      %v2592 = vsel %vm2565, %v2446, 0.0
      %v2593 = vsel %vm2565, %v2447, 0.0
      %v2594 = vsel %vm2566, %v2448, 0.0
      %v2595 = vsel %vm2566, %v2449, 0.0
      %v2596 = vsel %vm2567, %v2450, 0.0
      %v2597 = vsel %vm2567, %v2451, 0.0
      %v2598 = vsel %vm2568, %v2452, 0.0
      %v2599 = vsel %vm2568, %v2453, 0.0
      %v2600 = vsel %vm2569, %v2454, 0.0
      %v2601 = vsel %vm2569, %v2455, 0.0
      %v2602 = vsel %vm2570, %v2456, 0.0
      %v2603 = vsel %vm2570, %v2457, 0.0
      %v2604 = vsel %vm2571, %v2458, 0.0
      %v2605 = vsel %vm2571, %v2459, 0.0
      %v2606 = vsel %vm2572, %v2460, 0.0
      %v2607 = vsel %vm2572, %v2461, 0.0
      %v2608 = vsel %vm2573, %v2462, 0.0
      %v2609 = vsel %vm2573, %v2463, 0.0
      %v2610 = vpack.c.bf16 %v2574, %v2574
      %v2611 = vpack.c.bf16 %v2575, %v2575
      %v2612 = vpack.c.bf16 %v2576, %v2576
      %v2613 = vpack.c.bf16 %v2577, %v2577
      %v2614 = vpack.c.bf16 %v2578, %v2578
      %v2615 = vpack.c.bf16 %v2579, %v2579
      %v2616 = vpack.c.bf16 %v2580, %v2580
      %v2617 = vpack.c.bf16 %v2581, %v2581
      %v2618 = vpack.c.bf16 %v2582, %v2582
      %v2619 = vpack.c.bf16 %v2583, %v2583
      %v2620 = vpack.c.bf16 %v2584, %v2584
      %v2621 = vpack.c.bf16 %v2585, %v2585
      %v2622 = vpack.c.bf16 %v2586, %v2586
      %v2623 = vpack.c.bf16 %v2587, %v2587
      %v2624 = vpack.c.bf16 %v2588, %v2588
      %v2625 = vpack.c.bf16 %v2589, %v2589
      %v2626 = vpack.c.bf16 %v2590, %v2590
      %v2627 = vpack.c.bf16 %v2591, %v2591
      %v2628 = vpack.c.bf16 %v2592, %v2592
      %v2629 = vpack.c.bf16 %v2593, %v2593
      %v2630 = vpack.c.bf16 %v2594, %v2594
      %v2631 = vpack.c.bf16 %v2595, %v2595
      %v2632 = vpack.c.bf16 %v2596, %v2596
      %v2633 = vpack.c.bf16 %v2597, %v2597
      %v2634 = vpack.c.bf16 %v2598, %v2598
      %v2635 = vpack.c.bf16 %v2599, %v2599
      %v2636 = vpack.c.bf16 %v2600, %v2600
      %v2637 = vpack.c.bf16 %v2601, %v2601
      %v2638 = vpack.c.bf16 %v2602, %v2602
      %v2639 = vpack.c.bf16 %v2603, %v2603
      %v2640 = vpack.c.bf16 %v2604, %v2604
      %v2641 = vpack.c.bf16 %v2605, %v2605
      %v2642 = vpack.c.bf16 %v2606, %v2606
      %v2643 = vpack.c.bf16 %v2607, %v2607
      %v2644 = vpack.c.bf16 %v2608, %v2608
      %v2645 = vpack.c.bf16 %v2609, %v2609
      %v2682 = vunpack.c.l.b16 %v2610
      %v2683 = vunpack.c.l.b16 %v2611
      %v2684 = vunpack.c.l.b16 %v2612
      %v2685 = vunpack.c.l.b16 %v2613
      %v2686 = vunpack.c.l.b16 %v2614
      %v2687 = vunpack.c.l.b16 %v2615
      %v2688 = vunpack.c.l.b16 %v2616
      %v2689 = vunpack.c.l.b16 %v2617
      %v2690 = vunpack.c.l.b16 %v2618
      %v2691 = vunpack.c.l.b16 %v2619
      %v2692 = vunpack.c.l.b16 %v2620
      %v2693 = vunpack.c.l.b16 %v2621
      %v2694 = vunpack.c.l.b16 %v2622
      %v2695 = vunpack.c.l.b16 %v2623
      %v2696 = vunpack.c.l.b16 %v2624
      %v2697 = vunpack.c.l.b16 %v2625
      %v2698 = vunpack.c.l.b16 %v2626
      %v2699 = vunpack.c.l.b16 %v2627
      %v2700 = vunpack.c.l.b16 %v2628
      %v2701 = vunpack.c.l.b16 %v2629
      %v2702 = vunpack.c.l.b16 %v2630
      %v2703 = vunpack.c.l.b16 %v2631
      %v2704 = vunpack.c.l.b16 %v2632
      %v2705 = vunpack.c.l.b16 %v2633
      %v2706 = vunpack.c.l.b16 %v2634
      %v2707 = vunpack.c.l.b16 %v2635
      %v2708 = vunpack.c.l.b16 %v2636
      %v2709 = vunpack.c.l.b16 %v2637
      %v2710 = vunpack.c.l.b16 %v2638
      %v2711 = vunpack.c.l.b16 %v2639
      %v2712 = vunpack.c.l.b16 %v2640
      %v2713 = vunpack.c.l.b16 %v2641
      %v2714 = vunpack.c.l.b16 %v2642
      %v2715 = vunpack.c.l.b16 %v2643
      %v2716 = vunpack.c.l.b16 %v2644
      %v2717 = vunpack.c.l.b16 %v2645
      %v2718 = vpack.c.b16 %v2683, %v2682
      %v2719 = vpack.c.b16 %v2685, %v2684
      %v2720 = vpack.c.b16 %v2687, %v2686
      %v2721 = vpack.c.b16 %v2689, %v2688
      %v2722 = vpack.c.b16 %v2691, %v2690
      %v2723 = vpack.c.b16 %v2693, %v2692
      %v2724 = vpack.c.b16 %v2695, %v2694
      %v2725 = vpack.c.b16 %v2697, %v2696
      %v2726 = vpack.c.b16 %v2699, %v2698
      %v2727 = vpack.c.b16 %v2701, %v2700
      %v2728 = vpack.c.b16 %v2703, %v2702
      %v2729 = vpack.c.b16 %v2705, %v2704
      %v2730 = vpack.c.b16 %v2707, %v2706
      %v2731 = vpack.c.b16 %v2709, %v2708
      %v2732 = vpack.c.b16 %v2711, %v2710
      %v2733 = vpack.c.b16 %v2713, %v2712
      %v2734 = vpack.c.b16 %v2715, %v2714
      %v2735 = vpack.c.b16 %v2717, %v2716
      %v2737 = vshrl.u32 %v2718, 16
      %v2739 = vrot.slane %v2737, 7
      %v2740 = vshll.u32 %v2718, 16
      %v2742 = vor.u32 %v2739, %v2740
      %v2744 = vshrl.u32 %v2719, 16
      %v2746 = vrot.slane %v2744, 7
      %v2747 = vshll.u32 %v2719, 16
      %v2749 = vor.u32 %v2746, %v2747
      %v2751 = vshrl.u32 %v2720, 16
      %v2753 = vrot.slane %v2751, 7
      %v2754 = vshll.u32 %v2720, 16
      %v2756 = vor.u32 %v2753, %v2754
      %v2758 = vshrl.u32 %v2721, 16
      %v2760 = vrot.slane %v2758, 7
      %v2761 = vshll.u32 %v2721, 16
      %v2763 = vor.u32 %v2760, %v2761
      %v2765 = vshrl.u32 %v2722, 16
      %v2767 = vrot.slane %v2765, 7
      %v2768 = vshll.u32 %v2722, 16
      %v2770 = vor.u32 %v2767, %v2768
      %v2772 = vshrl.u32 %v2723, 16
      %v2774 = vrot.slane %v2772, 7
      %v2775 = vshll.u32 %v2723, 16
      %v2777 = vor.u32 %v2774, %v2775
      %v2779 = vshrl.u32 %v2724, 16
      %v2781 = vrot.slane %v2779, 7
      %v2782 = vshll.u32 %v2724, 16
      %v2784 = vor.u32 %v2781, %v2782
      %v2786 = vshrl.u32 %v2725, 16
      %v2788 = vrot.slane %v2786, 7
      %v2789 = vshll.u32 %v2725, 16
      %v2791 = vor.u32 %v2788, %v2789
      %v2793 = vshrl.u32 %v2726, 16
      %v2795 = vrot.slane %v2793, 7
      %v2796 = vshll.u32 %v2726, 16
      %v2798 = vor.u32 %v2795, %v2796
      %v2800 = vshrl.u32 %v2727, 16
      %v2802 = vrot.slane %v2800, 7
      %v2803 = vshll.u32 %v2727, 16
      %v2805 = vor.u32 %v2802, %v2803
      %v2807 = vshrl.u32 %v2728, 16
      %v2809 = vrot.slane %v2807, 7
      %v2810 = vshll.u32 %v2728, 16
      %v2812 = vor.u32 %v2809, %v2810
      %v2814 = vshrl.u32 %v2729, 16
      %v2816 = vrot.slane %v2814, 7
      %v2817 = vshll.u32 %v2729, 16
      %v2819 = vor.u32 %v2816, %v2817
      %v2821 = vshrl.u32 %v2730, 16
      %v2823 = vrot.slane %v2821, 7
      %v2824 = vshll.u32 %v2730, 16
      %v2826 = vor.u32 %v2823, %v2824
      %v2828 = vshrl.u32 %v2731, 16
      %v2830 = vrot.slane %v2828, 7
      %v2831 = vshll.u32 %v2731, 16
      %v2833 = vor.u32 %v2830, %v2831
      %v2835 = vshrl.u32 %v2732, 16
      %v2837 = vrot.slane %v2835, 7
      %v2838 = vshll.u32 %v2732, 16
      %v2840 = vor.u32 %v2837, %v2838
      %v2842 = vshrl.u32 %v2733, 16
      %v2844 = vrot.slane %v2842, 7
      %v2845 = vshll.u32 %v2733, 16
      %v2847 = vor.u32 %v2844, %v2845
      %v2849 = vshrl.u32 %v2734, 16
      %v2851 = vrot.slane %v2849, 7
      %v2852 = vshll.u32 %v2734, 16
      %v2854 = vor.u32 %v2851, %v2852
      %v2856 = vshrl.u32 %v2735, 16
      %v2858 = vrot.slane %v2856, 7
      %v2859 = vshll.u32 %v2735, 16
      %v2861 = vor.u32 %v2858, %v2859
      %vm2898 = vcmask 1040384
      %vm2899 = vsmask.f32 256
      %vm2900 = vmand %vm2898, %vm2899
      %v2901 = vsel %vm2900, 0, %v2742
      %v2902 = vsel %vm2900, 0, %v2749
      %v2903 = vsel %vm2900, 0, %v2756
      %v2904 = vsel %vm2900, 0, %v2763
      %v2905 = vsel %vm2900, 0, %v2770
      %v2906 = vsel %vm2900, 0, %v2777
      %v2907 = vsel %vm2900, 0, %v2784
      %v2908 = vsel %vm2900, 0, %v2791
      %v2909 = vsel %vm2900, 0, %v2798
      %v2910 = vsel %vm2900, 0, %v2805
      %v2911 = vsel %vm2900, 0, %v2812
      %v2912 = vsel %vm2900, 0, %v2819
      %v2913 = vsel %vm2900, 0, %v2826
      %v2914 = vsel %vm2900, 0, %v2833
      %v2915 = vsel %vm2900, 0, %v2840
      %v2916 = vsel %vm2900, 0, %v2847
      %v2917 = vsel %vm2900, 0, %v2854
      %v2918 = vsel %vm2900, 0, %v2861
      %v2919 = vsel %vm2900, %v2739, 0
      %v2920 = vsel %vm2900, %v2746, 0
      %v2921 = vsel %vm2900, %v2753, 0
      %v2922 = vsel %vm2900, %v2760, 0
      %v2923 = vsel %vm2900, %v2767, 0
      %v2924 = vsel %vm2900, %v2774, 0
      %v2925 = vsel %vm2900, %v2781, 0
      %v2926 = vsel %vm2900, %v2788, 0
      %v2927 = vsel %vm2900, %v2795, 0
      %v2928 = vsel %vm2900, %v2802, 0
      %v2929 = vsel %vm2900, %v2809, 0
      %v2930 = vsel %vm2900, %v2816, 0
      %v2931 = vsel %vm2900, %v2823, 0
      %v2932 = vsel %vm2900, %v2830, 0
      %v2933 = vsel %vm2900, %v2837, 0
      %v2934 = vsel %vm2900, %v2844, 0
      %v2935 = vsel %vm2900, %v2851, 0
      %v2936 = vsel %vm2900, %v2858, 0
      %v2938 = vshrl.u32 %v2901, 16
      %v2940 = vshll.u32 %v2901, 16
      %v2942 = vrot.slane %v2940, 1
      %v2943 = vor.u32 %v2938, %v2942
      %v2945 = vshll.u32 %v2919, 16
      %v2947 = vrot.slane %v2945, 1
      %v2948 = vsel %vm597, %v2943, %v2947
      %v2950 = vshrl.u32 %v2902, 16
      %v2952 = vshll.u32 %v2902, 16
      %v2954 = vrot.slane %v2952, 1
      %v2955 = vor.u32 %v2950, %v2954
      %v2957 = vshll.u32 %v2920, 16
      %v2959 = vrot.slane %v2957, 1
      %v2960 = vsel %vm597, %v2955, %v2959
      %v2962 = vshrl.u32 %v2903, 16
      %v2964 = vshll.u32 %v2903, 16
      %v2966 = vrot.slane %v2964, 1
      %v2967 = vor.u32 %v2962, %v2966
      %v2969 = vshll.u32 %v2921, 16
      %v2971 = vrot.slane %v2969, 1
      %v2972 = vsel %vm597, %v2967, %v2971
      %v2974 = vshrl.u32 %v2904, 16
      %v2976 = vshll.u32 %v2904, 16
      %v2978 = vrot.slane %v2976, 1
      %v2979 = vor.u32 %v2974, %v2978
      %v2981 = vshll.u32 %v2922, 16
      %v2983 = vrot.slane %v2981, 1
      %v2984 = vsel %vm597, %v2979, %v2983
      %v2986 = vshrl.u32 %v2905, 16
      %v2988 = vshll.u32 %v2905, 16
      %v2990 = vrot.slane %v2988, 1
      %v2991 = vor.u32 %v2986, %v2990
      %v2993 = vshll.u32 %v2923, 16
      %v2995 = vrot.slane %v2993, 1
      %v2996 = vsel %vm597, %v2991, %v2995
      %v2998 = vshrl.u32 %v2906, 16
      %v3000 = vshll.u32 %v2906, 16
      %v3002 = vrot.slane %v3000, 1
      %v3003 = vor.u32 %v2998, %v3002
      %v3005 = vshll.u32 %v2924, 16
      %v3007 = vrot.slane %v3005, 1
      %v3008 = vsel %vm597, %v3003, %v3007
      %v3010 = vshrl.u32 %v2907, 16
      %v3012 = vshll.u32 %v2907, 16
      %v3014 = vrot.slane %v3012, 1
      %v3015 = vor.u32 %v3010, %v3014
      %v3017 = vshll.u32 %v2925, 16
      %v3019 = vrot.slane %v3017, 1
      %v3020 = vsel %vm597, %v3015, %v3019
      %v3022 = vshrl.u32 %v2908, 16
      %v3024 = vshll.u32 %v2908, 16
      %v3026 = vrot.slane %v3024, 1
      %v3027 = vor.u32 %v3022, %v3026
      %v3029 = vshll.u32 %v2926, 16
      %v3031 = vrot.slane %v3029, 1
      %v3032 = vsel %vm597, %v3027, %v3031
      %v3034 = vshrl.u32 %v2909, 16
      %v3036 = vshll.u32 %v2909, 16
      %v3038 = vrot.slane %v3036, 1
      %v3039 = vor.u32 %v3034, %v3038
      %v3041 = vshll.u32 %v2927, 16
      %v3043 = vrot.slane %v3041, 1
      %v3044 = vsel %vm597, %v3039, %v3043
      %v3046 = vshrl.u32 %v2910, 16
      %v3048 = vshll.u32 %v2910, 16
      %v3050 = vrot.slane %v3048, 1
      %v3051 = vor.u32 %v3046, %v3050
      %v3053 = vshll.u32 %v2928, 16
      %v3055 = vrot.slane %v3053, 1
      %v3056 = vsel %vm597, %v3051, %v3055
      %v3058 = vshrl.u32 %v2911, 16
      %v3060 = vshll.u32 %v2911, 16
      %v3062 = vrot.slane %v3060, 1
      %v3063 = vor.u32 %v3058, %v3062
      %v3065 = vshll.u32 %v2929, 16
      %v3067 = vrot.slane %v3065, 1
      %v3068 = vsel %vm597, %v3063, %v3067
      %v3070 = vshrl.u32 %v2912, 16
      %v3072 = vshll.u32 %v2912, 16
      %v3074 = vrot.slane %v3072, 1
      %v3075 = vor.u32 %v3070, %v3074
      %v3077 = vshll.u32 %v2930, 16
      %v3079 = vrot.slane %v3077, 1
      %v3080 = vsel %vm597, %v3075, %v3079
      %v3082 = vshrl.u32 %v2913, 16
      %v3084 = vshll.u32 %v2913, 16
      %v3086 = vrot.slane %v3084, 1
      %v3087 = vor.u32 %v3082, %v3086
      %v3089 = vshll.u32 %v2931, 16
      %v3091 = vrot.slane %v3089, 1
      %v3092 = vsel %vm597, %v3087, %v3091
      %v3094 = vshrl.u32 %v2914, 16
      %v3096 = vshll.u32 %v2914, 16
      %v3098 = vrot.slane %v3096, 1
      %v3099 = vor.u32 %v3094, %v3098
      %v3101 = vshll.u32 %v2932, 16
      %v3103 = vrot.slane %v3101, 1
      %v3104 = vsel %vm597, %v3099, %v3103
      %v3106 = vshrl.u32 %v2915, 16
      %v3108 = vshll.u32 %v2915, 16
      %v3110 = vrot.slane %v3108, 1
      %v3111 = vor.u32 %v3106, %v3110
      %v3113 = vshll.u32 %v2933, 16
      %v3115 = vrot.slane %v3113, 1
      %v3116 = vsel %vm597, %v3111, %v3115
      %v3118 = vshrl.u32 %v2916, 16
      %v3120 = vshll.u32 %v2916, 16
      %v3122 = vrot.slane %v3120, 1
      %v3123 = vor.u32 %v3118, %v3122
      %v3125 = vshll.u32 %v2934, 16
      %v3127 = vrot.slane %v3125, 1
      %v3128 = vsel %vm597, %v3123, %v3127
      %v3177 = vrot.slane %v2901, 1
      %v3178 = vrot.slane %v2919, 1
      %v3179 = vsel %vm832, %v3177, %v3178
      %v3180 = vrot.slane %v2902, 1
      %v3181 = vrot.slane %v2920, 1
      %v3182 = vsel %vm832, %v3180, %v3181
      %v3183 = vrot.slane %v2903, 1
      %v3184 = vrot.slane %v2921, 1
      %v3185 = vsel %vm832, %v3183, %v3184
      %v3186 = vrot.slane %v2904, 1
      %v3187 = vrot.slane %v2922, 1
      %v3188 = vsel %vm832, %v3186, %v3187
      %v3189 = vrot.slane %v2905, 1
      %v3190 = vrot.slane %v2923, 1
      %v3191 = vsel %vm832, %v3189, %v3190
      %v3192 = vrot.slane %v2906, 1
      %v3193 = vrot.slane %v2924, 1
      %v3194 = vsel %vm832, %v3192, %v3193
      %v3195 = vrot.slane %v2907, 1
      %v3196 = vrot.slane %v2925, 1
      %v3197 = vsel %vm832, %v3195, %v3196
      %v3198 = vrot.slane %v2908, 1
      %v3199 = vrot.slane %v2926, 1
      %v3200 = vsel %vm832, %v3198, %v3199
      %v3201 = vrot.slane %v2909, 1
      %v3202 = vrot.slane %v2927, 1
      %v3203 = vsel %vm832, %v3201, %v3202
      %v3204 = vrot.slane %v2910, 1
      %v3205 = vrot.slane %v2928, 1
      %v3206 = vsel %vm832, %v3204, %v3205
      %v3207 = vrot.slane %v2911, 1
      %v3208 = vrot.slane %v2929, 1
      %v3209 = vsel %vm832, %v3207, %v3208
      %v3210 = vrot.slane %v2912, 1
      %v3211 = vrot.slane %v2930, 1
      %v3212 = vsel %vm832, %v3210, %v3211
      %v3213 = vrot.slane %v2913, 1
      %v3214 = vrot.slane %v2931, 1
      %v3215 = vsel %vm832, %v3213, %v3214
      %v3216 = vrot.slane %v2914, 1
      %v3217 = vrot.slane %v2932, 1
      %v3218 = vsel %vm832, %v3216, %v3217
      %v3219 = vrot.slane %v2915, 1
      %v3220 = vrot.slane %v2933, 1
      %v3221 = vsel %vm832, %v3219, %v3220
      %v3222 = vrot.slane %v2916, 1
      %v3223 = vrot.slane %v2934, 1
      %v3224 = vsel %vm832, %v3222, %v3223
      %v3242 = vshrl.u32 %v2917, 16
      %v3244 = vshll.u32 %v2917, 16
      %v3246 = vrot.slane %v3244, 1
      %v3247 = vor.u32 %v3242, %v3246
      %v3249 = vshll.u32 %v2935, 16
      %v3251 = vrot.slane %v3249, 1
      %v3252 = vsel %vm597, %v3247, %v3251
      %v3256 = vrot.slane %v2917, 1
      %v3257 = vrot.slane %v2935, 1
      %v3258 = vsel %vm832, %v3256, %v3257
      %v3261 = vshrl.u32 %v2918, 16
      %v3263 = vshll.u32 %v2918, 16
      %v3265 = vrot.slane %v3263, 1
      %v3266 = vor.u32 %v3261, %v3265
      %v3268 = vshll.u32 %v2936, 16
      %v3270 = vrot.slane %v3268, 1
      %v3271 = vsel %vm597, %v3266, %v3270
      %v3275 = vrot.slane %v2918, 1
      %v3276 = vrot.slane %v2936, 1
      %v3277 = vsel %vm832, %v3275, %v3276
      %v3279 = vld [vmem:[%s4] sm:$0xf]
      %v3280 = vld [vmem:[%s4 + $0x4] sm:$0xf]
      %v3281 = vld [vmem:[%s4 + $0x8] sm:$0xf]
      %v3282 = vld [vmem:[%s4 + $0xc] sm:$0xf]
      %v3283 = vld [vmem:[%s4 + $0x10] sm:$0xf]
      %v3284 = vld [vmem:[%s4 + $0x14] sm:$0xf]
      %v3285 = vld [vmem:[%s4 + $0x18] sm:$0xf]
      %v3286 = vld [vmem:[%s4 + $0x1c] sm:$0xf]
      %v3287 = vld [vmem:[%s4 + $0x20] sm:$0xf]
      %v3288 = vld [vmem:[%s4 + $0x24] sm:$0xf]
      %v3289 = vld [vmem:[%s4 + $0x28] sm:$0xf]
      %v3290 = vld [vmem:[%s4 + $0x2c] sm:$0xf]
      %v3291 = vld [vmem:[%s4 + $0x30] sm:$0xf]
      %v3292 = vld [vmem:[%s4 + $0x34] sm:$0xf]
      %v3293 = vld [vmem:[%s4 + $0x38] sm:$0xf]
      %v3294 = vld [vmem:[%s4 + $0x3c] sm:$0xf]
      %v3295 = vld [vmem:[%s4 + $0x40] sm:$0xf]
      %v3296 = vld [vmem:[%s4 + $0x44] sm:$0xf]
      %v3297 = vld [vmem:[%s4 + $0x48] sm:$0xf]
      %v3298 = vld [vmem:[%s4 + $0x4c] sm:$0xf]
      %v3299 = vld [vmem:[%s4 + $0x50] sm:$0xf]
      %v3300 = vld [vmem:[%s4 + $0x54] sm:$0xf]
      %v3301 = vld [vmem:[%s4 + $0x58] sm:$0xf]
      %v3302 = vld [vmem:[%s4 + $0x5c] sm:$0xf]
      %v3303 = vld [vmem:[%s4 + $0x60] sm:$0xf]
      %v3304 = vld [vmem:[%s4 + $0x64] sm:$0xf]
      %v3305 = vld [vmem:[%s4 + $0x68] sm:$0xf]
      %v3306 = vld [vmem:[%s4 + $0x6c] sm:$0xf]
      %v3307 = vld [vmem:[%s4 + $0x70] sm:$0xf]
      %v3308 = vld [vmem:[%s4 + $0x74] sm:$0xf]
      %v3309 = vld [vmem:[%s4 + $0x78] sm:$0xf]
      %v3310 = vld [vmem:[%s4 + $0x7c] sm:$0xf]
      %v3311 = vld [vmem:[%s4 + $0x80] sm:$0xf]
      %v3312 = vld [vmem:[%s4 + $0x84] sm:$0xf]
      %v3313 = vld [vmem:[%s4 + $0x88] sm:$0xf]
      %v3314 = vld [vmem:[%s4 + $0x8c] sm:$0xf]
      %v3315 = vld [vmem:[%s4 + $0x90] sm:$0xf]
      %v3316 = vld [vmem:[%s4 + $0x94] sm:$0xf]
      %v3317 = vld [vmem:[%s4 + $0x98] sm:$0xf]
      %v3318 = vld [vmem:[%s4 + $0x9c] sm:$0xf]
      %v3319 = vld [vmem:[%s4 + $0xa0] sm:$0xf]
      %v3320 = vld [vmem:[%s4 + $0xa4] sm:$0xf]
      %v3321 = vld [vmem:[%s4 + $0xa8] sm:$0xf]
      %v3322 = vld [vmem:[%s4 + $0xac] sm:$0xf]
      %v3323 = vld [vmem:[%s4 + $0xb0] sm:$0xf]
      %v3324 = vld [vmem:[%s4 + $0xb4] sm:$0xf]
      %v3325 = vld [vmem:[%s4 + $0xb8] sm:$0xf]
      %v3326 = vld [vmem:[%s4 + $0xbc] sm:$0xf]
      %v3327 = vld [vmem:[%s4 + $0xc0] sm:$0xf]
      %v3328 = vld [vmem:[%s4 + $0xc4] sm:$0xf]
      %v3329 = vld [vmem:[%s4 + $0xc8] sm:$0xf]
      %v3330 = vld [vmem:[%s4 + $0xcc] sm:$0xf]
      %v3331 = vld [vmem:[%s4 + $0xd0] sm:$0xf]
      %v3332 = vld [vmem:[%s4 + $0xd4] sm:$0xf]
      %v3333 = vld [vmem:[%s4 + $0xd8] sm:$0xf]
      %v3334 = vld [vmem:[%s4 + $0xdc] sm:$0xf]
      %v3335 = vld [vmem:[%s4 + $0xe0] sm:$0xf]
      %v3336 = vld [vmem:[%s4 + $0xe4] sm:$0xf]
      %v3337 = vld [vmem:[%s4 + $0xe8] sm:$0xf]
      %v3338 = vld [vmem:[%s4 + $0xec] sm:$0xf]
      %v3339 = vld [vmem:[%s4 + $0xf0] sm:$0xf]
      %v3340 = vld [vmem:[%s4 + $0xf4] sm:$0xf]
      %v3341 = vld [vmem:[%s4 + $0xf8] sm:$0xf]
      %v3342 = vld [vmem:[%s4 + $0xfc] sm:$0xf]
      %v3343 = vld [vmem:[%s4 + $0x100] sm:$0xf]
      %v3344 = vld [vmem:[%s4 + $0x104] sm:$0xf]
      %v3345 = vld [vmem:[%s4 + $0x108] sm:$0xf]
      %v3346 = vld [vmem:[%s4 + $0x10c] sm:$0xf]
      %v3347 = vld [vmem:[%s4 + $0x110] sm:$0xf]
      %v3348 = vld [vmem:[%s4 + $0x114] sm:$0xf]
      %v3349 = vld [vmem:[%s4 + $0x118] sm:$0xf]
      %v3350 = vld [vmem:[%s4 + $0x11c] sm:$0xf]
      %v3351 = vld [vmem:[%s4 + $0x120] sm:$0xf]
      %v3352 = vld [vmem:[%s4 + $0x124] sm:$0xf]
      %v3353 = vld [vmem:[%s4 + $0x128] sm:$0xf]
      %v3354 = vld [vmem:[%s4 + $0x12c] sm:$0xf]
      %v3355 = vld [vmem:[%s4 + $0x130] sm:$0xf]
      %v3356 = vld [vmem:[%s4 + $0x134] sm:$0xf]
      %v3357 = vld [vmem:[%s4 + $0x138] sm:$0xf]
      %v3358 = vld [vmem:[%s4 + $0x13c] sm:$0xf]
      %v3359 = vld [vmem:[%s4 + $0x140] sm:$0xf]
      %v3360 = vld [vmem:[%s4 + $0x144] sm:$0xf]
      %v3361 = vld [vmem:[%s4 + $0x148] sm:$0xf]
      %v3362 = vld [vmem:[%s4 + $0x14c] sm:$0xf]
      %v3363 = vld [vmem:[%s4 + $0x150] sm:$0xf]
      %v3364 = vld [vmem:[%s4 + $0x154] sm:$0xf]
      %v3365 = vld [vmem:[%s4 + $0x158] sm:$0xf]
      %v3366 = vld [vmem:[%s4 + $0x15c] sm:$0xf]
      %v3367 = vld [vmem:[%s4 + $0x160] sm:$0xf]
      %v3368 = vld [vmem:[%s4 + $0x164] sm:$0xf]
      %v3369 = vld [vmem:[%s4 + $0x168] sm:$0xf]
      %v3370 = vld [vmem:[%s4 + $0x16c] sm:$0xf]
      %v3371 = vld [vmem:[%s4 + $0x170] sm:$0xf]
      %v3372 = vld [vmem:[%s4 + $0x174] sm:$0xf]
      %v3373 = vld [vmem:[%s4 + $0x178] sm:$0xf]
      %v3374 = vld [vmem:[%s4 + $0x17c] sm:$0xf]
      %v3375 = vld [vmem:[%s4 + $0x180] sm:$0xf]
      %v3376 = vld [vmem:[%s4 + $0x184] sm:$0xf]
      %v3377 = vld [vmem:[%s4 + $0x188] sm:$0xf]
      %v3378 = vld [vmem:[%s4 + $0x18c] sm:$0xf]
      %v3379 = vld [vmem:[%s4 + $0x190] sm:$0xf]
      %v3380 = vld [vmem:[%s4 + $0x194] sm:$0xf]
      %v3381 = vld [vmem:[%s4 + $0x198] sm:$0xf]
      %v3382 = vld [vmem:[%s4 + $0x19c] sm:$0xf]
      %v3383 = vld [vmem:[%s4 + $0x1a0] sm:$0xf]
      %v3384 = vld [vmem:[%s4 + $0x1a4] sm:$0xf]
      %v3385 = vld [vmem:[%s4 + $0x1a8] sm:$0xf]
      %v3386 = vld [vmem:[%s4 + $0x1ac] sm:$0xf]
      %v3387 = vld [vmem:[%s4 + $0x1b0] sm:$0xf]
      %v3388 = vld [vmem:[%s4 + $0x1b4] sm:$0xf]
      %v3389 = vld [vmem:[%s4 + $0x1b8] sm:$0xf]
      %v3390 = vld [vmem:[%s4 + $0x1bc] sm:$0xf]
      %v3391 = vld [vmem:[%s4 + $0x1c0] sm:$0xf]
      %v3392 = vld [vmem:[%s4 + $0x1c4] sm:$0xf]
      %v3393 = vld [vmem:[%s4 + $0x1c8] sm:$0xf]
      %v3394 = vld [vmem:[%s4 + $0x1cc] sm:$0xf]
      %v3395 = vld [vmem:[%s4 + $0x1d0] sm:$0xf]
      %v3396 = vld [vmem:[%s4 + $0x1d4] sm:$0xf]
      %v3397 = vld [vmem:[%s4 + $0x1d8] sm:$0xf]
      %v3398 = vld [vmem:[%s4 + $0x1dc] sm:$0xf]
      %v3399 = vld [vmem:[%s4 + $0x1e0] sm:$0xf]
      %v3400 = vld [vmem:[%s4 + $0x1e4] sm:$0xf]
      %v3401 = vld [vmem:[%s4 + $0x1e8] sm:$0xf]
      %v3402 = vld [vmem:[%s4 + $0x1ec] sm:$0xf]
      %v3403 = vld [vmem:[%s4 + $0x1f0] sm:$0xf]
      %v3404 = vld [vmem:[%s4 + $0x1f4] sm:$0xf]
      %v3405 = vld [vmem:[%s4 + $0x1f8] sm:$0xf]
      %v3406 = vld [vmem:[%s4 + $0x1fc] sm:$0xf]
      %v3407 = vld [vmem:[%s4 + $0x200] sm:$0xf]
      %v3408 = vld [vmem:[%s4 + $0x204] sm:$0xf]
      %v3409 = vld [vmem:[%s4 + $0x208] sm:$0xf]
      %v3410 = vld [vmem:[%s4 + $0x20c] sm:$0xf]
      %v3411 = vld [vmem:[%s4 + $0x210] sm:$0xf]
      %v3412 = vld [vmem:[%s4 + $0x214] sm:$0xf]
      %v3413 = vld [vmem:[%s4 + $0x218] sm:$0xf]
      %v3414 = vld [vmem:[%s4 + $0x21c] sm:$0xf]
      %v3415 = vld [vmem:[%s4 + $0x220] sm:$0xf]
      %v3416 = vld [vmem:[%s4 + $0x224] sm:$0xf]
      %v3417 = vld [vmem:[%s4 + $0x228] sm:$0xf]
      %v3418 = vld [vmem:[%s4 + $0x22c] sm:$0xf]
      %v3419 = vld [vmem:[%s4 + $0x230] sm:$0xf]
      %v3420 = vld [vmem:[%s4 + $0x234] sm:$0xf]
      %v3421 = vld [vmem:[%s4 + $0x238] sm:$0xf]
      %v3422 = vld [vmem:[%s4 + $0x23c] sm:$0xf]
      %v3423 = vunpack.c.l.bf16 %v381
      %v3424 = vunpack.c.l.bf16 %v382
      %v3425 = vunpack.c.l.bf16 %v383
      %v3426 = vunpack.c.l.bf16 %v384
      %v3427 = vunpack.c.l.bf16 %v385
      %v3428 = vunpack.c.l.bf16 %v386
      %v3429 = vunpack.c.l.bf16 %v387
      %v3430 = vunpack.c.l.bf16 %v388
      %v3431 = vunpack.c.l.bf16 %v389
      %v3432 = vunpack.c.l.bf16 %v390
      %v3433 = vunpack.c.l.bf16 %v391
      %v3434 = vunpack.c.l.bf16 %v392
      %v3435 = vunpack.c.l.bf16 %v393
      %v3436 = vunpack.c.l.bf16 %v394
      %v3437 = vunpack.c.l.bf16 %v395
      %v3438 = vunpack.c.l.bf16 %v396
      %v3439 = vunpack.c.l.bf16 %v397
      %v3440 = vunpack.c.l.bf16 %v398
      %v3441 = vunpack.c.l.bf16 %v399
      %v3442 = vunpack.c.l.bf16 %v400
      %v3443 = vunpack.c.l.bf16 %v401
      %v3444 = vunpack.c.l.bf16 %v402
      %v3445 = vunpack.c.l.bf16 %v403
      %v3446 = vunpack.c.l.bf16 %v404
      %v3447 = vunpack.c.l.bf16 %v405
      %v3448 = vunpack.c.l.bf16 %v406
      %v3449 = vunpack.c.l.bf16 %v407
      %v3450 = vunpack.c.l.bf16 %v408
      %v3451 = vunpack.c.l.bf16 %v409
      %v3452 = vunpack.c.l.bf16 %v410
      %v3453 = vunpack.c.l.bf16 %v411
      %v3454 = vunpack.c.l.bf16 %v412
      %v3455 = vunpack.c.l.bf16 %v413
      %v3456 = vunpack.c.l.bf16 %v414
      %v3457 = vunpack.c.l.bf16 %v415
      %v3458 = vunpack.c.l.bf16 %v416
      %v3459 = vunpack.c.l.bf16 %v417
      %v3460 = vunpack.c.l.bf16 %v418
      %v3461 = vunpack.c.l.bf16 %v419
      %v3462 = vunpack.c.l.bf16 %v420
      %v3463 = vunpack.c.l.bf16 %v421
      %v3464 = vunpack.c.l.bf16 %v422
      %v3465 = vunpack.c.l.bf16 %v423
      %v3466 = vunpack.c.l.bf16 %v424
      %v3467 = vunpack.c.l.bf16 %v425
      %v3468 = vunpack.c.l.bf16 %v426
      %v3469 = vunpack.c.l.bf16 %v427
      %v3470 = vunpack.c.l.bf16 %v428
      %vm3519 = vcmask 1046528
      %v3520 = vrot.slane %v3423, 1
      %v3521 = vrot.slane %v3424, 1
      %v3522 = vsel %vm3519, %v3520, %v3521
      %v3523 = vrot.slane %v3425, 1
      %v3524 = vsel %vm3519, %v3521, %v3523
      %v3525 = vrot.slane %v3426, 1
      %v3526 = vrot.slane %v3427, 1
      %v3527 = vsel %vm3519, %v3525, %v3526
      %v3528 = vrot.slane %v3428, 1
      %v3529 = vsel %vm3519, %v3526, %v3528
      %v3530 = vrot.slane %v3429, 1
      %v3531 = vrot.slane %v3430, 1
      %v3532 = vsel %vm3519, %v3530, %v3531
      %v3533 = vrot.slane %v3431, 1
      %v3534 = vsel %vm3519, %v3531, %v3533
      %v3535 = vrot.slane %v3432, 1
      %v3536 = vrot.slane %v3433, 1
      %v3537 = vsel %vm3519, %v3535, %v3536
      %v3538 = vrot.slane %v3434, 1
      %v3539 = vsel %vm3519, %v3536, %v3538
      %v3540 = vrot.slane %v3435, 1
      %v3541 = vrot.slane %v3436, 1
      %v3542 = vsel %vm3519, %v3540, %v3541
      %v3543 = vrot.slane %v3437, 1
      %v3544 = vsel %vm3519, %v3541, %v3543
      %v3545 = vrot.slane %v3438, 1
      %v3546 = vrot.slane %v3439, 1
      %v3547 = vsel %vm3519, %v3545, %v3546
      %v3548 = vrot.slane %v3440, 1
      %v3549 = vsel %vm3519, %v3546, %v3548
      %v3550 = vrot.slane %v3441, 1
      %v3551 = vrot.slane %v3442, 1
      %v3552 = vsel %vm3519, %v3550, %v3551
      %v3553 = vrot.slane %v3443, 1
      %v3554 = vsel %vm3519, %v3551, %v3553
      %v3555 = vrot.slane %v3444, 1
      %v3556 = vrot.slane %v3445, 1
      %v3557 = vsel %vm3519, %v3555, %v3556
      %v3558 = vrot.slane %v3446, 1
      %v3559 = vsel %vm3519, %v3556, %v3558
      %v3560 = vrot.slane %v3447, 1
      %v3561 = vrot.slane %v3448, 1
      %v3562 = vsel %vm3519, %v3560, %v3561
      %v3563 = vrot.slane %v3449, 1
      %v3564 = vsel %vm3519, %v3561, %v3563
      %v3565 = vrot.slane %v3450, 1
      %v3566 = vrot.slane %v3451, 1
      %v3567 = vsel %vm3519, %v3565, %v3566
      %v3568 = vrot.slane %v3452, 1
      %v3569 = vsel %vm3519, %v3566, %v3568
      %v3570 = vrot.slane %v3453, 1
      %v3571 = vrot.slane %v3454, 1
      %v3572 = vsel %vm3519, %v3570, %v3571
      %v3573 = vrot.slane %v3455, 1
      %v3574 = vsel %vm3519, %v3571, %v3573
      %v3575 = vrot.slane %v3456, 1
      %v3576 = vrot.slane %v3457, 1
      %v3577 = vsel %vm3519, %v3575, %v3576
      %v3578 = vrot.slane %v3458, 1
      %v3579 = vsel %vm3519, %v3576, %v3578
      %v3580 = vrot.slane %v3459, 1
      %v3581 = vrot.slane %v3460, 1
      %v3582 = vsel %vm3519, %v3580, %v3581
      %v3583 = vrot.slane %v3461, 1
      %v3584 = vsel %vm3519, %v3581, %v3583
      %v3585 = vrot.slane %v3462, 1
      %v3586 = vrot.slane %v3463, 1
      %v3587 = vsel %vm3519, %v3585, %v3586
      %v3588 = vrot.slane %v3464, 1
      %v3589 = vsel %vm3519, %v3586, %v3588
      %v3590 = vrot.slane %v3465, 1
      %v3591 = vrot.slane %v3466, 1
      %v3592 = vsel %vm3519, %v3590, %v3591
      %v3593 = vrot.slane %v3467, 1
      %v3594 = vsel %vm3519, %v3591, %v3593
      %v3595 = vrot.slane %v3468, 1
      %v3596 = vrot.slane %v3469, 1
      %v3597 = vsel %vm3519, %v3595, %v3596
      %v3598 = vrot.slane %v3470, 1
      %v3599 = vsel %vm3519, %v3596, %v3598
      %v3632 = vld [vmem:[%s5] sm:$0x1]
      %v3634 = vperm.slane %v3632, 0
      %v3780 = vunpack.c.l.b16 %v3279
      %v3781 = vunpack.c.l.b16 %v3280
      %v3782 = vunpack.c.l.b16 %v3281
      %v3783 = vunpack.c.l.b16 %v3282
      %v3784 = vunpack.c.l.b16 %v3283
      %v3785 = vunpack.c.l.b16 %v3284
      %v3786 = vunpack.c.l.b16 %v3285
      %v3787 = vunpack.c.l.b16 %v3286
      %v3788 = vunpack.c.l.b16 %v3287
      %v3789 = vunpack.c.l.b16 %v3288
      %v3790 = vunpack.c.l.b16 %v3289
      %v3791 = vunpack.c.l.b16 %v3290
      %v3792 = vunpack.c.l.b16 %v3291
      %v3793 = vunpack.c.l.b16 %v3292
      %v3794 = vunpack.c.l.b16 %v3293
      %v3795 = vunpack.c.l.b16 %v3294
      %v3796 = vunpack.c.l.b16 %v3295
      %v3797 = vunpack.c.l.b16 %v3296
      %v3798 = vunpack.c.l.b16 %v3297
      %v3799 = vunpack.c.l.b16 %v3298
      %v3800 = vunpack.c.l.b16 %v3299
      %v3801 = vunpack.c.l.b16 %v3300
      %v3802 = vunpack.c.l.b16 %v3301
      %v3803 = vunpack.c.l.b16 %v3302
      %v3804 = vunpack.c.l.b16 %v3303
      %v3805 = vunpack.c.l.b16 %v3304
      %v3806 = vunpack.c.l.b16 %v3305
      %v3807 = vunpack.c.l.b16 %v3306
      %v3808 = vunpack.c.l.b16 %v3307
      %v3809 = vunpack.c.l.b16 %v3308
      %v3810 = vunpack.c.l.b16 %v3309
      %v3811 = vunpack.c.l.b16 %v3310
      %v3812 = vunpack.c.l.b16 %v3311
      %v3813 = vunpack.c.l.b16 %v3312
      %v3814 = vunpack.c.l.b16 %v3313
      %v3815 = vunpack.c.l.b16 %v3314
      %v3816 = vunpack.c.l.b16 %v3315
      %v3817 = vunpack.c.l.b16 %v3316
      %v3818 = vunpack.c.l.b16 %v3317
      %v3819 = vunpack.c.l.b16 %v3318
      %v3820 = vunpack.c.l.b16 %v3319
      %v3821 = vunpack.c.l.b16 %v3320
      %v3822 = vunpack.c.l.b16 %v3321
      %v3823 = vunpack.c.l.b16 %v3322
      %v3824 = vunpack.c.l.b16 %v3323
      %v3825 = vunpack.c.l.b16 %v3324
      %v3826 = vunpack.c.l.b16 %v3325
      %v3827 = vunpack.c.l.b16 %v3326
      %v3828 = vunpack.c.l.b16 %v3327
      %v3829 = vunpack.c.l.b16 %v3328
      %v3830 = vunpack.c.l.b16 %v3329
      %v3831 = vunpack.c.l.b16 %v3330
      %v3832 = vunpack.c.l.b16 %v3331
      %v3833 = vunpack.c.l.b16 %v3332
      %v3834 = vunpack.c.l.b16 %v3333
      %v3835 = vunpack.c.l.b16 %v3334
      %v3836 = vunpack.c.l.b16 %v3335
      %v3837 = vunpack.c.l.b16 %v3336
      %v3838 = vunpack.c.l.b16 %v3337
      %v3839 = vunpack.c.l.b16 %v3338
      %v3840 = vunpack.c.l.b16 %v3339
      %v3841 = vunpack.c.l.b16 %v3340
      %v3842 = vunpack.c.l.b16 %v3341
      %v3843 = vunpack.c.l.b16 %v3342
      %v3844 = vunpack.c.l.b16 %v3343
      %v3845 = vunpack.c.l.b16 %v3344
      %v3846 = vunpack.c.l.b16 %v3345
      %v3847 = vunpack.c.l.b16 %v3346
      %v3848 = vunpack.c.l.b16 %v3347
      %v3849 = vunpack.c.l.b16 %v3348
      %v3850 = vunpack.c.l.b16 %v3349
      %v3851 = vunpack.c.l.b16 %v3350
      %v3852 = vunpack.c.l.b16 %v3351
      %v3853 = vunpack.c.l.b16 %v3352
      %v3854 = vunpack.c.l.b16 %v3353
      %v3855 = vunpack.c.l.b16 %v3354
      %v3856 = vunpack.c.l.b16 %v3355
      %v3857 = vunpack.c.l.b16 %v3356
      %v3858 = vunpack.c.l.b16 %v3357
      %v3859 = vunpack.c.l.b16 %v3358
      %v3860 = vunpack.c.l.b16 %v3359
      %v3861 = vunpack.c.l.b16 %v3360
      %v3862 = vunpack.c.l.b16 %v3361
      %v3863 = vunpack.c.l.b16 %v3362
      %v3864 = vunpack.c.l.b16 %v3363
      %v3865 = vunpack.c.l.b16 %v3364
      %v3866 = vunpack.c.l.b16 %v3365
      %v3867 = vunpack.c.l.b16 %v3366
      %v3868 = vunpack.c.l.b16 %v3367
      %v3869 = vunpack.c.l.b16 %v3368
      %v3870 = vunpack.c.l.b16 %v3369
      %v3871 = vunpack.c.l.b16 %v3370
      %v3872 = vunpack.c.l.b16 %v3371
      %v3873 = vunpack.c.l.b16 %v3372
      %v3874 = vunpack.c.l.b16 %v3373
      %v3875 = vunpack.c.l.b16 %v3374
      %v3876 = vunpack.c.l.b16 %v3375
      %v3877 = vunpack.c.l.b16 %v3376
      %v3878 = vunpack.c.l.b16 %v3377
      %v3879 = vunpack.c.l.b16 %v3378
      %v3880 = vunpack.c.l.b16 %v3379
      %v3881 = vunpack.c.l.b16 %v3380
      %v3882 = vunpack.c.l.b16 %v3381
      %v3883 = vunpack.c.l.b16 %v3382
      %v3884 = vunpack.c.l.b16 %v3383
      %v3885 = vunpack.c.l.b16 %v3384
      %v3886 = vunpack.c.l.b16 %v3385
      %v3887 = vunpack.c.l.b16 %v3386
      %v3888 = vunpack.c.l.b16 %v3387
      %v3889 = vunpack.c.l.b16 %v3388
      %v3890 = vunpack.c.l.b16 %v3389
      %v3891 = vunpack.c.l.b16 %v3390
      %v3892 = vunpack.c.l.b16 %v3391
      %v3893 = vunpack.c.l.b16 %v3392
      %v3894 = vunpack.c.l.b16 %v3393
      %v3895 = vunpack.c.l.b16 %v3394
      %v3896 = vunpack.c.l.b16 %v3395
      %v3897 = vunpack.c.l.b16 %v3396
      %v3898 = vunpack.c.l.b16 %v3397
      %v3899 = vunpack.c.l.b16 %v3398
      %v3900 = vunpack.c.l.b16 %v3399
      %v3901 = vunpack.c.l.b16 %v3400
      %v3902 = vunpack.c.l.b16 %v3401
      %v3903 = vunpack.c.l.b16 %v3402
      %v3904 = vunpack.c.l.b16 %v3403
      %v3905 = vunpack.c.l.b16 %v3404
      %v3906 = vunpack.c.l.b16 %v3405
      %v3907 = vunpack.c.l.b16 %v3406
      %v3908 = vunpack.c.l.b16 %v3407
      %v3909 = vunpack.c.l.b16 %v3408
      %v3910 = vunpack.c.l.b16 %v3409
      %v3911 = vunpack.c.l.b16 %v3410
      %v3912 = vunpack.c.l.b16 %v3411
      %v3913 = vunpack.c.l.b16 %v3412
      %v3914 = vunpack.c.l.b16 %v3413
      %v3915 = vunpack.c.l.b16 %v3414
      %v3916 = vunpack.c.l.b16 %v3415
      %v3917 = vunpack.c.l.b16 %v3416
      %v3918 = vunpack.c.l.b16 %v3417
      %v3919 = vunpack.c.l.b16 %v3418
      %v3920 = vunpack.c.l.b16 %v3419
      %v3921 = vunpack.c.l.b16 %v3420
      %v3922 = vunpack.c.l.b16 %v3421
      %v3923 = vunpack.c.l.b16 %v3422
      %v3924 = vpack.c.b16 %v3781, %v3780
      %v3925 = vpack.c.b16 %v3783, %v3782
      %v3926 = vpack.c.b16 %v3785, %v3784
      %v3927 = vpack.c.b16 %v3787, %v3786
      %v3928 = vpack.c.b16 %v3789, %v3788
      %v3929 = vpack.c.b16 %v3791, %v3790
      %v3930 = vpack.c.b16 %v3793, %v3792
      %v3931 = vpack.c.b16 %v3795, %v3794
      %v3932 = vpack.c.b16 %v3797, %v3796
      %v3933 = vpack.c.b16 %v3799, %v3798
      %v3934 = vpack.c.b16 %v3801, %v3800
      %v3935 = vpack.c.b16 %v3803, %v3802
      %v3936 = vpack.c.b16 %v3805, %v3804
      %v3937 = vpack.c.b16 %v3807, %v3806
      %v3938 = vpack.c.b16 %v3809, %v3808
      %v3939 = vpack.c.b16 %v3811, %v3810
      %v3940 = vpack.c.b16 %v3813, %v3812
      %v3941 = vpack.c.b16 %v3815, %v3814
      %v3942 = vpack.c.b16 %v3817, %v3816
      %v3943 = vpack.c.b16 %v3819, %v3818
      %v3944 = vpack.c.b16 %v3821, %v3820
      %v3945 = vpack.c.b16 %v3823, %v3822
      %v3946 = vpack.c.b16 %v3825, %v3824
      %v3947 = vpack.c.b16 %v3827, %v3826
      %v3948 = vpack.c.b16 %v3829, %v3828
      %v3949 = vpack.c.b16 %v3831, %v3830
      %v3950 = vpack.c.b16 %v3833, %v3832
      %v3951 = vpack.c.b16 %v3835, %v3834
      %v3952 = vpack.c.b16 %v3837, %v3836
      %v3953 = vpack.c.b16 %v3839, %v3838
      %v3954 = vpack.c.b16 %v3841, %v3840
      %v3955 = vpack.c.b16 %v3843, %v3842
      %v3956 = vpack.c.b16 %v3845, %v3844
      %v3957 = vpack.c.b16 %v3847, %v3846
      %v3958 = vpack.c.b16 %v3849, %v3848
      %v3959 = vpack.c.b16 %v3851, %v3850
      %v3960 = vpack.c.b16 %v3853, %v3852
      %v3961 = vpack.c.b16 %v3855, %v3854
      %v3962 = vpack.c.b16 %v3857, %v3856
      %v3963 = vpack.c.b16 %v3859, %v3858
      %v3964 = vpack.c.b16 %v3861, %v3860
      %v3965 = vpack.c.b16 %v3863, %v3862
      %v3966 = vpack.c.b16 %v3865, %v3864
      %v3967 = vpack.c.b16 %v3867, %v3866
      %v3968 = vpack.c.b16 %v3869, %v3868
      %v3969 = vpack.c.b16 %v3871, %v3870
      %v3970 = vpack.c.b16 %v3873, %v3872
      %v3971 = vpack.c.b16 %v3875, %v3874
      %v3972 = vpack.c.b16 %v3877, %v3876
      %v3973 = vpack.c.b16 %v3879, %v3878
      %v3974 = vpack.c.b16 %v3881, %v3880
      %v3975 = vpack.c.b16 %v3883, %v3882
      %v3976 = vpack.c.b16 %v3885, %v3884
      %v3977 = vpack.c.b16 %v3887, %v3886
      %v3978 = vpack.c.b16 %v3889, %v3888
      %v3979 = vpack.c.b16 %v3891, %v3890
      %v3980 = vpack.c.b16 %v3893, %v3892
      %v3981 = vpack.c.b16 %v3895, %v3894
      %v3982 = vpack.c.b16 %v3897, %v3896
      %v3983 = vpack.c.b16 %v3899, %v3898
      %v3984 = vpack.c.b16 %v3901, %v3900
      %v3985 = vpack.c.b16 %v3903, %v3902
      %v3986 = vpack.c.b16 %v3905, %v3904
      %v3987 = vpack.c.b16 %v3907, %v3906
      %v3988 = vpack.c.b16 %v3909, %v3908
      %v3989 = vpack.c.b16 %v3911, %v3910
      %v3990 = vpack.c.b16 %v3913, %v3912
      %v3991 = vpack.c.b16 %v3915, %v3914
      %v3992 = vpack.c.b16 %v3917, %v3916
      %v3993 = vpack.c.b16 %v3919, %v3918
      %v3994 = vpack.c.b16 %v3921, %v3920
      %v3995 = vpack.c.b16 %v3923, %v3922
      %4068 = vmatpush.bf16.msra.mxu0 %v3931
      %4069 = vmatpush.bf16.msra.mxu0 %v3930
      %4070 = vmatpush.bf16.msra.mxu0 %v3929
      %4071 = vmatpush.bf16.msra.mxu0 %v3928
      %4072 = vmatpush.bf16.msra.mxu0 %v3927
      %4073 = vmatpush.bf16.msra.mxu0 %v3926
      %4074 = vmatpush.bf16.msra.mxu0 %v3925
      %4075 = vmatpush.bf16.msra.mxu0 %v3924
      %4076 = vmatmul.bf16.gmra.mxu0 %v2901
      %v4077 = vpop.f32.mrf.mxu0
      %v4078 = vadd.f32 %v3634, %v4077
      %v4079 = vpop.f32.mrf.mxu0
      %v4080 = vadd.f32 %v3634, %v4079
      %4081 = vmatmul.bf16.gmra.mxu0 %v2902
      %v4082 = vpop.f32.mrf.mxu0
      %v4083 = vadd.f32 %v3634, %v4082
      %v4084 = vpop.f32.mrf.mxu0
      %v4085 = vadd.f32 %v3634, %v4084
      %4086 = vmatmul.bf16.gmra.mxu0 %v2903
      %v4087 = vpop.f32.mrf.mxu0
      %v4088 = vadd.f32 %v3634, %v4087
      %v4089 = vpop.f32.mrf.mxu0
      %v4090 = vadd.f32 %v3634, %v4089
      %4091 = vmatmul.bf16.gmra.mxu0 %v2904
      %v4092 = vpop.f32.mrf.mxu0
      %v4093 = vadd.f32 %v3634, %v4092
      %v4094 = vpop.f32.mrf.mxu0
      %v4095 = vadd.f32 %v3634, %v4094
      %4096 = vmatmul.bf16.gmra.mxu0 %v2905
      %v4097 = vpop.f32.mrf.mxu0
      %v4098 = vadd.f32 %v3634, %v4097
      %v4099 = vpop.f32.mrf.mxu0
      %v4100 = vadd.f32 %v3634, %v4099
      %4101 = vmatmul.bf16.gmra.mxu0 %v2906
      %v4102 = vpop.f32.mrf.mxu0
      %v4103 = vadd.f32 %v3634, %v4102
      %v4104 = vpop.f32.mrf.mxu0
      %v4105 = vadd.f32 %v3634, %v4104
      %4106 = vmatmul.bf16.gmra.mxu0 %v2907
      %v4107 = vpop.f32.mrf.mxu0
      %v4108 = vadd.f32 %v3634, %v4107
      %v4109 = vpop.f32.mrf.mxu0
      %v4110 = vadd.f32 %v3634, %v4109
      %4111 = vmatmul.bf16.gmra.mxu0 %v2908
      %v4112 = vpop.f32.mrf.mxu0
      %v4113 = vadd.f32 %v3634, %v4112
      %v4114 = vpop.f32.mrf.mxu0
      %v4115 = vadd.f32 %v3634, %v4114
      %4116 = vmatmul.bf16.gmra.mxu0 %v2909
      %v4117 = vpop.f32.mrf.mxu0
      %v4118 = vadd.f32 %v3634, %v4117
      %v4119 = vpop.f32.mrf.mxu0
      %v4120 = vadd.f32 %v3634, %v4119
      %4121 = vmatmul.bf16.gmra.mxu0 %v2910
      %v4122 = vpop.f32.mrf.mxu0
      %v4123 = vadd.f32 %v3634, %v4122
      %v4124 = vpop.f32.mrf.mxu0
      %v4125 = vadd.f32 %v3634, %v4124
      %4126 = vmatmul.bf16.gmra.mxu0 %v2911
      %v4127 = vpop.f32.mrf.mxu0
      %v4128 = vadd.f32 %v3634, %v4127
      %v4129 = vpop.f32.mrf.mxu0
      %v4130 = vadd.f32 %v3634, %v4129
      %4131 = vmatmul.bf16.gmra.mxu0 %v2912
      %v4132 = vpop.f32.mrf.mxu0
      %v4133 = vadd.f32 %v3634, %v4132
      %v4134 = vpop.f32.mrf.mxu0
      %v4135 = vadd.f32 %v3634, %v4134
      %4136 = vmatmul.bf16.gmra.mxu0 %v2913
      %v4137 = vpop.f32.mrf.mxu0
      %v4138 = vadd.f32 %v3634, %v4137
      %v4139 = vpop.f32.mrf.mxu0
      %v4140 = vadd.f32 %v3634, %v4139
      %4141 = vmatmul.bf16.gmra.mxu0 %v2914
      %v4142 = vpop.f32.mrf.mxu0
      %v4143 = vadd.f32 %v3634, %v4142
      %v4144 = vpop.f32.mrf.mxu0
      %v4145 = vadd.f32 %v3634, %v4144
      %4146 = vmatmul.bf16.gmra.mxu0 %v2915
      %v4147 = vpop.f32.mrf.mxu0
      %v4148 = vadd.f32 %v3634, %v4147
      %v4149 = vpop.f32.mrf.mxu0
      %v4150 = vadd.f32 %v3634, %v4149
      %4151 = vmatmul.bf16.gmra.mxu0 %v2916
      %v4152 = vpop.f32.mrf.mxu0
      %v4153 = vadd.f32 %v3634, %v4152
      %v4154 = vpop.f32.mrf.mxu0
      %v4155 = vadd.f32 %v3634, %v4154
      %4156 = vdwg.mxu0
      %4157 = vmatpush.bf16.msra.mxu0 %v3939
      %4158 = vmatpush.bf16.msra.mxu0 %v3938
      %4159 = vmatpush.bf16.msra.mxu0 %v3937
      %4160 = vmatpush.bf16.msra.mxu0 %v3936
      %4161 = vmatpush.bf16.msra.mxu0 %v3935
      %4162 = vmatpush.bf16.msra.mxu0 %v3934
      %4163 = vmatpush.bf16.msra.mxu0 %v3933
      %4164 = vmatpush.bf16.msra.mxu0 %v3932
      %4165 = vmatmul.bf16.gmra.mxu0 %v2948
      %v4166 = vpop.f32.mrf.mxu0
      %v4167 = vadd.f32 %v4078, %v4166
      %v4168 = vpop.f32.mrf.mxu0
      %v4169 = vadd.f32 %v4080, %v4168
      %4170 = vmatmul.bf16.gmra.mxu0 %v2960
      %v4171 = vpop.f32.mrf.mxu0
      %v4172 = vadd.f32 %v4083, %v4171
      %v4173 = vpop.f32.mrf.mxu0
      %v4174 = vadd.f32 %v4085, %v4173
      %4175 = vmatmul.bf16.gmra.mxu0 %v2972
      %v4176 = vpop.f32.mrf.mxu0
      %v4177 = vadd.f32 %v4088, %v4176
      %v4178 = vpop.f32.mrf.mxu0
      %v4179 = vadd.f32 %v4090, %v4178
      %4180 = vmatmul.bf16.gmra.mxu0 %v2984
      %v4181 = vpop.f32.mrf.mxu0
      %v4182 = vadd.f32 %v4093, %v4181
      %v4183 = vpop.f32.mrf.mxu0
      %v4184 = vadd.f32 %v4095, %v4183
      %4185 = vmatmul.bf16.gmra.mxu0 %v2996
      %v4186 = vpop.f32.mrf.mxu0
      %v4187 = vadd.f32 %v4098, %v4186
      %v4188 = vpop.f32.mrf.mxu0
      %v4189 = vadd.f32 %v4100, %v4188
      %4190 = vmatmul.bf16.gmra.mxu0 %v3008
      %v4191 = vpop.f32.mrf.mxu0
      %v4192 = vadd.f32 %v4103, %v4191
      %v4193 = vpop.f32.mrf.mxu0
      %v4194 = vadd.f32 %v4105, %v4193
      %4195 = vmatmul.bf16.gmra.mxu0 %v3020
      %v4196 = vpop.f32.mrf.mxu0
      %v4197 = vadd.f32 %v4108, %v4196
      %v4198 = vpop.f32.mrf.mxu0
      %v4199 = vadd.f32 %v4110, %v4198
      %4200 = vmatmul.bf16.gmra.mxu0 %v3032
      %v4201 = vpop.f32.mrf.mxu0
      %v4202 = vadd.f32 %v4113, %v4201
      %v4203 = vpop.f32.mrf.mxu0
      %v4204 = vadd.f32 %v4115, %v4203
      %4205 = vmatmul.bf16.gmra.mxu0 %v3044
      %v4206 = vpop.f32.mrf.mxu0
      %v4207 = vadd.f32 %v4118, %v4206
      %v4208 = vpop.f32.mrf.mxu0
      %v4209 = vadd.f32 %v4120, %v4208
      %4210 = vmatmul.bf16.gmra.mxu0 %v3056
      %v4211 = vpop.f32.mrf.mxu0
      %v4212 = vadd.f32 %v4123, %v4211
      %v4213 = vpop.f32.mrf.mxu0
      %v4214 = vadd.f32 %v4125, %v4213
      %4215 = vmatmul.bf16.gmra.mxu0 %v3068
      %v4216 = vpop.f32.mrf.mxu0
      %v4217 = vadd.f32 %v4128, %v4216
      %v4218 = vpop.f32.mrf.mxu0
      %v4219 = vadd.f32 %v4130, %v4218
      %4220 = vmatmul.bf16.gmra.mxu0 %v3080
      %v4221 = vpop.f32.mrf.mxu0
      %v4222 = vadd.f32 %v4133, %v4221
      %v4223 = vpop.f32.mrf.mxu0
      %v4224 = vadd.f32 %v4135, %v4223
      %4225 = vmatmul.bf16.gmra.mxu0 %v3092
      %v4226 = vpop.f32.mrf.mxu0
      %v4227 = vadd.f32 %v4138, %v4226
      %v4228 = vpop.f32.mrf.mxu0
      %v4229 = vadd.f32 %v4140, %v4228
      %4230 = vmatmul.bf16.gmra.mxu0 %v3104
      %v4231 = vpop.f32.mrf.mxu0
      %v4232 = vadd.f32 %v4143, %v4231
      %v4233 = vpop.f32.mrf.mxu0
      %v4234 = vadd.f32 %v4145, %v4233
      %4235 = vmatmul.bf16.gmra.mxu0 %v3116
      %v4236 = vpop.f32.mrf.mxu0
      %v4237 = vadd.f32 %v4148, %v4236
      %v4238 = vpop.f32.mrf.mxu0
      %v4239 = vadd.f32 %v4150, %v4238
      %4240 = vmatmul.bf16.gmra.mxu0 %v3128
      %v4241 = vpop.f32.mrf.mxu0
      %v4242 = vadd.f32 %v4153, %v4241
      %v4243 = vpop.f32.mrf.mxu0
      %v4244 = vadd.f32 %v4155, %v4243
      %4245 = vdwg.mxu0
      %4246 = vmatpush.bf16.msra.mxu0 %v3947
      %4247 = vmatpush.bf16.msra.mxu0 %v3946
      %4248 = vmatpush.bf16.msra.mxu0 %v3945
      %4249 = vmatpush.bf16.msra.mxu0 %v3944
      %4250 = vmatpush.bf16.msra.mxu0 %v3943
      %4251 = vmatpush.bf16.msra.mxu0 %v3942
      %4252 = vmatpush.bf16.msra.mxu0 %v3941
      %4253 = vmatpush.bf16.msra.mxu0 %v3940
      %4254 = vmatmul.bf16.gmra.mxu0 %v3179
      %v4255 = vpop.f32.mrf.mxu0
      %v4256 = vadd.f32 %v4167, %v4255
      %v4257 = vpop.f32.mrf.mxu0
      %v4258 = vadd.f32 %v4169, %v4257
      %4259 = vmatmul.bf16.gmra.mxu0 %v3182
      %v4260 = vpop.f32.mrf.mxu0
      %v4261 = vadd.f32 %v4172, %v4260
      %v4262 = vpop.f32.mrf.mxu0
      %v4263 = vadd.f32 %v4174, %v4262
      %4264 = vmatmul.bf16.gmra.mxu0 %v3185
      %v4265 = vpop.f32.mrf.mxu0
      %v4266 = vadd.f32 %v4177, %v4265
      %v4267 = vpop.f32.mrf.mxu0
      %v4268 = vadd.f32 %v4179, %v4267
      %4269 = vmatmul.bf16.gmra.mxu0 %v3188
      %v4270 = vpop.f32.mrf.mxu0
      %v4271 = vadd.f32 %v4182, %v4270
      %v4272 = vpop.f32.mrf.mxu0
      %v4273 = vadd.f32 %v4184, %v4272
      %4274 = vmatmul.bf16.gmra.mxu0 %v3191
      %v4275 = vpop.f32.mrf.mxu0
      %v4276 = vadd.f32 %v4187, %v4275
      %v4277 = vpop.f32.mrf.mxu0
      %v4278 = vadd.f32 %v4189, %v4277
      %4279 = vmatmul.bf16.gmra.mxu0 %v3194
      %v4280 = vpop.f32.mrf.mxu0
      %v4281 = vadd.f32 %v4192, %v4280
      %v4282 = vpop.f32.mrf.mxu0
      %v4283 = vadd.f32 %v4194, %v4282
      %4284 = vmatmul.bf16.gmra.mxu0 %v3197
      %v4285 = vpop.f32.mrf.mxu0
      %v4286 = vadd.f32 %v4197, %v4285
      %v4287 = vpop.f32.mrf.mxu0
      %v4288 = vadd.f32 %v4199, %v4287
      %4289 = vmatmul.bf16.gmra.mxu0 %v3200
      %v4290 = vpop.f32.mrf.mxu0
      %v4291 = vadd.f32 %v4202, %v4290
      %v4292 = vpop.f32.mrf.mxu0
      %v4293 = vadd.f32 %v4204, %v4292
      %4294 = vmatmul.bf16.gmra.mxu0 %v3203
      %v4295 = vpop.f32.mrf.mxu0
      %v4296 = vadd.f32 %v4207, %v4295
      %v4297 = vpop.f32.mrf.mxu0
      %v4298 = vadd.f32 %v4209, %v4297
      %4299 = vmatmul.bf16.gmra.mxu0 %v3206
      %v4300 = vpop.f32.mrf.mxu0
      %v4301 = vadd.f32 %v4212, %v4300
      %v4302 = vpop.f32.mrf.mxu0
      %v4303 = vadd.f32 %v4214, %v4302
      %4304 = vmatmul.bf16.gmra.mxu0 %v3209
      %v4305 = vpop.f32.mrf.mxu0
      %v4306 = vadd.f32 %v4217, %v4305
      %v4307 = vpop.f32.mrf.mxu0
      %v4308 = vadd.f32 %v4219, %v4307
      %4309 = vmatmul.bf16.gmra.mxu0 %v3212
      %v4310 = vpop.f32.mrf.mxu0
      %v4311 = vadd.f32 %v4222, %v4310
      %v4312 = vpop.f32.mrf.mxu0
      %v4313 = vadd.f32 %v4224, %v4312
      %4314 = vmatmul.bf16.gmra.mxu0 %v3215
      %v4315 = vpop.f32.mrf.mxu0
      %v4316 = vadd.f32 %v4227, %v4315
      %v4317 = vpop.f32.mrf.mxu0
      %v4318 = vadd.f32 %v4229, %v4317
      %4319 = vmatmul.bf16.gmra.mxu0 %v3218
      %v4320 = vpop.f32.mrf.mxu0
      %v4321 = vadd.f32 %v4232, %v4320
      %v4322 = vpop.f32.mrf.mxu0
      %v4323 = vadd.f32 %v4234, %v4322
      %4324 = vmatmul.bf16.gmra.mxu0 %v3221
      %v4325 = vpop.f32.mrf.mxu0
      %v4326 = vadd.f32 %v4237, %v4325
      %v4327 = vpop.f32.mrf.mxu0
      %v4328 = vadd.f32 %v4239, %v4327
      %4329 = vmatmul.bf16.gmra.mxu0 %v3224
      %v4330 = vpop.f32.mrf.mxu0
      %v4331 = vadd.f32 %v4242, %v4330
      %v4332 = vpop.f32.mrf.mxu0
      %v4333 = vadd.f32 %v4244, %v4332
      %4334 = vdwg.mxu0
      %4335 = vmatpush.bf16.msra.mxu0 %v3955
      %4336 = vmatpush.bf16.msra.mxu0 %v3954
      %4337 = vmatpush.bf16.msra.mxu0 %v3953
      %4338 = vmatpush.bf16.msra.mxu0 %v3952
      %4339 = vmatpush.bf16.msra.mxu0 %v3951
      %4340 = vmatpush.bf16.msra.mxu0 %v3950
      %4341 = vmatpush.bf16.msra.mxu0 %v3949
      %4342 = vmatpush.bf16.msra.mxu0 %v3948
      %4343 = vmatmul.bf16.gmra.mxu0 %v2902
      %v4344 = vpop.f32.mrf.mxu0
      %v4345 = vadd.f32 %v4256, %v4344
      %v4346 = vpop.f32.mrf.mxu0
      %v4347 = vadd.f32 %v4258, %v4346
      %4348 = vmatmul.bf16.gmra.mxu0 %v2903
      %v4349 = vpop.f32.mrf.mxu0
      %v4350 = vadd.f32 %v4261, %v4349
      %v4351 = vpop.f32.mrf.mxu0
      %v4352 = vadd.f32 %v4263, %v4351
      %4353 = vmatmul.bf16.gmra.mxu0 %v2904
      %v4354 = vpop.f32.mrf.mxu0
      %v4355 = vadd.f32 %v4266, %v4354
      %v4356 = vpop.f32.mrf.mxu0
      %v4357 = vadd.f32 %v4268, %v4356
      %4358 = vmatmul.bf16.gmra.mxu0 %v2905
      %v4359 = vpop.f32.mrf.mxu0
      %v4360 = vadd.f32 %v4271, %v4359
      %v4361 = vpop.f32.mrf.mxu0
      %v4362 = vadd.f32 %v4273, %v4361
      %4363 = vmatmul.bf16.gmra.mxu0 %v2906
      %v4364 = vpop.f32.mrf.mxu0
      %v4365 = vadd.f32 %v4276, %v4364
      %v4366 = vpop.f32.mrf.mxu0
      %v4367 = vadd.f32 %v4278, %v4366
      %4368 = vmatmul.bf16.gmra.mxu0 %v2907
      %v4369 = vpop.f32.mrf.mxu0
      %v4370 = vadd.f32 %v4281, %v4369
      %v4371 = vpop.f32.mrf.mxu0
      %v4372 = vadd.f32 %v4283, %v4371
      %4373 = vmatmul.bf16.gmra.mxu0 %v2908
      %v4374 = vpop.f32.mrf.mxu0
      %v4375 = vadd.f32 %v4286, %v4374
      %v4376 = vpop.f32.mrf.mxu0
      %v4377 = vadd.f32 %v4288, %v4376
      %4378 = vmatmul.bf16.gmra.mxu0 %v2909
      %v4379 = vpop.f32.mrf.mxu0
      %v4380 = vadd.f32 %v4291, %v4379
      %v4381 = vpop.f32.mrf.mxu0
      %v4382 = vadd.f32 %v4293, %v4381
      %4383 = vmatmul.bf16.gmra.mxu0 %v2910
      %v4384 = vpop.f32.mrf.mxu0
      %v4385 = vadd.f32 %v4296, %v4384
      %v4386 = vpop.f32.mrf.mxu0
      %v4387 = vadd.f32 %v4298, %v4386
      %4388 = vmatmul.bf16.gmra.mxu0 %v2911
      %v4389 = vpop.f32.mrf.mxu0
      %v4390 = vadd.f32 %v4301, %v4389
      %v4391 = vpop.f32.mrf.mxu0
      %v4392 = vadd.f32 %v4303, %v4391
      %4393 = vmatmul.bf16.gmra.mxu0 %v2912
      %v4394 = vpop.f32.mrf.mxu0
      %v4395 = vadd.f32 %v4306, %v4394
      %v4396 = vpop.f32.mrf.mxu0
      %v4397 = vadd.f32 %v4308, %v4396
      %4398 = vmatmul.bf16.gmra.mxu0 %v2913
      %v4399 = vpop.f32.mrf.mxu0
      %v4400 = vadd.f32 %v4311, %v4399
      %v4401 = vpop.f32.mrf.mxu0
      %v4402 = vadd.f32 %v4313, %v4401
      %4403 = vmatmul.bf16.gmra.mxu0 %v2914
      %v4404 = vpop.f32.mrf.mxu0
      %v4405 = vadd.f32 %v4316, %v4404
      %v4406 = vpop.f32.mrf.mxu0
      %v4407 = vadd.f32 %v4318, %v4406
      %4408 = vmatmul.bf16.gmra.mxu0 %v2915
      %v4409 = vpop.f32.mrf.mxu0
      %v4410 = vadd.f32 %v4321, %v4409
      %v4411 = vpop.f32.mrf.mxu0
      %v4412 = vadd.f32 %v4323, %v4411
      %4413 = vmatmul.bf16.gmra.mxu0 %v2916
      %v4414 = vpop.f32.mrf.mxu0
      %v4415 = vadd.f32 %v4326, %v4414
      %v4416 = vpop.f32.mrf.mxu0
      %v4417 = vadd.f32 %v4328, %v4416
      %4418 = vmatmul.bf16.gmra.mxu0 %v2917
      %v4419 = vpop.f32.mrf.mxu0
      %v4420 = vadd.f32 %v4331, %v4419
      %v4421 = vpop.f32.mrf.mxu0
      %v4422 = vadd.f32 %v4333, %v4421
      %4423 = vdwg.mxu0
      %4424 = vmatpush.bf16.msra.mxu0 %v3963
      %4425 = vmatpush.bf16.msra.mxu0 %v3962
      %4426 = vmatpush.bf16.msra.mxu0 %v3961
      %4427 = vmatpush.bf16.msra.mxu0 %v3960
      %4428 = vmatpush.bf16.msra.mxu0 %v3959
      %4429 = vmatpush.bf16.msra.mxu0 %v3958
      %4430 = vmatpush.bf16.msra.mxu0 %v3957
      %4431 = vmatpush.bf16.msra.mxu0 %v3956
      %4432 = vmatmul.bf16.gmra.mxu0 %v2960
      %v4433 = vpop.f32.mrf.mxu0
      %v4434 = vadd.f32 %v4345, %v4433
      %v4435 = vpop.f32.mrf.mxu0
      %v4436 = vadd.f32 %v4347, %v4435
      %4437 = vmatmul.bf16.gmra.mxu0 %v2972
      %v4438 = vpop.f32.mrf.mxu0
      %v4439 = vadd.f32 %v4350, %v4438
      %v4440 = vpop.f32.mrf.mxu0
      %v4441 = vadd.f32 %v4352, %v4440
      %4442 = vmatmul.bf16.gmra.mxu0 %v2984
      %v4443 = vpop.f32.mrf.mxu0
      %v4444 = vadd.f32 %v4355, %v4443
      %v4445 = vpop.f32.mrf.mxu0
      %v4446 = vadd.f32 %v4357, %v4445
      %4447 = vmatmul.bf16.gmra.mxu0 %v2996
      %v4448 = vpop.f32.mrf.mxu0
      %v4449 = vadd.f32 %v4360, %v4448
      %v4450 = vpop.f32.mrf.mxu0
      %v4451 = vadd.f32 %v4362, %v4450
      %4452 = vmatmul.bf16.gmra.mxu0 %v3008
      %v4453 = vpop.f32.mrf.mxu0
      %v4454 = vadd.f32 %v4365, %v4453
      %v4455 = vpop.f32.mrf.mxu0
      %v4456 = vadd.f32 %v4367, %v4455
      %4457 = vmatmul.bf16.gmra.mxu0 %v3020
      %v4458 = vpop.f32.mrf.mxu0
      %v4459 = vadd.f32 %v4370, %v4458
      %v4460 = vpop.f32.mrf.mxu0
      %v4461 = vadd.f32 %v4372, %v4460
      %4462 = vmatmul.bf16.gmra.mxu0 %v3032
      %v4463 = vpop.f32.mrf.mxu0
      %v4464 = vadd.f32 %v4375, %v4463
      %v4465 = vpop.f32.mrf.mxu0
      %v4466 = vadd.f32 %v4377, %v4465
      %4467 = vmatmul.bf16.gmra.mxu0 %v3044
      %v4468 = vpop.f32.mrf.mxu0
      %v4469 = vadd.f32 %v4380, %v4468
      %v4470 = vpop.f32.mrf.mxu0
      %v4471 = vadd.f32 %v4382, %v4470
      %4472 = vmatmul.bf16.gmra.mxu0 %v3056
      %v4473 = vpop.f32.mrf.mxu0
      %v4474 = vadd.f32 %v4385, %v4473
      %v4475 = vpop.f32.mrf.mxu0
      %v4476 = vadd.f32 %v4387, %v4475
      %4477 = vmatmul.bf16.gmra.mxu0 %v3068
      %v4478 = vpop.f32.mrf.mxu0
      %v4479 = vadd.f32 %v4390, %v4478
      %v4480 = vpop.f32.mrf.mxu0
      %v4481 = vadd.f32 %v4392, %v4480
      %4482 = vmatmul.bf16.gmra.mxu0 %v3080
      %v4483 = vpop.f32.mrf.mxu0
      %v4484 = vadd.f32 %v4395, %v4483
      %v4485 = vpop.f32.mrf.mxu0
      %v4486 = vadd.f32 %v4397, %v4485
      %4487 = vmatmul.bf16.gmra.mxu0 %v3092
      %v4488 = vpop.f32.mrf.mxu0
      %v4489 = vadd.f32 %v4400, %v4488
      %v4490 = vpop.f32.mrf.mxu0
      %v4491 = vadd.f32 %v4402, %v4490
      %4492 = vmatmul.bf16.gmra.mxu0 %v3104
      %v4493 = vpop.f32.mrf.mxu0
      %v4494 = vadd.f32 %v4405, %v4493
      %v4495 = vpop.f32.mrf.mxu0
      %v4496 = vadd.f32 %v4407, %v4495
      %4497 = vmatmul.bf16.gmra.mxu0 %v3116
      %v4498 = vpop.f32.mrf.mxu0
      %v4499 = vadd.f32 %v4410, %v4498
      %v4500 = vpop.f32.mrf.mxu0
      %v4501 = vadd.f32 %v4412, %v4500
      %4502 = vmatmul.bf16.gmra.mxu0 %v3128
      %v4503 = vpop.f32.mrf.mxu0
      %v4504 = vadd.f32 %v4415, %v4503
      %v4505 = vpop.f32.mrf.mxu0
      %v4506 = vadd.f32 %v4417, %v4505
      %4507 = vmatmul.bf16.gmra.mxu0 %v3252
      %v4508 = vpop.f32.mrf.mxu0
      %v4509 = vadd.f32 %v4420, %v4508
      %v4510 = vpop.f32.mrf.mxu0
      %v4511 = vadd.f32 %v4422, %v4510
      %4512 = vdwg.mxu0
      %4513 = vmatpush.bf16.msra.mxu0 %v3971
      %4514 = vmatpush.bf16.msra.mxu0 %v3970
      %4515 = vmatpush.bf16.msra.mxu0 %v3969
      %4516 = vmatpush.bf16.msra.mxu0 %v3968
      %4517 = vmatpush.bf16.msra.mxu0 %v3967
      %4518 = vmatpush.bf16.msra.mxu0 %v3966
      %4519 = vmatpush.bf16.msra.mxu0 %v3965
      %4520 = vmatpush.bf16.msra.mxu0 %v3964
      %4521 = vmatmul.bf16.gmra.mxu0 %v3182
      %v4522 = vpop.f32.mrf.mxu0
      %v4523 = vadd.f32 %v4434, %v4522
      %v4524 = vpop.f32.mrf.mxu0
      %v4525 = vadd.f32 %v4436, %v4524
      %4526 = vmatmul.bf16.gmra.mxu0 %v3185
      %v4527 = vpop.f32.mrf.mxu0
      %v4528 = vadd.f32 %v4439, %v4527
      %v4529 = vpop.f32.mrf.mxu0
      %v4530 = vadd.f32 %v4441, %v4529
      %4531 = vmatmul.bf16.gmra.mxu0 %v3188
      %v4532 = vpop.f32.mrf.mxu0
      %v4533 = vadd.f32 %v4444, %v4532
      %v4534 = vpop.f32.mrf.mxu0
      %v4535 = vadd.f32 %v4446, %v4534
      %4536 = vmatmul.bf16.gmra.mxu0 %v3191
      %v4537 = vpop.f32.mrf.mxu0
      %v4538 = vadd.f32 %v4449, %v4537
      %v4539 = vpop.f32.mrf.mxu0
      %v4540 = vadd.f32 %v4451, %v4539
      %4541 = vmatmul.bf16.gmra.mxu0 %v3194
      %v4542 = vpop.f32.mrf.mxu0
      %v4543 = vadd.f32 %v4454, %v4542
      %v4544 = vpop.f32.mrf.mxu0
      %v4545 = vadd.f32 %v4456, %v4544
      %4546 = vmatmul.bf16.gmra.mxu0 %v3197
      %v4547 = vpop.f32.mrf.mxu0
      %v4548 = vadd.f32 %v4459, %v4547
      %v4549 = vpop.f32.mrf.mxu0
      %v4550 = vadd.f32 %v4461, %v4549
      %4551 = vmatmul.bf16.gmra.mxu0 %v3200
      %v4552 = vpop.f32.mrf.mxu0
      %v4553 = vadd.f32 %v4464, %v4552
      %v4554 = vpop.f32.mrf.mxu0
      %v4555 = vadd.f32 %v4466, %v4554
      %4556 = vmatmul.bf16.gmra.mxu0 %v3203
      %v4557 = vpop.f32.mrf.mxu0
      %v4558 = vadd.f32 %v4469, %v4557
      %v4559 = vpop.f32.mrf.mxu0
      %v4560 = vadd.f32 %v4471, %v4559
      %4561 = vmatmul.bf16.gmra.mxu0 %v3206
      %v4562 = vpop.f32.mrf.mxu0
      %v4563 = vadd.f32 %v4474, %v4562
      %v4564 = vpop.f32.mrf.mxu0
      %v4565 = vadd.f32 %v4476, %v4564
      %4566 = vmatmul.bf16.gmra.mxu0 %v3209
      %v4567 = vpop.f32.mrf.mxu0
      %v4568 = vadd.f32 %v4479, %v4567
      %v4569 = vpop.f32.mrf.mxu0
      %v4570 = vadd.f32 %v4481, %v4569
      %4571 = vmatmul.bf16.gmra.mxu0 %v3212
      %v4572 = vpop.f32.mrf.mxu0
      %v4573 = vadd.f32 %v4484, %v4572
      %v4574 = vpop.f32.mrf.mxu0
      %v4575 = vadd.f32 %v4486, %v4574
      %4576 = vmatmul.bf16.gmra.mxu0 %v3215
      %v4577 = vpop.f32.mrf.mxu0
      %v4578 = vadd.f32 %v4489, %v4577
      %v4579 = vpop.f32.mrf.mxu0
      %v4580 = vadd.f32 %v4491, %v4579
      %4581 = vmatmul.bf16.gmra.mxu0 %v3218
      %v4582 = vpop.f32.mrf.mxu0
      %v4583 = vadd.f32 %v4494, %v4582
      %v4584 = vpop.f32.mrf.mxu0
      %v4585 = vadd.f32 %v4496, %v4584
      %4586 = vmatmul.bf16.gmra.mxu0 %v3221
      %v4587 = vpop.f32.mrf.mxu0
      %v4588 = vadd.f32 %v4499, %v4587
      %v4589 = vpop.f32.mrf.mxu0
      %v4590 = vadd.f32 %v4501, %v4589
      %4591 = vmatmul.bf16.gmra.mxu0 %v3224
      %v4592 = vpop.f32.mrf.mxu0
      %v4593 = vadd.f32 %v4504, %v4592
      %v4594 = vpop.f32.mrf.mxu0
      %v4595 = vadd.f32 %v4506, %v4594
      %4596 = vmatmul.bf16.gmra.mxu0 %v3258
      %v4597 = vpop.f32.mrf.mxu0
      %v4598 = vadd.f32 %v4509, %v4597
      %v4599 = vpop.f32.mrf.mxu0
      %v4600 = vadd.f32 %v4511, %v4599
      %4601 = vdwg.mxu0
      %4602 = vmatpush.bf16.msra.mxu0 %v3979
      %4603 = vmatpush.bf16.msra.mxu0 %v3978
      %4604 = vmatpush.bf16.msra.mxu0 %v3977
      %4605 = vmatpush.bf16.msra.mxu0 %v3976
      %4606 = vmatpush.bf16.msra.mxu0 %v3975
      %4607 = vmatpush.bf16.msra.mxu0 %v3974
      %4608 = vmatpush.bf16.msra.mxu0 %v3973
      %4609 = vmatpush.bf16.msra.mxu0 %v3972
      %4610 = vmatmul.bf16.gmra.mxu0 %v2903
      %v4611 = vpop.f32.mrf.mxu0
      %v4612 = vadd.f32 %v4523, %v4611
      %v4613 = vpop.f32.mrf.mxu0
      %v4614 = vadd.f32 %v4525, %v4613
      %4615 = vmatmul.bf16.gmra.mxu0 %v2904
      %v4616 = vpop.f32.mrf.mxu0
      %v4617 = vadd.f32 %v4528, %v4616
      %v4618 = vpop.f32.mrf.mxu0
      %v4619 = vadd.f32 %v4530, %v4618
      %4620 = vmatmul.bf16.gmra.mxu0 %v2905
      %v4621 = vpop.f32.mrf.mxu0
      %v4622 = vadd.f32 %v4533, %v4621
      %v4623 = vpop.f32.mrf.mxu0
      %v4624 = vadd.f32 %v4535, %v4623
      %4625 = vmatmul.bf16.gmra.mxu0 %v2906
      %v4626 = vpop.f32.mrf.mxu0
      %v4627 = vadd.f32 %v4538, %v4626
      %v4628 = vpop.f32.mrf.mxu0
      %v4629 = vadd.f32 %v4540, %v4628
      %4630 = vmatmul.bf16.gmra.mxu0 %v2907
      %v4631 = vpop.f32.mrf.mxu0
      %v4632 = vadd.f32 %v4543, %v4631
      %v4633 = vpop.f32.mrf.mxu0
      %v4634 = vadd.f32 %v4545, %v4633
      %4635 = vmatmul.bf16.gmra.mxu0 %v2908
      %v4636 = vpop.f32.mrf.mxu0
      %v4637 = vadd.f32 %v4548, %v4636
      %v4638 = vpop.f32.mrf.mxu0
      %v4639 = vadd.f32 %v4550, %v4638
      %4640 = vmatmul.bf16.gmra.mxu0 %v2909
      %v4641 = vpop.f32.mrf.mxu0
      %v4642 = vadd.f32 %v4553, %v4641
      %v4643 = vpop.f32.mrf.mxu0
      %v4644 = vadd.f32 %v4555, %v4643
      %4645 = vmatmul.bf16.gmra.mxu0 %v2910
      %v4646 = vpop.f32.mrf.mxu0
      %v4647 = vadd.f32 %v4558, %v4646
      %v4648 = vpop.f32.mrf.mxu0
      %v4649 = vadd.f32 %v4560, %v4648
      %4650 = vmatmul.bf16.gmra.mxu0 %v2911
      %v4651 = vpop.f32.mrf.mxu0
      %v4652 = vadd.f32 %v4563, %v4651
      %v4653 = vpop.f32.mrf.mxu0
      %v4654 = vadd.f32 %v4565, %v4653
      %4655 = vmatmul.bf16.gmra.mxu0 %v2912
      %v4656 = vpop.f32.mrf.mxu0
      %v4657 = vadd.f32 %v4568, %v4656
      %v4658 = vpop.f32.mrf.mxu0
      %v4659 = vadd.f32 %v4570, %v4658
      %4660 = vmatmul.bf16.gmra.mxu0 %v2913
      %v4661 = vpop.f32.mrf.mxu0
      %v4662 = vadd.f32 %v4573, %v4661
      %v4663 = vpop.f32.mrf.mxu0
      %v4664 = vadd.f32 %v4575, %v4663
      %4665 = vmatmul.bf16.gmra.mxu0 %v2914
      %v4666 = vpop.f32.mrf.mxu0
      %v4667 = vadd.f32 %v4578, %v4666
      %v4668 = vpop.f32.mrf.mxu0
      %v4669 = vadd.f32 %v4580, %v4668
      %4670 = vmatmul.bf16.gmra.mxu0 %v2915
      %v4671 = vpop.f32.mrf.mxu0
      %v4672 = vadd.f32 %v4583, %v4671
      %v4673 = vpop.f32.mrf.mxu0
      %v4674 = vadd.f32 %v4585, %v4673
      %4675 = vmatmul.bf16.gmra.mxu0 %v2916
      %v4676 = vpop.f32.mrf.mxu0
      %v4677 = vadd.f32 %v4588, %v4676
      %v4678 = vpop.f32.mrf.mxu0
      %v4679 = vadd.f32 %v4590, %v4678
      %4680 = vmatmul.bf16.gmra.mxu0 %v2917
      %v4681 = vpop.f32.mrf.mxu0
      %v4682 = vadd.f32 %v4593, %v4681
      %v4683 = vpop.f32.mrf.mxu0
      %v4684 = vadd.f32 %v4595, %v4683
      %4685 = vmatmul.bf16.gmra.mxu0 %v2918
      %v4686 = vpop.f32.mrf.mxu0
      %v4687 = vadd.f32 %v4598, %v4686
      %v4688 = vpop.f32.mrf.mxu0
      %v4689 = vadd.f32 %v4600, %v4688
      %4690 = vdwg.mxu0
      %4691 = vmatpush.bf16.msra.mxu0 %v3987
      %4692 = vmatpush.bf16.msra.mxu0 %v3986
      %4693 = vmatpush.bf16.msra.mxu0 %v3985
      %4694 = vmatpush.bf16.msra.mxu0 %v3984
      %4695 = vmatpush.bf16.msra.mxu0 %v3983
      %4696 = vmatpush.bf16.msra.mxu0 %v3982
      %4697 = vmatpush.bf16.msra.mxu0 %v3981
      %4698 = vmatpush.bf16.msra.mxu0 %v3980
      %4699 = vmatmul.bf16.gmra.mxu0 %v2972
      %v4700 = vpop.f32.mrf.mxu0
      %v4701 = vadd.f32 %v4612, %v4700
      %v4702 = vpop.f32.mrf.mxu0
      %v4703 = vadd.f32 %v4614, %v4702
      %4704 = vmatmul.bf16.gmra.mxu0 %v2984
      %v4705 = vpop.f32.mrf.mxu0
      %v4706 = vadd.f32 %v4617, %v4705
      %v4707 = vpop.f32.mrf.mxu0
      %v4708 = vadd.f32 %v4619, %v4707
      %4709 = vmatmul.bf16.gmra.mxu0 %v2996
      %v4710 = vpop.f32.mrf.mxu0
      %v4711 = vadd.f32 %v4622, %v4710
      %v4712 = vpop.f32.mrf.mxu0
      %v4713 = vadd.f32 %v4624, %v4712
      %4714 = vmatmul.bf16.gmra.mxu0 %v3008
      %v4715 = vpop.f32.mrf.mxu0
      %v4716 = vadd.f32 %v4627, %v4715
      %v4717 = vpop.f32.mrf.mxu0
      %v4718 = vadd.f32 %v4629, %v4717
      %4719 = vmatmul.bf16.gmra.mxu0 %v3020
      %v4720 = vpop.f32.mrf.mxu0
      %v4721 = vadd.f32 %v4632, %v4720
      %v4722 = vpop.f32.mrf.mxu0
      %v4723 = vadd.f32 %v4634, %v4722
      %4724 = vmatmul.bf16.gmra.mxu0 %v3032
      %v4725 = vpop.f32.mrf.mxu0
      %v4726 = vadd.f32 %v4637, %v4725
      %v4727 = vpop.f32.mrf.mxu0
      %v4728 = vadd.f32 %v4639, %v4727
      %4729 = vmatmul.bf16.gmra.mxu0 %v3044
      %v4730 = vpop.f32.mrf.mxu0
      %v4731 = vadd.f32 %v4642, %v4730
      %v4732 = vpop.f32.mrf.mxu0
      %v4733 = vadd.f32 %v4644, %v4732
      %4734 = vmatmul.bf16.gmra.mxu0 %v3056
      %v4735 = vpop.f32.mrf.mxu0
      %v4736 = vadd.f32 %v4647, %v4735
      %v4737 = vpop.f32.mrf.mxu0
      %v4738 = vadd.f32 %v4649, %v4737
      %4739 = vmatmul.bf16.gmra.mxu0 %v3068
      %v4740 = vpop.f32.mrf.mxu0
      %v4741 = vadd.f32 %v4652, %v4740
      %v4742 = vpop.f32.mrf.mxu0
      %v4743 = vadd.f32 %v4654, %v4742
      %4744 = vmatmul.bf16.gmra.mxu0 %v3080
      %v4745 = vpop.f32.mrf.mxu0
      %v4746 = vadd.f32 %v4657, %v4745
      %v4747 = vpop.f32.mrf.mxu0
      %v4748 = vadd.f32 %v4659, %v4747
      %4749 = vmatmul.bf16.gmra.mxu0 %v3092
      %v4750 = vpop.f32.mrf.mxu0
      %v4751 = vadd.f32 %v4662, %v4750
      %v4752 = vpop.f32.mrf.mxu0
      %v4753 = vadd.f32 %v4664, %v4752
      %4754 = vmatmul.bf16.gmra.mxu0 %v3104
      %v4755 = vpop.f32.mrf.mxu0
      %v4756 = vadd.f32 %v4667, %v4755
      %v4757 = vpop.f32.mrf.mxu0
      %v4758 = vadd.f32 %v4669, %v4757
      %4759 = vmatmul.bf16.gmra.mxu0 %v3116
      %v4760 = vpop.f32.mrf.mxu0
      %v4761 = vadd.f32 %v4672, %v4760
      %v4762 = vpop.f32.mrf.mxu0
      %v4763 = vadd.f32 %v4674, %v4762
      %4764 = vmatmul.bf16.gmra.mxu0 %v3128
      %v4765 = vpop.f32.mrf.mxu0
      %v4766 = vadd.f32 %v4677, %v4765
      %v4767 = vpop.f32.mrf.mxu0
      %v4768 = vadd.f32 %v4679, %v4767
      %4769 = vmatmul.bf16.gmra.mxu0 %v3252
      %v4770 = vpop.f32.mrf.mxu0
      %v4771 = vadd.f32 %v4682, %v4770
      %v4772 = vpop.f32.mrf.mxu0
      %v4773 = vadd.f32 %v4684, %v4772
      %4774 = vmatmul.bf16.gmra.mxu0 %v3271
      %v4775 = vpop.f32.mrf.mxu0
      %v4776 = vadd.f32 %v4687, %v4775
      %v4777 = vpop.f32.mrf.mxu0
      %v4778 = vadd.f32 %v4689, %v4777
      %4779 = vdwg.mxu0
      %4780 = vmatpush.bf16.msra.mxu0 %v3995
      %4781 = vmatpush.bf16.msra.mxu0 %v3994
      %4782 = vmatpush.bf16.msra.mxu0 %v3993
      %4783 = vmatpush.bf16.msra.mxu0 %v3992
      %4784 = vmatpush.bf16.msra.mxu0 %v3991
      %4785 = vmatpush.bf16.msra.mxu0 %v3990
      %4786 = vmatpush.bf16.msra.mxu0 %v3989
      %4787 = vmatpush.bf16.msra.mxu0 %v3988
      %4788 = vmatmul.bf16.gmra.mxu0 %v3185
      %v4789 = vpop.f32.mrf.mxu0
      %v4790 = vadd.f32 %v4701, %v4789
      %v4791 = vpop.f32.mrf.mxu0
      %v4792 = vadd.f32 %v4703, %v4791
      %4793 = vmatmul.bf16.gmra.mxu0 %v3188
      %v4794 = vpop.f32.mrf.mxu0
      %v4795 = vadd.f32 %v4706, %v4794
      %v4796 = vpop.f32.mrf.mxu0
      %v4797 = vadd.f32 %v4708, %v4796
      %4798 = vmatmul.bf16.gmra.mxu0 %v3191
      %v4799 = vpop.f32.mrf.mxu0
      %v4800 = vadd.f32 %v4711, %v4799
      %v4801 = vpop.f32.mrf.mxu0
      %v4802 = vadd.f32 %v4713, %v4801
      %4803 = vmatmul.bf16.gmra.mxu0 %v3194
      %v4804 = vpop.f32.mrf.mxu0
      %v4805 = vadd.f32 %v4716, %v4804
      %v4806 = vpop.f32.mrf.mxu0
      %v4807 = vadd.f32 %v4718, %v4806
      %4808 = vmatmul.bf16.gmra.mxu0 %v3197
      %v4809 = vpop.f32.mrf.mxu0
      %v4810 = vadd.f32 %v4721, %v4809
      %v4811 = vpop.f32.mrf.mxu0
      %v4812 = vadd.f32 %v4723, %v4811
      %4813 = vmatmul.bf16.gmra.mxu0 %v3200
      %v4814 = vpop.f32.mrf.mxu0
      %v4815 = vadd.f32 %v4726, %v4814
      %v4816 = vpop.f32.mrf.mxu0
      %v4817 = vadd.f32 %v4728, %v4816
      %4818 = vmatmul.bf16.gmra.mxu0 %v3203
      %v4819 = vpop.f32.mrf.mxu0
      %v4820 = vadd.f32 %v4731, %v4819
      %v4821 = vpop.f32.mrf.mxu0
      %v4822 = vadd.f32 %v4733, %v4821
      %4823 = vmatmul.bf16.gmra.mxu0 %v3206
      %v4824 = vpop.f32.mrf.mxu0
      %v4825 = vadd.f32 %v4736, %v4824
      %v4826 = vpop.f32.mrf.mxu0
      %v4827 = vadd.f32 %v4738, %v4826
      %4828 = vmatmul.bf16.gmra.mxu0 %v3209
      %v4829 = vpop.f32.mrf.mxu0
      %v4830 = vadd.f32 %v4741, %v4829
      %v4831 = vpop.f32.mrf.mxu0
      %v4832 = vadd.f32 %v4743, %v4831
      %4833 = vmatmul.bf16.gmra.mxu0 %v3212
      %v4834 = vpop.f32.mrf.mxu0
      %v4835 = vadd.f32 %v4746, %v4834
      %v4836 = vpop.f32.mrf.mxu0
      %v4837 = vadd.f32 %v4748, %v4836
      %4838 = vmatmul.bf16.gmra.mxu0 %v3215
      %v4839 = vpop.f32.mrf.mxu0
      %v4840 = vadd.f32 %v4751, %v4839
      %v4841 = vpop.f32.mrf.mxu0
      %v4842 = vadd.f32 %v4753, %v4841
      %4843 = vmatmul.bf16.gmra.mxu0 %v3218
      %v4844 = vpop.f32.mrf.mxu0
      %v4845 = vadd.f32 %v4756, %v4844
      %v4846 = vpop.f32.mrf.mxu0
      %v4847 = vadd.f32 %v4758, %v4846
      %4848 = vmatmul.bf16.gmra.mxu0 %v3221
      %v4849 = vpop.f32.mrf.mxu0
      %v4850 = vadd.f32 %v4761, %v4849
      %v4851 = vpop.f32.mrf.mxu0
      %v4852 = vadd.f32 %v4763, %v4851
      %4853 = vmatmul.bf16.gmra.mxu0 %v3224
      %v4854 = vpop.f32.mrf.mxu0
      %v4855 = vadd.f32 %v4766, %v4854
      %v4856 = vpop.f32.mrf.mxu0
      %v4857 = vadd.f32 %v4768, %v4856
      %4858 = vmatmul.bf16.gmra.mxu0 %v3258
      %v4859 = vpop.f32.mrf.mxu0
      %v4860 = vadd.f32 %v4771, %v4859
      %v4861 = vpop.f32.mrf.mxu0
      %v4862 = vadd.f32 %v4773, %v4861
      %4863 = vmatmul.bf16.gmra.mxu0 %v3277
      %v4864 = vpop.f32.mrf.mxu0
      %v4865 = vadd.f32 %v4776, %v4864
      %v4866 = vpop.f32.mrf.mxu0
      %v4867 = vadd.f32 %v4778, %v4866
      %4868 = vdwg.mxu0
      %v4869 = vadd.f32 %v4790, %v3522
      %v4870 = vadd.f32 %v4792, %v3524
      %v4871 = vadd.f32 %v4795, %v3527
      %v4872 = vadd.f32 %v4797, %v3529
      %v4873 = vadd.f32 %v4800, %v3532
      %v4874 = vadd.f32 %v4802, %v3534
      %v4875 = vadd.f32 %v4805, %v3537
      %v4876 = vadd.f32 %v4807, %v3539
      %v4877 = vadd.f32 %v4810, %v3542
      %v4878 = vadd.f32 %v4812, %v3544
      %v4879 = vadd.f32 %v4815, %v3547
      %v4880 = vadd.f32 %v4817, %v3549
      %v4881 = vadd.f32 %v4820, %v3552
      %v4882 = vadd.f32 %v4822, %v3554
      %v4883 = vadd.f32 %v4825, %v3557
      %v4884 = vadd.f32 %v4827, %v3559
      %v4885 = vadd.f32 %v4830, %v3562
      %v4886 = vadd.f32 %v4832, %v3564
      %v4887 = vadd.f32 %v4835, %v3567
      %v4888 = vadd.f32 %v4837, %v3569
      %v4889 = vadd.f32 %v4840, %v3572
      %v4890 = vadd.f32 %v4842, %v3574
      %v4891 = vadd.f32 %v4845, %v3577
      %v4892 = vadd.f32 %v4847, %v3579
      %v4893 = vadd.f32 %v4850, %v3582
      %v4894 = vadd.f32 %v4852, %v3584
      %v4895 = vadd.f32 %v4855, %v3587
      %v4896 = vadd.f32 %v4857, %v3589
      %v4897 = vadd.f32 %v4860, %v3592
      %v4898 = vadd.f32 %v4862, %v3594
      %v4899 = vadd.f32 %v4865, %v3597
      %v4900 = vadd.f32 %v4867, %v3599
      %v4901 = vmax.f32 %v4869, 0.0
      %v4902 = vmax.f32 %v4870, 0.0
      %v4903 = vmax.f32 %v4871, 0.0
      %v4904 = vmax.f32 %v4872, 0.0
      %v4905 = vmax.f32 %v4873, 0.0
      %v4906 = vmax.f32 %v4874, 0.0
      %v4907 = vmax.f32 %v4875, 0.0
      %v4908 = vmax.f32 %v4876, 0.0
      %v4909 = vmax.f32 %v4877, 0.0
      %v4910 = vmax.f32 %v4878, 0.0
      %v4911 = vmax.f32 %v4879, 0.0
      %v4912 = vmax.f32 %v4880, 0.0
      %v4913 = vmax.f32 %v4881, 0.0
      %v4914 = vmax.f32 %v4882, 0.0
      %v4915 = vmax.f32 %v4883, 0.0
      %v4916 = vmax.f32 %v4884, 0.0
      %v4917 = vmax.f32 %v4885, 0.0
      %v4918 = vmax.f32 %v4886, 0.0
      %v4919 = vmax.f32 %v4887, 0.0
      %v4920 = vmax.f32 %v4888, 0.0
      %v4921 = vmax.f32 %v4889, 0.0
      %v4922 = vmax.f32 %v4890, 0.0
      %v4923 = vmax.f32 %v4891, 0.0
      %v4924 = vmax.f32 %v4892, 0.0
      %v4925 = vmax.f32 %v4893, 0.0
      %v4926 = vmax.f32 %v4894, 0.0
      %v4927 = vmax.f32 %v4895, 0.0
      %v4928 = vmax.f32 %v4896, 0.0
      %v4929 = vmax.f32 %v4897, 0.0
      %v4930 = vmax.f32 %v4898, 0.0
      %v4931 = vmax.f32 %v4899, 0.0
      %v4932 = vmax.f32 %v4900, 0.0
      %4933 = vst [vmem:[%s372] sm:$0xff] %v4901
      %4934 = vst [vmem:[%s372 + $0x8] sm:$0xff] %v4902
      %4935 = vst [vmem:[%s372 + $0x10] sm:$0xff] %v4903
      %4936 = vst [vmem:[%s372 + $0x18] sm:$0xff] %v4904
      %4937 = vst [vmem:[%s372 + $0x20] sm:$0xff] %v4905
      %4938 = vst [vmem:[%s372 + $0x28] sm:$0xff] %v4906
      %4939 = vst [vmem:[%s372 + $0x30] sm:$0xff] %v4907
      %4940 = vst [vmem:[%s372 + $0x38] sm:$0xff] %v4908
      %4941 = vst [vmem:[%s372 + $0x40] sm:$0xff] %v4909
      %4942 = vst [vmem:[%s372 + $0x48] sm:$0xff] %v4910
      %4943 = vst [vmem:[%s372 + $0x50] sm:$0xff] %v4911
      %4944 = vst [vmem:[%s372 + $0x58] sm:$0xff] %v4912
      %4945 = vst [vmem:[%s372 + $0x60] sm:$0xff] %v4913
      %4946 = vst [vmem:[%s372 + $0x68] sm:$0xff] %v4914
      %4947 = vst [vmem:[%s372 + $0x70] sm:$0xff] %v4915
      %4948 = vst [vmem:[%s372 + $0x78] sm:$0xff] %v4916
      %4949 = vst [vmem:[%s372 + $0x80] sm:$0xff] %v4917
      %4950 = vst [vmem:[%s372 + $0x88] sm:$0xff] %v4918
      %4951 = vst [vmem:[%s372 + $0x90] sm:$0xff] %v4919
      %4952 = vst [vmem:[%s372 + $0x98] sm:$0xff] %v4920
      %4953 = vst [vmem:[%s372 + $0xa0] sm:$0xff] %v4921
      %4954 = vst [vmem:[%s372 + $0xa8] sm:$0xff] %v4922
      %4955 = vst [vmem:[%s372 + $0xb0] sm:$0xff] %v4923
      %4956 = vst [vmem:[%s372 + $0xb8] sm:$0xff] %v4924
      %4957 = vst [vmem:[%s372 + $0xc0] sm:$0xff] %v4925
      %4958 = vst [vmem:[%s372 + $0xc8] sm:$0xff] %v4926
      %4959 = vst [vmem:[%s372 + $0xd0] sm:$0xff] %v4927
      %4960 = vst [vmem:[%s372 + $0xd8] sm:$0xff] %v4928
      %4961 = vst [vmem:[%s372 + $0xe0] sm:$0xff] %v4929
      %4962 = vst [vmem:[%s372 + $0xe8] sm:$0xff] %v4930
      %4963 = vst [vmem:[%s372 + $0xf0] sm:$0xff] %v4931
      %4964 = vst [vmem:[%s372 + $0xf8] sm:$0xff] %v4932
      %s4965 = smul.u32 16, %s22
      %p4966 = scmp.lt.s32.totalorder %s21, 1
      %s4967 = scalar_select %p4966, %s21, 1
      %p4968 = scmp.lt.s32.totalorder %s4965, 15
      %s4969 = scalar_select %p4968, %s4965, 15
      %s4970 = smul.addr %s4969, 2
      %s4971 = smul.addr %s4967, 32
      %s4972 = sadd.s32 %s4970, %s4971
      %s4973 = smul.addr %s4972, 8
      %s4974 = scalar_lea.vmem %s6, %s4973
      // Predicated region
      $region45: #{basic_block_forward.1} parent=43 // pred_check
        %p4975 = pneg %p193
      $region46: #{basic_block_forward.1} parent=43 // pred_check_branch
        %4977 = sbr.rel (%p4975) target = $region48
      $region47: #{basic_block_forward.1} parent=43 // pred_region
        %s4978 = smul.u32 16, %s22
      $region48: #{basic_block_forward.1} parent=43 // pred_fallthru
        _
    $region44: #{basic_block_forward.1} parent=5 // pred_fallthru
      _
    %p4979 = scmp.le.s32.totalorder 2, %s12
    // Predicated region
    $region49: #{basic_block_forward.1} parent=5 // pred_check
      %p4980 = pneg %p4979
    $region50: #{basic_block_forward.1} parent=5 // pred_check_branch
      %4982 = sbr.rel (%p4980) target = $region52
    $region51: #{basic_block_forward.1} parent=5 // pred_region
      %s4983 = ssub.s32 %s12, 2
      // Predicated region
      $region53: #{basic_block_forward.1} parent=51 // pred_check
        %p4984 = pneg %p199
      $region54: #{basic_block_forward.1} parent=51 // pred_check_branch
        %4986 = sbr.rel (%p4984) target = $region56
      $region55: #{basic_block_forward.1} parent=51 // pred_region
        %s4987 = smul.u32 16, %s24
        %p4988 = scmp.lt.s32.totalorder %s23, 1
        %s4989 = scalar_select %p4988, %s23, 1
        %p4990 = scmp.lt.s32.totalorder %s4987, 15
        %s4991 = scalar_select %p4990, %s4987, 15
        %s4992 = smul.addr %s4991, 2
        %s4993 = smul.addr %s4989, 32
        %s4994 = sadd.s32 %s4992, %s4993
        %s4995 = smul.addr %s4994, 8
        %s4996 = scalar_lea.vmem %s6, %s4995
      $region56: #{basic_block_forward.1} parent=51 // pred_fallthru
        _
    $region52: #{basic_block_forward.1} parent=5 // pred_fallthru
      _
  $region6: #{basic_block_forward.1} parent=0 // loop_footer
    %s16 = sadd.s32 1, %s12
  $region7: #{basic_block_forward.1} parent=0 // loop_footer_branch
    %11 = sbr.rel target = $region3
  $region8: #{basic_block_forward.1} parent=0 // loop_exit
    _

</llo_original>
